<compile_context>
chip_gen: v7x
topology: tpu7x:2x2x1
jax: 0.10.0
libtpu: 0.0.40
codegen_flags: <defaults>
</compile_context>

<pallas_src>
import functools

import jax
import jax.numpy as jnp
from jax.experimental import pallas as pl
from jax.experimental.pallas import tpu as pltpu


# ----------------------------------------------------------------------------
# In-kernel helpers
# ----------------------------------------------------------------------------
def _layernorm(x, w, b, eps=1e-5):
    """LayerNorm over the last axis in float32 (matches CLIP's LayerNorm)."""
    xf = x.astype(jnp.float32)
    mu = jnp.mean(xf, axis=-1, keepdims=True)
    var = jnp.mean(jnp.square(xf - mu), axis=-1, keepdims=True)
    return (xf - mu) * jax.lax.rsqrt(var + eps) * w.astype(jnp.float32) + b.astype(jnp.float32)


def _physical_vmem_bytes():
    try:
        return int(pltpu.get_tpu_info().vmem_capacity_bytes)
    except Exception:
        return 64 << 20          # conservative (v7x size) if query unavailable


# ----------------------------------------------------------------------------
# Kernel 1: patch embedding (conv with stride == kernel size -> tiled matmul)
# ----------------------------------------------------------------------------
def _patch_embed_kernel(p_ref, w_ref, o_ref):
    o_ref[...] = jnp.dot(
        p_ref[...], w_ref[...], preferred_element_type=jnp.float32
    ).astype(o_ref.dtype)


def patch_embed(patches_bf16, w_bf16, *, preferred_tile=256):
    M, K = patches_bf16.shape
    N = w_bf16.shape[1]
    tile = M
    if M > preferred_tile:
        for t in (preferred_tile, 128, 64, 32, 16, 8):
            if M % t == 0:
                tile = t
                break
    return pl.pallas_call(
        _patch_embed_kernel,
        out_shape=jax.ShapeDtypeStruct((M, N), jnp.float32),
        grid=(M // tile,),
        in_specs=[
            pl.BlockSpec((tile, K), lambda i: (i, 0)),
            pl.BlockSpec((K, N), lambda i: (0, 0)),
        ],
        out_specs=pl.BlockSpec((tile, N), lambda i: (i, 0)),
        compiler_params=pltpu.CompilerParams(dimension_semantics=("parallel",)),
    )(patches_bf16, w_bf16)


# ----------------------------------------------------------------------------
# Kernel 2: fused transformer (ln_pre + all residual blocks + ln_post/proj head)
#   grid = (batch_blocks, layers); activation resident in VMEM across layers.
# ----------------------------------------------------------------------------
def _transformer_kernel(x_ref, lnp_w, lnp_b,
                        ln1_w, ln1_b, qkv_w, qkv_b, out_w, out_b,
                        ln2_w, ln2_b, fc_w, fc_b, pj_w, pj_b,
                        lnpost_w, lnpost_b, proj_ref,
                        o_ref, acc_ref, ctx_ref,
                        *, heads, d_model, seq_len, lp, bb):
    layer = pl.program_id(1)
    n_layers = pl.num_programs(1)
    hd = d_model // heads
    scale = hd ** -0.5
    rows = bb * lp

    # ln_pre fused into the first layer: single HBM read of the activations.
    @pl.when(layer == 0)
    def _():
        xin = x_ref[...].reshape(rows, d_model)
        acc_ref[...] = _layernorm(xin, lnp_w[...], lnp_b[...])

    x = acc_ref[...]                                            # (rows, D) f32

    # ---- attention branch ---------------------------------------------------
    h = _layernorm(x, ln1_w[0], ln1_b[0]).astype(jnp.bfloat16)
    qkv = jnp.dot(h, qkv_w[0], preferred_element_type=jnp.float32) \
        + qkv_b[0].astype(jnp.float32)                          # (rows, 3D) f32
    q = qkv[:, :d_model] * scale
    k = qkv[:, d_model:2 * d_model]
    v = qkv[:, 2 * d_model:]

    if seq_len != lp:
        row_ids = jax.lax.broadcasted_iota(jnp.int32, (rows, 1), 0)
        v = jnp.where((row_ids % lp) < seq_len, v, 0.0)         # NaN-safe pads
        key_valid = jax.lax.broadcasted_iota(jnp.int32, (1, lp), 1) < seq_len
    else:
        key_valid = None

    q_bf = q.astype(jnp.bfloat16)
    k_bf = k.astype(jnp.bfloat16)
    v_bf = v.astype(jnp.bfloat16)

    dn = (((1,), (1,)), ((), ()))                               # contract last dims
    for b in range(bb):
        r0 = b * lp
        q_b = q_bf[r0:r0 + lp, :]
        k_b = k_bf[r0:r0 + lp, :]
        v_b = v_bf[r0:r0 + lp, :]
        for hh in range(heads):
            c0 = hh * hd
            s = jax.lax.dot_general(q_b[:, c0:c0 + hd], k_b[:, c0:c0 + hd], dn,
                                    preferred_element_type=jnp.float32)
            if key_valid is not None:
                s = jnp.where(key_valid, s, -1e30)              # mask padded keys
            s = s - jnp.max(s, axis=-1, keepdims=True)
            p = jnp.exp(s)
            p = p * pl.reciprocal(jnp.sum(p, axis=-1, keepdims=True), approx=True)
            ctx = jnp.dot(p.astype(jnp.bfloat16), v_b[:, c0:c0 + hd],
                          preferred_element_type=jnp.float32)   # (lp, hd)
            ctx_ref[r0:r0 + lp, c0:c0 + hd] = ctx.astype(jnp.bfloat16)

    # single full-K output projection over all heads / all folded images
    attn = jnp.dot(ctx_ref[...], out_w[0], preferred_element_type=jnp.float32)
    x = x + attn + out_b[0].astype(jnp.float32)

    # ---- MLP branch ----------------------------------------------------------
    h2 = _layernorm(x, ln2_w[0], ln2_b[0]).astype(jnp.bfloat16)
    f = jnp.dot(h2, fc_w[0], preferred_element_type=jnp.float32) \
        + fc_b[0].astype(jnp.float32)
    f = f * jax.nn.sigmoid(1.702 * f)                            # QuickGELU (f32)
    m = jnp.dot(f.astype(jnp.bfloat16), pj_w[0], preferred_element_type=jnp.float32) \
        + pj_b[0].astype(jnp.float32)
    x = x + m

    acc_ref[...] = x

    # ---- fused head: ln_post on CLS rows + lane-dense projection ------------
    @pl.when(layer == n_layers - 1)
    def _():
        cls = jnp.concatenate([x[b * lp:b * lp + 1, :] for b in range(bb)], axis=0)
        hcls = _layernorm(cls, lnpost_w[...], lnpost_b[...]).astype(jnp.bfloat16)
        o_ref[0] = jnp.dot(hcls, proj_ref[...],
                           preferred_element_type=jnp.float32).astype(o_ref.dtype)


def _pick_batch_block(batch, lp, d, act_budget_bytes=24 << 20):
    """Largest divisor of batch with >=2 batch blocks (v7x megacore) that fits
    the activation budget; falls back to 1."""
    if batch <= 1:
        return 1
    best = 1
    for bb in range(1, batch + 1):
        if batch % bb:
            continue
        if batch // bb < 2:
            continue
        act_bytes = bb * lp * d * (4 + 2) + bb * lp * 4 * d * 4
        if act_bytes > act_budget_bytes:
            continue
        best = bb
    return best


def transformer_head_pallas(tokens, prepped, *, heads, seq_len, output_dim):
    B, Lp, D = tokens.shape
    layers = prepped['qkv_w'].shape[0]
    n_pad = prepped['proj_p'].shape[1]
    Bb = _pick_batch_block(B, Lp, D)
    nb = B // Bb
    rows = Bb * Lp

    # VMEM budget derived from the actual block shapes, capped per generation.
    w_layer = 12 * D * D * 2 + 13 * D * 4          # per-layer bf16 weights + f32 vecs
    est = (2 * w_layer                              # double-buffered weight stream
           + 2 * rows * D * 4                       # x input block (double-buffered)
           + 2 * Bb * n_pad * 4                     # output block
           + D * n_pad * 2                          # resident projection
           + rows * D * (4 + 2)                     # acc + ctx scratch
           + rows * 3 * D * 4                       # qkv intermediate
           + rows * 4 * D * 4 * 2                   # MLP intermediate (f32 + bf16)
           + 4 * Lp * Lp * 4)                       # softmax temporaries
    phys = _physical_vmem_bytes()
    vmem_limit = int(min(max(est + (16 << 20), 32 << 20), int(phys * 0.85)))

    kernel = functools.partial(_transformer_kernel, heads=heads, d_model=D,
                               seq_len=seq_len, lp=Lp, bb=Bb)

    in_specs = [
        pl.BlockSpec((Bb, Lp, D), lambda b, l: (b, 0, 0)),        # x
        pl.BlockSpec((1, D), lambda b, l: (0, 0)),                # ln_pre_w
        pl.BlockSpec((1, D), lambda b, l: (0, 0)),                # ln_pre_b
        pl.BlockSpec((1, 1, D), lambda b, l: (l, 0, 0)),          # ln1_w
        pl.BlockSpec((1, 1, D), lambda b, l: (l, 0, 0)),          # ln1_b
        pl.BlockSpec((1, D, 3 * D), lambda b, l: (l, 0, 0)),      # qkv_w
        pl.BlockSpec((1, 1, 3 * D), lambda b, l: (l, 0, 0)),      # qkv_b
        pl.BlockSpec((1, D, D), lambda b, l: (l, 0, 0)),          # out_w
        pl.BlockSpec((1, 1, D), lambda b, l: (l, 0, 0)),          # out_b
        pl.BlockSpec((1, 1, D), lambda b, l: (l, 0, 0)),          # ln2_w
        pl.BlockSpec((1, 1, D), lambda b, l: (l, 0, 0)),          # ln2_b
        pl.BlockSpec((1, D, 4 * D), lambda b, l: (l, 0, 0)),      # fc_w
        pl.BlockSpec((1, 1, 4 * D), lambda b, l: (l, 0, 0)),      # fc_b
        pl.BlockSpec((1, 4 * D, D), lambda b, l: (l, 0, 0)),      # pj_w
        pl.BlockSpec((1, 1, D), lambda b, l: (l, 0, 0)),          # pj_b
        pl.BlockSpec((1, D), lambda b, l: (0, 0)),                # ln_post_w
        pl.BlockSpec((1, D), lambda b, l: (0, 0)),                # ln_post_b
        pl.BlockSpec((D, n_pad), lambda b, l: (0, 0)),            # proj (padded)
    ]

    out = pl.pallas_call(
        kernel,
        out_shape=jax.ShapeDtypeStruct((nb, Bb, n_pad), jnp.float32),
        grid=(nb, layers),
        in_specs=in_specs,
        out_specs=pl.BlockSpec((1, Bb, n_pad), lambda b, l: (b, 0, 0)),
        scratch_shapes=[pltpu.VMEM((rows, D), jnp.float32),       # residual acc
                        pltpu.VMEM((rows, D), jnp.bfloat16)],     # per-head ctx
        compiler_params=pltpu.CompilerParams(
            dimension_semantics=("parallel", "arbitrary"),
            vmem_limit_bytes=vmem_limit),
    )(tokens, prepped['ln_pre_w'], prepped['ln_pre_b'],
      prepped['ln1_w'], prepped['ln1_b'], prepped['qkv_w'], prepped['qkv_b'],
      prepped['out_w'], prepped['out_b'], prepped['ln2_w'], prepped['ln2_b'],
      prepped['fc_w'], prepped['fc_b'], prepped['pj_w'], prepped['pj_b'],
      prepped['ln_post_w'], prepped['ln_post_b'], prepped['proj_p'])

    return out.reshape(B, n_pad)[:, :output_dim]


# ----------------------------------------------------------------------------
# One-time parameter preparation (runs ONCE, outside the jitted forward)
# ----------------------------------------------------------------------------
def prepare_params(params, output_dim):
    blocks = params['blocks']
    D = params['ln_pre_w'].shape[0]
    bf16 = jnp.bfloat16
    n_pad = max(128, ((output_dim + 127) // 128) * 128)

    def stack_vec(name):                         # (layers, 1, X)  f32
        return jnp.stack([b[name] for b in blocks], axis=0)[:, None, :].astype(jnp.float32)

    def stack_mat_t(name):                       # (layers, in, out)  bf16
        return jnp.stack([b[name].T for b in blocks], axis=0).astype(bf16)

    proj_p = jnp.zeros((D, n_pad), bf16).at[:, :output_dim].set(
        params['proj'].astype(bf16))

    prepped = dict(
        conv_w=params['conv_w'].reshape(D, -1).T.astype(bf16),    # (C*ps*ps, D)
        cls=params['cls'].astype(jnp.float32),
        pos=params['pos'].astype(jnp.float32),
        ln_pre_w=params['ln_pre_w'].reshape(1, D).astype(jnp.float32),
        ln_pre_b=params['ln_pre_b'].reshape(1, D).astype(jnp.float32),
        ln1_w=stack_vec('ln1_w'), ln1_b=stack_vec('ln1_b'),
        qkv_w=stack_mat_t('qkv_w'), qkv_b=stack_vec('qkv_b'),     # (l, D, 3D)
        out_w=stack_mat_t('out_w'), out_b=stack_vec('out_b'),     # (l, D, D)
        ln2_w=stack_vec('ln2_w'), ln2_b=stack_vec('ln2_b'),
        fc_w=stack_mat_t('fc_w'), fc_b=stack_vec('fc_b'),         # (l, D, 4D)
        pj_w=stack_mat_t('pj_w'), pj_b=stack_vec('pj_b'),         # (l, 4D, D)
        ln_post_w=params['ln_post_w'].reshape(1, D).astype(jnp.float32),
        ln_post_b=params['ln_post_b'].reshape(1, D).astype(jnp.float32),
        proj_p=proj_p,
    )
    return prepped


# ----------------------------------------------------------------------------
# Parameter init (deterministic, synthetic; mirrors module __init__ shapes)
# ----------------------------------------------------------------------------
def init_params(key, width, layers, patch_size, output_dim, num_patches):
    D = width
    scale = D ** -0.5
    keys = jax.random.split(key, 4 + layers)
    params = {
        'conv_w': 0.02 * jax.random.normal(keys[0], (D, 3, patch_size, patch_size), jnp.float32),
        'cls':    scale * jax.random.normal(keys[1], (D,), jnp.float32),
        'pos':    scale * jax.random.normal(keys[2], (num_patches + 1, D), jnp.float32),
        'ln_pre_w': jnp.ones((D,), jnp.float32),  'ln_pre_b': jnp.zeros((D,), jnp.float32),
        'ln_post_w': jnp.ones((D,), jnp.float32), 'ln_post_b': jnp.zeros((D,), jnp.float32),
        'proj':   scale * jax.random.normal(keys[3], (D, output_dim), jnp.float32),
    }
    blocks = []
    for l in range(layers):
        k = jax.random.split(keys[4 + l], 8)
        blocks.append(dict(
            ln1_w=jnp.ones((D,), jnp.float32), ln1_b=jnp.zeros((D,), jnp.float32),
            qkv_w=0.02 * jax.random.normal(k[0], (3 * D, D), jnp.float32),
            qkv_b=0.02 * jax.random.normal(k[1], (3 * D,), jnp.float32),
            out_w=0.02 * jax.random.normal(k[2], (D, D), jnp.float32),
            out_b=0.02 * jax.random.normal(k[3], (D,), jnp.float32),
            ln2_w=jnp.ones((D,), jnp.float32), ln2_b=jnp.zeros((D,), jnp.float32),
            fc_w=0.02 * jax.random.normal(k[4], (4 * D, D), jnp.float32),
            fc_b=0.02 * jax.random.normal(k[5], (4 * D,), jnp.float32),
            pj_w=0.02 * jax.random.normal(k[6], (D, 4 * D), jnp.float32),
            pj_b=0.02 * jax.random.normal(k[7], (D,), jnp.float32),
        ))
    params['blocks'] = blocks
    return params


# ----------------------------------------------------------------------------
# Full forward pass (jit this; `prepped` is produced once outside)
# ----------------------------------------------------------------------------
def vision_transformer_forward(x, prepped, *, patch_size, heads, output_dim):
    B, C, H, W = x.shape
    D = prepped['pos'].shape[-1]
    gh, gw = H // patch_size, W // patch_size
    P = gh * gw
    L = P + 1
    Lp = ((L + 15) // 16) * 16                  # bf16 sublane-packed sequence length

    # conv1 with stride == kernel size: non-overlapping patches -> matmul.
    patches = x.reshape(B, C, gh, patch_size, gw, patch_size)
    patches = patches.transpose(0, 2, 4, 1, 3, 5).reshape(B * P, C * patch_size * patch_size)
    patches = patches.astype(jnp.bfloat16)      # halves patch-embed input DMA
    emb = patch_embed(patches, prepped['conv_w']).reshape(B, P, D)

    # class token + positional embedding; zero-pad the sequence (glue).
    cls = jnp.broadcast_to(prepped['cls'], (B, 1, D))
    tokens = jnp.concatenate([cls, emb.astype(jnp.float32)], axis=1) + prepped['pos'][None]
    if Lp != L:
        tokens = jnp.pad(tokens, ((0, 0), (0, Lp - L), (0, 0)))

    # ln_pre + all blocks + ln_post/projection head in a single fused kernel.
    return transformer_head_pallas(tokens, prepped, heads=heads,
                                   seq_len=L, output_dim=output_dim)


if __name__ == "__main__":
    # Small, TPU-friendly configuration (head_dim = 128, lane-aligned).
    input_resolution = 16
    patch_size = 8
    width = 256
    layers = 2
    heads = 2
    output_dim = 32
    batch = 2
    num_patches = (input_resolution // patch_size) ** 2

    key = jax.random.PRNGKey(0)
    kx, kp = jax.random.split(key)
    x = jax.random.normal(kx, (batch, 3, input_resolution, input_resolution), jnp.float32)
    params = init_params(kp, width, layers, patch_size, output_dim, num_patches)

    # One-time weight restaging (NOT inside the jitted forward).
    prepped = prepare_params(params, output_dim)
    prepped = jax.tree_util.tree_map(jax.block_until_ready, prepped)

    fwd = jax.jit(functools.partial(vision_transformer_forward,
                                    patch_size=patch_size, heads=heads,
                                    output_dim=output_dim))
    out = fwd(x, prepped)
    out = jax.block_until_ready(out)
    assert out.shape == (batch, output_dim), out.shape
    assert bool(jnp.all(jnp.isfinite(out)))
    print("KERNEL_OK")
</pallas_src>

<mosaic_0001>
module attributes {stable_mosaic.version = 11 : i64} {
  func.func @_patch_embed_kernel(%arg0: i32, %arg1: memref<8x192xbf16, #tpu.memory_space<vmem>>, %arg2: memref<192x256xbf16, #tpu.memory_space<vmem>>, %arg3: memref<8x256xf32, #tpu.memory_space<vmem>>) attributes {dimension_semantics = [#tpu.dimension_semantics<parallel>], iteration_bounds = array<i64: 1>, scalar_prefetch = 0 : i64, scratch_operands = 0 : i64, tpu.core_type = #tpu.core_type<tc>, window_params = [{transform_indices = @transform_0, window_bounds = array<i64: 8, 192>}, {pipeline_mode = #tpu.pipeline_mode<synchronous>, transform_indices = @transform_1, window_bounds = array<i64: 192, 256>}, {transform_indices = @transform_2, window_bounds = array<i64: 8, 256>}]} {
    %c0 = arith.constant 0 : index
    %c0_0 = arith.constant 0 : index
    %0 = vector.load %arg1[%c0, %c0_0] : memref<8x192xbf16, #tpu.memory_space<vmem>>, vector<8x192xbf16>
    %c0_1 = arith.constant 0 : index
    %c0_2 = arith.constant 0 : index
    %1 = vector.load %arg2[%c0_1, %c0_2] : memref<192x256xbf16, #tpu.memory_space<vmem>>, vector<192x256xbf16>
    %cst = arith.constant dense<0.000000e+00> : vector<8x256xf32>
    %2 = tpu.matmul %0, %1, %cst {dimension_numbers = #tpu.dot_dimension_numbers<[1], [0], [0], [1], [0, 0, 1, 1], [], []>} : vector<8x192xbf16>, vector<192x256xbf16>, vector<8x256xf32> -> vector<8x256xf32>
    %c0_3 = arith.constant 0 : index
    %c0_4 = arith.constant 0 : index
    %3 = vector.load %arg3[%c0_3, %c0_4] : memref<8x256xf32, #tpu.memory_space<vmem>>, vector<8x256xf32>
    tpu.vector_store %arg3[%c0_3, %c0_4], %2 {strides = array<i32>} : memref<8x256xf32, #tpu.memory_space<vmem>>, vector<8x256xf32>,
    return
  }
  func.func @transform_0(%arg0: i32) -> (i32, i32) {
    %c0_i32 = arith.constant 0 : i32
    %c0_i32_0 = arith.constant 0 : i32
    return %arg0, %c0_i32 : i32, i32
  }
  func.func @transform_1(%arg0: i32) -> (i32, i32) {
    %c0_i32 = arith.constant 0 : i32
    %c0_i32_0 = arith.constant 0 : i32
    %c0_i32_1 = arith.constant 0 : i32
    return %c0_i32, %c0_i32_0 : i32, i32
  }
  func.func @transform_2(%arg0: i32) -> (i32, i32) {
    %c0_i32 = arith.constant 0 : i32
    %c0_i32_0 = arith.constant 0 : i32
    return %arg0, %c0_i32 : i32, i32
  }
}

module attributes {stable_mosaic.version = 11 : i64} {
  func.func @_transformer_kernel(%arg0: i32, %arg1: i32, %arg2: memref<1x16x256xf32, #tpu.memory_space<vmem>>, %arg3: memref<1x256xf32, #tpu.memory_space<vmem>>, %arg4: memref<1x256xf32, #tpu.memory_space<vmem>>, %arg5: memref<1x1x256xf32, #tpu.memory_space<vmem>>, %arg6: memref<1x1x256xf32, #tpu.memory_space<vmem>>, %arg7: memref<1x256x768xbf16, #tpu.memory_space<vmem>>, %arg8: memref<1x1x768xf32, #tpu.memory_space<vmem>>, %arg9: memref<1x256x256xbf16, #tpu.memory_space<vmem>>, %arg10: memref<1x1x256xf32, #tpu.memory_space<vmem>>, %arg11: memref<1x1x256xf32, #tpu.memory_space<vmem>>, %arg12: memref<1x1x256xf32, #tpu.memory_space<vmem>>, %arg13: memref<1x256x1024xbf16, #tpu.memory_space<vmem>>, %arg14: memref<1x1x1024xf32, #tpu.memory_space<vmem>>, %arg15: memref<1x1024x256xbf16, #tpu.memory_space<vmem>>, %arg16: memref<1x1x256xf32, #tpu.memory_space<vmem>>, %arg17: memref<1x256xf32, #tpu.memory_space<vmem>>, %arg18: memref<1x256xf32, #tpu.memory_space<vmem>>, %arg19: memref<256x128xbf16, #tpu.memory_space<vmem>>, %arg20: memref<1x1x128xf32, #tpu.memory_space<vmem>>, %arg21: memref<16x256xf32, #tpu.memory_space<vmem>>, %arg22: memref<16x256xbf16, #tpu.memory_space<vmem>>) attributes {dimension_semantics = [#tpu.dimension_semantics<parallel>, #tpu.dimension_semantics<arbitrary>], iteration_bounds = array<i64: 2, 2>, scalar_prefetch = 0 : i64, scratch_operands = 2 : i64, tpu.core_type = #tpu.core_type<tc>, window_params = [{transform_indices = @transform_0, window_bounds = array<i64: 1, 16, 256>}, {pipeline_mode = #tpu.pipeline_mode<synchronous>, transform_indices = @transform_1, window_bounds = array<i64: 1, 256>}, {pipeline_mode = #tpu.pipeline_mode<synchronous>, transform_indices = @transform_2, window_bounds = array<i64: 1, 256>}, {transform_indices = @transform_3, window_bounds = array<i64: 1, 1, 256>}, {transform_indices = @transform_4, window_bounds = array<i64: 1, 1, 256>}, {transform_indices = @transform_5, window_bounds = array<i64: 1, 256, 768>}, {transform_indices = @transform_6, window_bounds = array<i64: 1, 1, 768>}, {transform_indices = @transform_7, window_bounds = array<i64: 1, 256, 256>}, {transform_indices = @transform_8, window_bounds = array<i64: 1, 1, 256>}, {transform_indices = @transform_9, window_bounds = array<i64: 1, 1, 256>}, {transform_indices = @transform_10, window_bounds = array<i64: 1, 1, 256>}, {transform_indices = @transform_11, window_bounds = array<i64: 1, 256, 1024>}, {transform_indices = @transform_12, window_bounds = array<i64: 1, 1, 1024>}, {transform_indices = @transform_13, window_bounds = array<i64: 1, 1024, 256>}, {transform_indices = @transform_14, window_bounds = array<i64: 1, 1, 256>}, {pipeline_mode = #tpu.pipeline_mode<synchronous>, transform_indices = @transform_15, window_bounds = array<i64: 1, 256>}, {pipeline_mode = #tpu.pipeline_mode<synchronous>, transform_indices = @transform_16, window_bounds = array<i64: 1, 256>}, {pipeline_mode = #tpu.pipeline_mode<synchronous>, transform_indices = @transform_17, window_bounds = array<i64: 256, 128>}, {transform_indices = @transform_18, window_bounds = array<i64: 1, 1, 128>}]} {
    %c0_i32 = arith.constant 0 : i32
    %0 = arith.cmpi eq, %arg1, %c0_i32 : i32
    %1 = arith.extui %0 : i1 to i32
    %c0_i32_0 = arith.constant 0 : i32
    %2 = arith.cmpi ne, %1, %c0_i32_0 : i32
    scf.if %2 {
      %c0_79 = arith.constant 0 : index
      %c0_80 = arith.constant 0 : index
      %c0_81 = arith.constant 0 : index
      %180 = vector.load %arg2[%c0_79, %c0_80, %c0_81] : memref<1x16x256xf32, #tpu.memory_space<vmem>>, vector<1x16x256xf32>
      %181 = vector.shape_cast %180 : vector<1x16x256xf32> to vector<16x256xf32>
      %c0_82 = arith.constant 0 : index
      %c0_83 = arith.constant 0 : index
      %182 = vector.load %arg3[%c0_82, %c0_83] : memref<1x256xf32, #tpu.memory_space<vmem>>, vector<1x256xf32>
      %c0_84 = arith.constant 0 : index
      %c0_85 = arith.constant 0 : index
      %183 = vector.load %arg4[%c0_84, %c0_85] : memref<1x256xf32, #tpu.memory_space<vmem>>, vector<1x256xf32>
      %cst_86 = arith.constant dense<0.000000e+00> : vector<16xf32>
      %184 = vector.multi_reduction <add>, %181, %cst_86 [1] : vector<16x256xf32> to vector<16xf32>
      %185 = vector.shape_cast %184 : vector<16xf32> to vector<16x1xf32>
      %cst_87 = arith.constant 2.560000e+02 : f32
      %186 = vector.broadcast %cst_87 : f32 to vector<16x1xf32>
      %187 = arith.divf %185, %186 : vector<16x1xf32>
      %188 = vector.broadcast %187 : vector<16x1xf32> to vector<16x256xf32>
      %189 = arith.subf %181, %188 : vector<16x256xf32>
      %190 = arith.mulf %189, %189 : vector<16x256xf32>
      %cst_88 = arith.constant dense<0.000000e+00> : vector<16xf32>
      %191 = vector.multi_reduction <add>, %190, %cst_88 [1] : vector<16x256xf32> to vector<16xf32>
      %192 = vector.shape_cast %191 : vector<16xf32> to vector<16x1xf32>
      %cst_89 = arith.constant 2.560000e+02 : f32
      %193 = vector.broadcast %cst_89 : f32 to vector<16x1xf32>
      %194 = arith.divf %192, %193 : vector<16x1xf32>
      %195 = vector.broadcast %187 : vector<16x1xf32> to vector<16x256xf32>
      %196 = arith.subf %181, %195 : vector<16x256xf32>
      %cst_90 = arith.constant 9.99999974E-6 : f32
      %197 = vector.broadcast %cst_90 : f32 to vector<16x1xf32>
      %198 = arith.addf %194, %197 : vector<16x1xf32>
      %199 = math.rsqrt %198 : vector<16x1xf32>
      %200 = vector.broadcast %199 : vector<16x1xf32> to vector<16x256xf32>
      %201 = arith.mulf %196, %200 : vector<16x256xf32>
      %202 = vector.broadcast %182 : vector<1x256xf32> to vector<16x256xf32>
      %203 = arith.mulf %201, %202 : vector<16x256xf32>
      %204 = vector.broadcast %183 : vector<1x256xf32> to vector<16x256xf32>
      %205 = arith.addf %203, %204 : vector<16x256xf32>
      %c0_91 = arith.constant 0 : index
      %c0_92 = arith.constant 0 : index
      %206 = vector.load %arg21[%c0_91, %c0_92] : memref<16x256xf32, #tpu.memory_space<vmem>>, vector<16x256xf32>
      tpu.vector_store %arg21[%c0_91, %c0_92], %205 {strides = array<i32>} : memref<16x256xf32, #tpu.memory_space<vmem>>, vector<16x256xf32>,
    } else {
    }
    %c0 = arith.constant 0 : index
    %c0_1 = arith.constant 0 : index
    %3 = vector.load %arg21[%c0, %c0_1] : memref<16x256xf32, #tpu.memory_space<vmem>>, vector<16x256xf32>
    %c0_2 = arith.constant 0 : index
    %c0_3 = arith.constant 0 : index
    %c0_4 = arith.constant 0 : index
    %4 = vector.load %arg5[%c0_2, %c0_3, %c0_4] : memref<1x1x256xf32, #tpu.memory_space<vmem>>, vector<1x1x256xf32>
    %5 = vector.shape_cast %4 : vector<1x1x256xf32> to vector<1x256xf32>
    %c0_5 = arith.constant 0 : index
    %c0_6 = arith.constant 0 : index
    %c0_7 = arith.constant 0 : index
    %6 = vector.load %arg6[%c0_5, %c0_6, %c0_7] : memref<1x1x256xf32, #tpu.memory_space<vmem>>, vector<1x1x256xf32>
    %7 = vector.shape_cast %6 : vector<1x1x256xf32> to vector<1x256xf32>
    %cst = arith.constant dense<0.000000e+00> : vector<16xf32>
    %8 = vector.multi_reduction <add>, %3, %cst [1] : vector<16x256xf32> to vector<16xf32>
    %9 = vector.shape_cast %8 : vector<16xf32> to vector<16x1xf32>
    %cst_8 = arith.constant 2.560000e+02 : f32
    %10 = vector.broadcast %cst_8 : f32 to vector<16x1xf32>
    %11 = arith.divf %9, %10 : vector<16x1xf32>
    %12 = vector.broadcast %11 : vector<16x1xf32> to vector<16x256xf32>
    %13 = arith.subf %3, %12 : vector<16x256xf32>
    %14 = arith.mulf %13, %13 : vector<16x256xf32>
    %cst_9 = arith.constant dense<0.000000e+00> : vector<16xf32>
    %15 = vector.multi_reduction <add>, %14, %cst_9 [1] : vector<16x256xf32> to vector<16xf32>
    %16 = vector.shape_cast %15 : vector<16xf32> to vector<16x1xf32>
    %cst_10 = arith.constant 2.560000e+02 : f32
    %17 = vector.broadcast %cst_10 : f32 to vector<16x1xf32>
    %18 = arith.divf %16, %17 : vector<16x1xf32>
    %19 = vector.broadcast %11 : vector<16x1xf32> to vector<16x256xf32>
    %20 = arith.subf %3, %19 : vector<16x256xf32>
    %cst_11 = arith.constant 9.99999974E-6 : f32
    %21 = vector.broadcast %cst_11 : f32 to vector<16x1xf32>
    %22 = arith.addf %18, %21 : vector<16x1xf32>
    %23 = math.rsqrt %22 : vector<16x1xf32>
    %24 = vector.broadcast %23 : vector<16x1xf32> to vector<16x256xf32>
    %25 = arith.mulf %20, %24 : vector<16x256xf32>
    %26 = vector.broadcast %5 : vector<1x256xf32> to vector<16x256xf32>
    %27 = arith.mulf %25, %26 : vector<16x256xf32>
    %28 = vector.broadcast %7 : vector<1x256xf32> to vector<16x256xf32>
    %29 = arith.addf %27, %28 : vector<16x256xf32>
    %30 = arith.truncf %29 : vector<16x256xf32> to vector<16x256xbf16>
    %c0_12 = arith.constant 0 : index
    %c0_13 = arith.constant 0 : index
    %c0_14 = arith.constant 0 : index
    %31 = vector.load %arg7[%c0_12, %c0_13, %c0_14] : memref<1x256x768xbf16, #tpu.memory_space<vmem>>, vector<1x256x768xbf16>
    %32 = vector.shape_cast %31 : vector<1x256x768xbf16> to vector<256x768xbf16>
    %cst_15 = arith.constant dense<0.000000e+00> : vector<16x768xf32>
    %33 = tpu.matmul %30, %32, %cst_15 {dimension_numbers = #tpu.dot_dimension_numbers<[1], [0], [0], [1], [0, 0, 1, 1], [], []>} : vector<16x256xbf16>, vector<256x768xbf16>, vector<16x768xf32> -> vector<16x768xf32>
    %c0_16 = arith.constant 0 : index
    %c0_17 = arith.constant 0 : index
    %c0_18 = arith.constant 0 : index
    %34 = vector.load %arg8[%c0_16, %c0_17, %c0_18] : memref<1x1x768xf32, #tpu.memory_space<vmem>>, vector<1x1x768xf32>
    %35 = vector.shape_cast %34 : vector<1x1x768xf32> to vector<1x768xf32>
    %36 = vector.broadcast %35 : vector<1x768xf32> to vector<16x768xf32>
    %37 = arith.addf %33, %36 : vector<16x768xf32>
    %38 = vector.extract_strided_slice %37 {offsets = [0, 0], sizes = [16, 256], strides = [1, 1]} : vector<16x768xf32> to vector<16x256xf32>
    %cst_19 = arith.constant 0.0883883461 : f32
    %39 = vector.broadcast %cst_19 : f32 to vector<16x256xf32>
    %40 = arith.mulf %38, %39 : vector<16x256xf32>
    %41 = vector.extract_strided_slice %37 {offsets = [0, 256], sizes = [16, 256], strides = [1, 1]} : vector<16x768xf32> to vector<16x256xf32>
    %42 = vector.extract_strided_slice %37 {offsets = [0, 512], sizes = [16, 256], strides = [1, 1]} : vector<16x768xf32> to vector<16x256xf32>
    %43 = tpu.iota {dimensions = array<i32: 0>} : vector<16x1xi32>
    %c16_i32 = arith.constant 16 : i32
    %c0_i32_20 = arith.constant 0 : i32
    %44 = arith.cmpi eq, %c16_i32, %c0_i32_20 : i32
    %c1_i32 = arith.constant 1 : i32
    %45 = arith.select %44, %c1_i32, %c16_i32 : i32
    %46 = vector.broadcast %45 : i32 to vector<16x1xi32>
    %47 = arith.remsi %43, %46 : vector<16x1xi32>
    %c0_i32_21 = arith.constant 0 : i32
    %48 = vector.broadcast %c0_i32_21 : i32 to vector<16x1xi32>
    %49 = arith.cmpi ne, %47, %48 : vector<16x1xi32>
    %c0_i32_22 = arith.constant 0 : i32
    %50 = vector.broadcast %c0_i32_22 : i32 to vector<16x1xi32>
    %51 = arith.cmpi slt, %47, %50 : vector<16x1xi32>
    %c0_i32_23 = arith.constant 0 : i32
    %52 = arith.cmpi slt, %45, %c0_i32_23 : i32
    %53 = vector.broadcast %52 : i1 to vector<16x1xi1>
    %54 = vector.broadcast %53 : vector<16x1xi1> to vector<16x1xi1>
    %55 = arith.xori %51, %54 : vector<16x1xi1>
    %56 = arith.andi %55, %49 : vector<16x1xi1>
    %57 = vector.broadcast %45 : i32 to vector<16x1xi32>
    %58 = arith.addi %47, %57 : vector<16x1xi32>
    %59 = arith.select %56, %58, %47 : vector<16x1xi1>, vector<16x1xi32>
    %c5_i32 = arith.constant 5 : i32
    %60 = vector.broadcast %c5_i32 : i32 to vector<16x1xi32>
    %61 = arith.cmpi slt, %59, %60 : vector<16x1xi32>
    %cst_24 = arith.constant 0.000000e+00 : f32
    %62 = vector.shape_cast %61 : vector<16x1xi1> to vector<16x1xi1>
    %63 = vector.broadcast %62 : vector<16x1xi1> to vector<16x256xi1>
    %64 = vector.broadcast %cst_24 : f32 to vector<16x256xf32>
    %65 = arith.select %63, %42, %64 : vector<16x256xi1>, vector<16x256xf32>
    %66 = tpu.iota {dimensions = array<i32: 1>} : vector<1x16xi32>
    %c5_i32_25 = arith.constant 5 : i32
    %67 = vector.broadcast %c5_i32_25 : i32 to vector<1x16xi32>
    %68 = arith.cmpi slt, %66, %67 : vector<1x16xi32>
    %69 = arith.truncf %40 : vector<16x256xf32> to vector<16x256xbf16>
    %70 = arith.truncf %41 : vector<16x256xf32> to vector<16x256xbf16>
    %71 = arith.truncf %65 : vector<16x256xf32> to vector<16x256xbf16>
    %72 = vector.extract_strided_slice %69 {offsets = [0, 0], sizes = [16, 128], strides = [1, 1]} : vector<16x256xbf16> to vector<16x128xbf16>
    %73 = vector.extract_strided_slice %70 {offsets = [0, 0], sizes = [16, 128], strides = [1, 1]} : vector<16x256xbf16> to vector<16x128xbf16>
    %cst_26 = arith.constant dense<0.000000e+00> : vector<16x16xf32>
    %74 = tpu.matmul %72, %73, %cst_26 {dimension_numbers = #tpu.dot_dimension_numbers<[1], [1], [0], [0], [0, 0, 1, 0], [], []>} : vector<16x128xbf16>, vector<16x128xbf16>, vector<16x16xf32> -> vector<16x16xf32>
    %cst_27 = arith.constant -1.000000e+30 : f32
    %75 = vector.shape_cast %68 : vector<1x16xi1> to vector<1x16xi1>
    %76 = vector.broadcast %75 : vector<1x16xi1> to vector<16x16xi1>
    %77 = vector.broadcast %cst_27 : f32 to vector<16x16xf32>
    %78 = arith.select %76, %74, %77 : vector<16x16xi1>, vector<16x16xf32>
    %cst_28 = arith.constant dense<0xFF800000> : vector<16xf32>
    %79 = vector.multi_reduction <maximumf>, %78, %cst_28 [1] : vector<16x16xf32> to vector<16xf32>
    %80 = vector.shape_cast %79 : vector<16xf32> to vector<16x1xf32>
    %81 = vector.broadcast %80 : vector<16x1xf32> to vector<16x16xf32>
    %82 = arith.subf %78, %81 : vector<16x16xf32>
    %83 = math.exp %82 : vector<16x16xf32>
    %cst_29 = arith.constant dense<0.000000e+00> : vector<16xf32>
    %84 = vector.multi_reduction <add>, %83, %cst_29 [1] : vector<16x16xf32> to vector<16xf32>
    %85 = vector.shape_cast %84 : vector<16xf32> to vector<16x1xf32>
    %86 = tpu.reciprocal %85 {approx = true} : vector<16x1xf32> -> vector<16x1xf32>
    %87 = vector.broadcast %86 : vector<16x1xf32> to vector<16x16xf32>
    %88 = arith.mulf %83, %87 : vector<16x16xf32>
    %89 = arith.truncf %88 : vector<16x16xf32> to vector<16x16xbf16>
    %90 = vector.extract_strided_slice %71 {offsets = [0, 0], sizes = [16, 128], strides = [1, 1]} : vector<16x256xbf16> to vector<16x128xbf16>
    %cst_30 = arith.constant dense<0.000000e+00> : vector<16x128xf32>
    %91 = tpu.matmul %89, %90, %cst_30 {dimension_numbers = #tpu.dot_dimension_numbers<[1], [0], [0], [1], [0, 0, 1, 1], [], []>} : vector<16x16xbf16>, vector<16x128xbf16>, vector<16x128xf32> -> vector<16x128xf32>
    %92 = arith.truncf %91 : vector<16x128xf32> to vector<16x128xbf16>
    %c0_31 = arith.constant 0 : index
    %c0_32 = arith.constant 0 : index
    %93 = vector.load %arg22[%c0_31, %c0_32] : memref<16x256xbf16, #tpu.memory_space<vmem>>, vector<16x128xbf16>
    tpu.vector_store %arg22[%c0_31, %c0_32], %92 {strides = array<i32>} : memref<16x256xbf16, #tpu.memory_space<vmem>>, vector<16x128xbf16>,
    %94 = vector.extract_strided_slice %69 {offsets = [0, 128], sizes = [16, 128], strides = [1, 1]} : vector<16x256xbf16> to vector<16x128xbf16>
    %95 = vector.extract_strided_slice %70 {offsets = [0, 128], sizes = [16, 128], strides = [1, 1]} : vector<16x256xbf16> to vector<16x128xbf16>
    %cst_33 = arith.constant dense<0.000000e+00> : vector<16x16xf32>
    %96 = tpu.matmul %94, %95, %cst_33 {dimension_numbers = #tpu.dot_dimension_numbers<[1], [1], [0], [0], [0, 0, 1, 0], [], []>} : vector<16x128xbf16>, vector<16x128xbf16>, vector<16x16xf32> -> vector<16x16xf32>
    %cst_34 = arith.constant -1.000000e+30 : f32
    %97 = vector.shape_cast %68 : vector<1x16xi1> to vector<1x16xi1>
    %98 = vector.broadcast %97 : vector<1x16xi1> to vector<16x16xi1>
    %99 = vector.broadcast %cst_34 : f32 to vector<16x16xf32>
    %100 = arith.select %98, %96, %99 : vector<16x16xi1>, vector<16x16xf32>
    %cst_35 = arith.constant dense<0xFF800000> : vector<16xf32>
    %101 = vector.multi_reduction <maximumf>, %100, %cst_35 [1] : vector<16x16xf32> to vector<16xf32>
    %102 = vector.shape_cast %101 : vector<16xf32> to vector<16x1xf32>
    %103 = vector.broadcast %102 : vector<16x1xf32> to vector<16x16xf32>
    %104 = arith.subf %100, %103 : vector<16x16xf32>
    %105 = math.exp %104 : vector<16x16xf32>
    %cst_36 = arith.constant dense<0.000000e+00> : vector<16xf32>
    %106 = vector.multi_reduction <add>, %105, %cst_36 [1] : vector<16x16xf32> to vector<16xf32>
    %107 = vector.shape_cast %106 : vector<16xf32> to vector<16x1xf32>
    %108 = tpu.reciprocal %107 {approx = true} : vector<16x1xf32> -> vector<16x1xf32>
    %109 = vector.broadcast %108 : vector<16x1xf32> to vector<16x16xf32>
    %110 = arith.mulf %105, %109 : vector<16x16xf32>
    %111 = arith.truncf %110 : vector<16x16xf32> to vector<16x16xbf16>
    %112 = vector.extract_strided_slice %71 {offsets = [0, 128], sizes = [16, 128], strides = [1, 1]} : vector<16x256xbf16> to vector<16x128xbf16>
    %cst_37 = arith.constant dense<0.000000e+00> : vector<16x128xf32>
    %113 = tpu.matmul %111, %112, %cst_37 {dimension_numbers = #tpu.dot_dimension_numbers<[1], [0], [0], [1], [0, 0, 1, 1], [], []>} : vector<16x16xbf16>, vector<16x128xbf16>, vector<16x128xf32> -> vector<16x128xf32>
    %114 = arith.truncf %113 : vector<16x128xf32> to vector<16x128xbf16>
    %c0_38 = arith.constant 0 : index
    %c128 = arith.constant 128 : index
    %115 = vector.load %arg22[%c0_38, %c128] : memref<16x256xbf16, #tpu.memory_space<vmem>>, vector<16x128xbf16>
    tpu.vector_store %arg22[%c0_38, %c128], %114 {strides = array<i32>} : memref<16x256xbf16, #tpu.memory_space<vmem>>, vector<16x128xbf16>,
    %c0_39 = arith.constant 0 : index
    %c0_40 = arith.constant 0 : index
    %116 = vector.load %arg22[%c0_39, %c0_40] : memref<16x256xbf16, #tpu.memory_space<vmem>>, vector<16x256xbf16>
    %c0_41 = arith.constant 0 : index
    %c0_42 = arith.constant 0 : index
    %c0_43 = arith.constant 0 : index
    %117 = vector.load %arg9[%c0_41, %c0_42, %c0_43] : memref<1x256x256xbf16, #tpu.memory_space<vmem>>, vector<1x256x256xbf16>
    %118 = vector.shape_cast %117 : vector<1x256x256xbf16> to vector<256x256xbf16>
    %cst_44 = arith.constant dense<0.000000e+00> : vector<16x256xf32>
    %119 = tpu.matmul %116, %118, %cst_44 {dimension_numbers = #tpu.dot_dimension_numbers<[1], [0], [0], [1], [0, 0, 1, 1], [], []>} : vector<16x256xbf16>, vector<256x256xbf16>, vector<16x256xf32> -> vector<16x256xf32>
    %120 = arith.addf %3, %119 : vector<16x256xf32>
    %c0_45 = arith.constant 0 : index
    %c0_46 = arith.constant 0 : index
    %c0_47 = arith.constant 0 : index
    %121 = vector.load %arg10[%c0_45, %c0_46, %c0_47] : memref<1x1x256xf32, #tpu.memory_space<vmem>>, vector<1x1x256xf32>
    %122 = vector.shape_cast %121 : vector<1x1x256xf32> to vector<1x256xf32>
    %123 = vector.broadcast %122 : vector<1x256xf32> to vector<16x256xf32>
    %124 = arith.addf %120, %123 : vector<16x256xf32>
    %c0_48 = arith.constant 0 : index
    %c0_49 = arith.constant 0 : index
    %c0_50 = arith.constant 0 : index
    %125 = vector.load %arg11[%c0_48, %c0_49, %c0_50] : memref<1x1x256xf32, #tpu.memory_space<vmem>>, vector<1x1x256xf32>
    %126 = vector.shape_cast %125 : vector<1x1x256xf32> to vector<1x256xf32>
    %c0_51 = arith.constant 0 : index
    %c0_52 = arith.constant 0 : index
    %c0_53 = arith.constant 0 : index
    %127 = vector.load %arg12[%c0_51, %c0_52, %c0_53] : memref<1x1x256xf32, #tpu.memory_space<vmem>>, vector<1x1x256xf32>
    %128 = vector.shape_cast %127 : vector<1x1x256xf32> to vector<1x256xf32>
    %cst_54 = arith.constant dense<0.000000e+00> : vector<16xf32>
    %129 = vector.multi_reduction <add>, %124, %cst_54 [1] : vector<16x256xf32> to vector<16xf32>
    %130 = vector.shape_cast %129 : vector<16xf32> to vector<16x1xf32>
    %cst_55 = arith.constant 2.560000e+02 : f32
    %131 = vector.broadcast %cst_55 : f32 to vector<16x1xf32>
    %132 = arith.divf %130, %131 : vector<16x1xf32>
    %133 = vector.broadcast %132 : vector<16x1xf32> to vector<16x256xf32>
    %134 = arith.subf %124, %133 : vector<16x256xf32>
    %135 = arith.mulf %134, %134 : vector<16x256xf32>
    %cst_56 = arith.constant dense<0.000000e+00> : vector<16xf32>
    %136 = vector.multi_reduction <add>, %135, %cst_56 [1] : vector<16x256xf32> to vector<16xf32>
    %137 = vector.shape_cast %136 : vector<16xf32> to vector<16x1xf32>
    %cst_57 = arith.constant 2.560000e+02 : f32
    %138 = vector.broadcast %cst_57 : f32 to vector<16x1xf32>
    %139 = arith.divf %137, %138 : vector<16x1xf32>
    %140 = vector.broadcast %132 : vector<16x1xf32> to vector<16x256xf32>
    %141 = arith.subf %124, %140 : vector<16x256xf32>
    %cst_58 = arith.constant 9.99999974E-6 : f32
    %142 = vector.broadcast %cst_58 : f32 to vector<16x1xf32>
    %143 = arith.addf %139, %142 : vector<16x1xf32>
    %144 = math.rsqrt %143 : vector<16x1xf32>
    %145 = vector.broadcast %144 : vector<16x1xf32> to vector<16x256xf32>
    %146 = arith.mulf %141, %145 : vector<16x256xf32>
    %147 = vector.broadcast %126 : vector<1x256xf32> to vector<16x256xf32>
    %148 = arith.mulf %146, %147 : vector<16x256xf32>
    %149 = vector.broadcast %128 : vector<1x256xf32> to vector<16x256xf32>
    %150 = arith.addf %148, %149 : vector<16x256xf32>
    %151 = arith.truncf %150 : vector<16x256xf32> to vector<16x256xbf16>
    %c0_59 = arith.constant 0 : index
    %c0_60 = arith.constant 0 : index
    %c0_61 = arith.constant 0 : index
    %152 = vector.load %arg13[%c0_59, %c0_60, %c0_61] : memref<1x256x1024xbf16, #tpu.memory_space<vmem>>, vector<1x256x1024xbf16>
    %153 = vector.shape_cast %152 : vector<1x256x1024xbf16> to vector<256x1024xbf16>
    %cst_62 = arith.constant dense<0.000000e+00> : vector<16x1024xf32>
    %154 = tpu.matmul %151, %153, %cst_62 {dimension_numbers = #tpu.dot_dimension_numbers<[1], [0], [0], [1], [0, 0, 1, 1], [], []>} : vector<16x256xbf16>, vector<256x1024xbf16>, vector<16x1024xf32> -> vector<16x1024xf32>
    %c0_63 = arith.constant 0 : index
    %c0_64 = arith.constant 0 : index
    %c0_65 = arith.constant 0 : index
    %155 = vector.load %arg14[%c0_63, %c0_64, %c0_65] : memref<1x1x1024xf32, #tpu.memory_space<vmem>>, vector<1x1x1024xf32>
    %156 = vector.shape_cast %155 : vector<1x1x1024xf32> to vector<1x1024xf32>
    %157 = vector.broadcast %156 : vector<1x1024xf32> to vector<16x1024xf32>
    %158 = arith.addf %154, %157 : vector<16x1024xf32>
    %cst_66 = arith.constant 1.702000e+00 : f32
    %159 = vector.broadcast %cst_66 : f32 to vector<16x1024xf32>
    %160 = arith.mulf %159, %158 : vector<16x1024xf32>
    %161 = arith.negf %160 : vector<16x1024xf32>
    %162 = math.exp %161 : vector<16x1024xf32>
    %cst_67 = arith.constant 1.000000e+00 : f32
    %163 = vector.broadcast %cst_67 : f32 to vector<16x1024xf32>
    %164 = arith.addf %163, %162 : vector<16x1024xf32>
    %165 = arith.divf %163, %164 : vector<16x1024xf32>
    %166 = arith.mulf %158, %165 : vector<16x1024xf32>
    %167 = arith.truncf %166 : vector<16x1024xf32> to vector<16x1024xbf16>
    %c0_68 = arith.constant 0 : index
    %c0_69 = arith.constant 0 : index
    %c0_70 = arith.constant 0 : index
    %168 = vector.load %arg15[%c0_68, %c0_69, %c0_70] : memref<1x1024x256xbf16, #tpu.memory_space<vmem>>, vector<1x1024x256xbf16>
    %169 = vector.shape_cast %168 : vector<1x1024x256xbf16> to vector<1024x256xbf16>
    %cst_71 = arith.constant dense<0.000000e+00> : vector<16x256xf32>
    %170 = tpu.matmul %167, %169, %cst_71 {dimension_numbers = #tpu.dot_dimension_numbers<[1], [0], [0], [1], [0, 0, 1, 1], [], []>} : vector<16x1024xbf16>, vector<1024x256xbf16>, vector<16x256xf32> -> vector<16x256xf32>
    %c0_72 = arith.constant 0 : index
    %c0_73 = arith.constant 0 : index
    %c0_74 = arith.constant 0 : index
    %171 = vector.load %arg16[%c0_72, %c0_73, %c0_74] : memref<1x1x256xf32, #tpu.memory_space<vmem>>, vector<1x1x256xf32>
    %172 = vector.shape_cast %171 : vector<1x1x256xf32> to vector<1x256xf32>
    %173 = vector.broadcast %172 : vector<1x256xf32> to vector<16x256xf32>
    %174 = arith.addf %170, %173 : vector<16x256xf32>
    %175 = arith.addf %124, %174 : vector<16x256xf32>
    %c0_75 = arith.constant 0 : index
    %c0_76 = arith.constant 0 : index
    %176 = vector.load %arg21[%c0_75, %c0_76] : memref<16x256xf32, #tpu.memory_space<vmem>>, vector<16x256xf32>
    tpu.vector_store %arg21[%c0_75, %c0_76], %175 {strides = array<i32>} : memref<16x256xf32, #tpu.memory_space<vmem>>, vector<16x256xf32>,
    %c1_i32_77 = arith.constant 1 : i32
    %177 = arith.cmpi eq, %arg1, %c1_i32_77 : i32
    %178 = arith.extui %177 : i1 to i32
    %c0_i32_78 = arith.constant 0 : i32
    %179 = arith.cmpi ne, %178, %c0_i32_78 : i32
    scf.if %179 {
      %180 = vector.extract_strided_slice %175 {offsets = [0, 0], sizes = [1, 256], strides = [1, 1]} : vector<16x256xf32> to vector<1x256xf32>
      %c0_79 = arith.constant 0 : index
      %c0_80 = arith.constant 0 : index
      %181 = vector.load %arg17[%c0_79, %c0_80] : memref<1x256xf32, #tpu.memory_space<vmem>>, vector<1x256xf32>
      %c0_81 = arith.constant 0 : index
      %c0_82 = arith.constant 0 : index
      %182 = vector.load %arg18[%c0_81, %c0_82] : memref<1x256xf32, #tpu.memory_space<vmem>>, vector<1x256xf32>
      %cst_83 = arith.constant dense<0.000000e+00> : vector<1xf32>
      %183 = vector.multi_reduction <add>, %180, %cst_83 [1] : vector<1x256xf32> to vector<1xf32>
      %184 = vector.shape_cast %183 : vector<1xf32> to vector<1x1xf32>
      %cst_84 = arith.constant 2.560000e+02 : f32
      %185 = vector.broadcast %cst_84 : f32 to vector<1x1xf32>
      %186 = arith.divf %184, %185 : vector<1x1xf32>
      %187 = vector.broadcast %186 : vector<1x1xf32> to vector<1x256xf32>
      %188 = arith.subf %180, %187 : vector<1x256xf32>
      %189 = arith.mulf %188, %188 : vector<1x256xf32>
      %cst_85 = arith.constant dense<0.000000e+00> : vector<1xf32>
      %190 = vector.multi_reduction <add>, %189, %cst_85 [1] : vector<1x256xf32> to vector<1xf32>
      %191 = vector.shape_cast %190 : vector<1xf32> to vector<1x1xf32>
      %cst_86 = arith.constant 2.560000e+02 : f32
      %192 = vector.broadcast %cst_86 : f32 to vector<1x1xf32>
      %193 = arith.divf %191, %192 : vector<1x1xf32>
      %194 = vector.broadcast %186 : vector<1x1xf32> to vector<1x256xf32>
      %195 = arith.subf %180, %194 : vector<1x256xf32>
      %cst_87 = arith.constant 9.99999974E-6 : f32
      %196 = vector.broadcast %cst_87 : f32 to vector<1x1xf32>
      %197 = arith.addf %193, %196 : vector<1x1xf32>
      %198 = math.rsqrt %197 : vector<1x1xf32>
      %199 = vector.broadcast %198 : vector<1x1xf32> to vector<1x256xf32>
      %200 = arith.mulf %195, %199 : vector<1x256xf32>
      %201 = arith.mulf %200, %181 : vector<1x256xf32>
      %202 = arith.addf %201, %182 : vector<1x256xf32>
      %203 = arith.truncf %202 : vector<1x256xf32> to vector<1x256xbf16>
      %c0_88 = arith.constant 0 : index
      %c0_89 = arith.constant 0 : index
      %204 = vector.load %arg19[%c0_88, %c0_89] : memref<256x128xbf16, #tpu.memory_space<vmem>>, vector<256x128xbf16>
      %cst_90 = arith.constant dense<0.000000e+00> : vector<1x128xf32>
      %205 = tpu.matmul %203, %204, %cst_90 {dimension_numbers = #tpu.dot_dimension_numbers<[1], [0], [0], [1], [0, 0, 1, 1], [], []>} : vector<1x256xbf16>, vector<256x128xbf16>, vector<1x128xf32> -> vector<1x128xf32>
      %c0_91 = arith.constant 0 : index
      %c0_92 = arith.constant 0 : index
      %c0_93 = arith.constant 0 : index
      %206 = vector.load %arg20[%c0_91, %c0_92, %c0_93] : memref<1x1x128xf32, #tpu.memory_space<vmem>>, vector<1x1x128xf32>
      %207 = vector.shape_cast %206 : vector<1x1x128xf32> to vector<1x128xf32>
      %208 = vector.shape_cast %205 : vector<1x128xf32> to vector<1x1x128xf32>
      tpu.vector_store %arg20[%c0_91, %c0_92, %c0_93], %208 {strides = array<i32>} : memref<1x1x128xf32, #tpu.memory_space<vmem>>, vector<1x1x128xf32>,
    } else {
    }
    return
  }
  func.func @transform_0(%arg0: i32, %arg1: i32) -> (i32, i32, i32) {
    %c0_i32 = arith.constant 0 : i32
    %c0_i32_0 = arith.constant 0 : i32
    %c0_i32_1 = arith.constant 0 : i32
    return %arg0, %c0_i32, %c0_i32_0 : i32, i32, i32
  }
  func.func @transform_1(%arg0: i32, %arg1: i32) -> (i32, i32) {
    %c0_i32 = arith.constant 0 : i32
    %c0_i32_0 = arith.constant 0 : i32
    %c0_i32_1 = arith.constant 0 : i32
    return %c0_i32, %c0_i32_0 : i32, i32
  }
  func.func @transform_2(%arg0: i32, %arg1: i32) -> (i32, i32) {
    %c0_i32 = arith.constant 0 : i32
    %c0_i32_0 = arith.constant 0 : i32
    %c0_i32_1 = arith.constant 0 : i32
    return %c0_i32, %c0_i32_0 : i32, i32
  }
  func.func @transform_3(%arg0: i32, %arg1: i32) -> (i32, i32, i32) {
    %c0_i32 = arith.constant 0 : i32
    %c0_i32_0 = arith.constant 0 : i32
    %c0_i32_1 = arith.constant 0 : i32
    return %arg1, %c0_i32, %c0_i32_0 : i32, i32, i32
  }
  func.func @transform_4(%arg0: i32, %arg1: i32) -> (i32, i32, i32) {
    %c0_i32 = arith.constant 0 : i32
    %c0_i32_0 = arith.constant 0 : i32
    %c0_i32_1 = arith.constant 0 : i32
    return %arg1, %c0_i32, %c0_i32_0 : i32, i32, i32
  }
  func.func @transform_5(%arg0: i32, %arg1: i32) -> (i32, i32, i32) {
    %c0_i32 = arith.constant 0 : i32
    %c0_i32_0 = arith.constant 0 : i32
    %c0_i32_1 = arith.constant 0 : i32
    return %arg1, %c0_i32, %c0_i32_0 : i32, i32, i32
  }
  func.func @transform_6(%arg0: i32, %arg1: i32) -> (i32, i32, i32) {
    %c0_i32 = arith.constant 0 : i32
    %c0_i32_0 = arith.constant 0 : i32
    %c0_i32_1 = arith.constant 0 : i32
    return %arg1, %c0_i32, %c0_i32_0 : i32, i32, i32
  }
  func.func @transform_7(%arg0: i32, %arg1: i32) -> (i32, i32, i32) {
    %c0_i32 = arith.constant 0 : i32
    %c0_i32_0 = arith.constant 0 : i32
    %c0_i32_1 = arith.constant 0 : i32
    return %arg1, %c0_i32, %c0_i32_0 : i32, i32, i32
  }
  func.func @transform_8(%arg0: i32, %arg1: i32) -> (i32, i32, i32) {
    %c0_i32 = arith.constant 0 : i32
    %c0_i32_0 = arith.constant 0 : i32
    %c0_i32_1 = arith.constant 0 : i32
    return %arg1, %c0_i32, %c0_i32_0 : i32, i32, i32
  }
  func.func @transform_9(%arg0: i32, %arg1: i32) -> (i32, i32, i32) {
    %c0_i32 = arith.constant 0 : i32
    %c0_i32_0 = arith.constant 0 : i32
    %c0_i32_1 = arith.constant 0 : i32
    return %arg1, %c0_i32, %c0_i32_0 : i32, i32, i32
  }
  func.func @transform_10(%arg0: i32, %arg1: i32) -> (i32, i32, i32) {
    %c0_i32 = arith.constant 0 : i32
    %c0_i32_0 = arith.constant 0 : i32
    %c0_i32_1 = arith.constant 0 : i32
    return %arg1, %c0_i32, %c0_i32_0 : i32, i32, i32
  }
  func.func @transform_11(%arg0: i32, %arg1: i32) -> (i32, i32, i32) {
    %c0_i32 = arith.constant 0 : i32
    %c0_i32_0 = arith.constant 0 : i32
    %c0_i32_1 = arith.constant 0 : i32
    return %arg1, %c0_i32, %c0_i32_0 : i32, i32, i32
  }
  func.func @transform_12(%arg0: i32, %arg1: i32) -> (i32, i32, i32) {
    %c0_i32 = arith.constant 0 : i32
    %c0_i32_0 = arith.constant 0 : i32
    %c0_i32_1 = arith.constant 0 : i32
    return %arg1, %c0_i32, %c0_i32_0 : i32, i32, i32
  }
  func.func @transform_13(%arg0: i32, %arg1: i32) -> (i32, i32, i32) {
    %c0_i32 = arith.constant 0 : i32
    %c0_i32_0 = arith.constant 0 : i32
    %c0_i32_1 = arith.constant 0 : i32
    return %arg1, %c0_i32, %c0_i32_0 : i32, i32, i32
  }
  func.func @transform_14(%arg0: i32, %arg1: i32) -> (i32, i32, i32) {
    %c0_i32 = arith.constant 0 : i32
    %c0_i32_0 = arith.constant 0 : i32
    %c0_i32_1 = arith.constant 0 : i32
    return %arg1, %c0_i32, %c0_i32_0 : i32, i32, i32
  }
  func.func @transform_15(%arg0: i32, %arg1: i32) -> (i32, i32) {
    %c0_i32 = arith.constant 0 : i32
    %c0_i32_0 = arith.constant 0 : i32
    %c0_i32_1 = arith.constant 0 : i32
    return %c0_i32, %c0_i32_0 : i32, i32
  }
  func.func @transform_16(%arg0: i32, %arg1: i32) -> (i32, i32) {
    %c0_i32 = arith.constant 0 : i32
    %c0_i32_0 = arith.constant 0 : i32
    %c0_i32_1 = arith.constant 0 : i32
    return %c0_i32, %c0_i32_0 : i32, i32
  }
  func.func @transform_17(%arg0: i32, %arg1: i32) -> (i32, i32) {
    %c0_i32 = arith.constant 0 : i32
    %c0_i32_0 = arith.constant 0 : i32
    %c0_i32_1 = arith.constant 0 : i32
    return %c0_i32, %c0_i32_0 : i32, i32
  }
  func.func @transform_18(%arg0: i32, %arg1: i32) -> (i32, i32, i32) {
    %c0_i32 = arith.constant 0 : i32
    %c0_i32_0 = arith.constant 0 : i32
    %c0_i32_1 = arith.constant 0 : i32
    return %arg0, %c0_i32, %c0_i32_0 : i32, i32, i32
  }
}

</mosaic_0001>

<llo_original>
// kernel: vision_transformer_forward.2
$region0: #{vision_transformer_forward.2}
  #allocation0 [shape = 'u32[]', space=smem, size = 0x4, offset = 0x4, fixed_abs, tag = 'smem constant byte address 0x4 - core index']
  #allocation1 [shape = 'u32[144,128]{1,0:T(1,128)}', space=vmem, size = 0x12000, scoped, tag = 'internal scratch']
  %s0 = inlined_call_operand.vmem [shape: bf16[8,192], index: 0, kind: input, shape index: {}]
  %s1 = inlined_call_operand.vmem [shape: bf16[192,256], index: 1, kind: input, shape index: {}]
  %s2 = inlined_call_operand.vmem [shape: f32[8,256], index: 2, kind: output, shape index: {}]
  %s3 = sld [smem:[#allocation0]]
  $region18: #{vision_transformer_forward.2} parent=0
    _
  %s5 = ssub.s32 1, %s3
  %s6 = scalar_select 0, %s5, %s3
  // Predicated region
  $region2: #{vision_transformer_forward.2} parent=0 // pred_check
    _
  $region3: #{vision_transformer_forward.2} parent=0 // pred_check_branch
    %8 = sbr.rel (0) target = $region5
  $region4: #{vision_transformer_forward.2} parent=0 // pred_region
    _
  $region5: #{vision_transformer_forward.2} parent=0 // pred_fallthru
    _
  // Predicated region
  $region6: #{vision_transformer_forward.2} parent=0 // pred_check
    _
  $region7: #{vision_transformer_forward.2} parent=0 // pred_check_branch
    %10 = sbr.rel (0) target = $region9
  $region8: #{vision_transformer_forward.2} parent=0 // pred_region
    _
  $region9: #{vision_transformer_forward.2} parent=0 // pred_fallthru
    _
  %v12 = vld [vmem:[%s0] sm:$0xff]
  %v13 = vld [vmem:[%s1] sm:$0xff]
  %v14 = vld [vmem:[%s1 + $0x8] sm:$0xff]
  %v15 = vld [vmem:[%s1 + $0x10] sm:$0xff]
  %v16 = vld [vmem:[%s1 + $0x18] sm:$0xff]
  %v17 = vld [vmem:[%s1 + $0x20] sm:$0xff]
  %v18 = vld [vmem:[%s1 + $0x28] sm:$0xff]
  %v19 = vld [vmem:[%s1 + $0x30] sm:$0xff]
  %v20 = vld [vmem:[%s1 + $0x38] sm:$0xff]
  %v21 = vld [vmem:[%s1 + $0x40] sm:$0xff]
  %v22 = vld [vmem:[%s1 + $0x48] sm:$0xff]
  %v23 = vld [vmem:[%s1 + $0x50] sm:$0xff]
  %v24 = vld [vmem:[%s1 + $0x58] sm:$0xff]
  %v25 = vld [vmem:[%s1 + $0x60] sm:$0xff]
  %v26 = vld [vmem:[%s1 + $0x68] sm:$0xff]
  %v27 = vld [vmem:[%s1 + $0x70] sm:$0xff]
  %v28 = vld [vmem:[%s1 + $0x78] sm:$0xff]
  %v29 = vld [vmem:[%s1 + $0x80] sm:$0xff]
  %v30 = vld [vmem:[%s1 + $0x88] sm:$0xff]
  %v31 = vld [vmem:[%s1 + $0x90] sm:$0xff]
  %v32 = vld [vmem:[%s1 + $0x98] sm:$0xff]
  %v33 = vld [vmem:[%s1 + $0xa0] sm:$0xff]
  %v34 = vld [vmem:[%s1 + $0xa8] sm:$0xff]
  %v35 = vld [vmem:[%s1 + $0xb0] sm:$0xff]
  %v36 = vld [vmem:[%s1 + $0xb8] sm:$0xff]
  %v38 = vunpack.c.l.b16 %v12
  %v39 = vunpack.c.h.b16 %v12
  %v40 = vpack.c.b16 %v38, %v38
  %v41 = vpack.c.b16 %v39, %v39
  %v67 = vunpack.c.l.b16 %v13
  %v68 = vunpack.c.h.b16 %v13
  %v69 = vunpack.c.l.b16 %v14
  %v70 = vunpack.c.h.b16 %v14
  %v71 = vunpack.c.l.b16 %v15
  %v72 = vunpack.c.h.b16 %v15
  %v73 = vunpack.c.l.b16 %v16
  %v74 = vunpack.c.h.b16 %v16
  %v75 = vunpack.c.l.b16 %v17
  %v76 = vunpack.c.h.b16 %v17
  %v77 = vunpack.c.l.b16 %v18
  %v78 = vunpack.c.h.b16 %v18
  %v79 = vunpack.c.l.b16 %v19
  %v80 = vunpack.c.h.b16 %v19
  %v81 = vunpack.c.l.b16 %v20
  %v82 = vunpack.c.h.b16 %v20
  %v83 = vunpack.c.l.b16 %v21
  %v84 = vunpack.c.h.b16 %v21
  %v85 = vunpack.c.l.b16 %v22
  %v86 = vunpack.c.h.b16 %v22
  %v87 = vunpack.c.l.b16 %v23
  %v88 = vunpack.c.h.b16 %v23
  %v89 = vunpack.c.l.b16 %v24
  %v90 = vunpack.c.h.b16 %v24
  %v91 = vunpack.c.l.b16 %v25
  %v92 = vunpack.c.h.b16 %v25
  %v93 = vunpack.c.l.b16 %v26
  %v94 = vunpack.c.h.b16 %v26
  %v95 = vunpack.c.l.b16 %v27
  %v96 = vunpack.c.h.b16 %v27
  %v97 = vunpack.c.l.b16 %v28
  %v98 = vunpack.c.h.b16 %v28
  %v99 = vunpack.c.l.b16 %v29
  %v100 = vunpack.c.h.b16 %v29
  %v101 = vunpack.c.l.b16 %v30
  %v102 = vunpack.c.h.b16 %v30
  %v103 = vunpack.c.l.b16 %v31
  %v104 = vunpack.c.h.b16 %v31
  %v105 = vunpack.c.l.b16 %v32
  %v106 = vunpack.c.h.b16 %v32
  %v107 = vunpack.c.l.b16 %v33
  %v108 = vunpack.c.h.b16 %v33
  %v109 = vunpack.c.l.b16 %v34
  %v110 = vunpack.c.h.b16 %v34
  %v111 = vunpack.c.l.b16 %v35
  %v112 = vunpack.c.h.b16 %v35
  %v113 = vunpack.c.l.b16 %v36
  %v114 = vunpack.c.h.b16 %v36
  %v115 = vpack.c.b16 %v69, %v67
  %v116 = vpack.c.b16 %v70, %v68
  %v117 = vpack.c.b16 %v73, %v71
  %v118 = vpack.c.b16 %v74, %v72
  %v119 = vpack.c.b16 %v77, %v75
  %v120 = vpack.c.b16 %v78, %v76
  %v121 = vpack.c.b16 %v81, %v79
  %v122 = vpack.c.b16 %v82, %v80
  %v123 = vpack.c.b16 %v85, %v83
  %v124 = vpack.c.b16 %v86, %v84
  %v125 = vpack.c.b16 %v89, %v87
  %v126 = vpack.c.b16 %v90, %v88
  %v127 = vpack.c.b16 %v93, %v91
  %v128 = vpack.c.b16 %v94, %v92
  %v129 = vpack.c.b16 %v97, %v95
  %v130 = vpack.c.b16 %v98, %v96
  %v131 = vpack.c.b16 %v101, %v99
  %v132 = vpack.c.b16 %v102, %v100
  %v133 = vpack.c.b16 %v105, %v103
  %v134 = vpack.c.b16 %v106, %v104
  %v135 = vpack.c.b16 %v109, %v107
  %v136 = vpack.c.b16 %v110, %v108
  %v137 = vpack.c.b16 %v113, %v111
  %v138 = vpack.c.b16 %v114, %v112
  %vm163 = vcmask 523264
  %v165 = vsel %vm163, %v41, 0
  %167 = vmatprep.subr.bf16.mxu0 %v116
  %168 = vmatpush1.bf16.msra.mxu0 %v115
  %169 = vmatprep.subr.bf16.mxu0 %v118
  %170 = vmatpush1.bf16.msra.mxu0 %v117
  %171 = vmatprep.subr.bf16.mxu0 %v120
  %172 = vmatpush1.bf16.msra.mxu0 %v119
  %173 = vmatprep.subr.bf16.mxu0 %v122
  %174 = vmatpush1.bf16.msra.mxu0 %v121
  %175 = vmatprep.subr.bf16.mxu0 %v124
  %176 = vmatpush1.bf16.msra.mxu0 %v123
  %177 = vmatprep.subr.bf16.mxu0 %v126
  %178 = vmatpush1.bf16.msra.mxu0 %v125
  %179 = vmatprep.subr.bf16.mxu0 %v128
  %180 = vmatpush1.bf16.msra.mxu0 %v127
  %181 = vmatprep.subr.bf16.mxu0 %v130
  %182 = vmatpush1.bf16.msra.mxu0 %v129
  %183 = vmatprep.subr.bf16.mxu0 %v132
  %184 = vmatpush1.bf16.msra.mxu0 %v131
  %185 = vmatprep.subr.bf16.mxu0 %v134
  %186 = vmatpush1.bf16.msra.mxu0 %v133
  %187 = vmatprep.subr.bf16.mxu0 %v136
  %188 = vmatpush1.bf16.msra.mxu0 %v135
  %189 = vmatprep.subr.bf16.mxu0 %v138
  %190 = vmatpush1.bf16.msra.mxu0 %v137
  %191 = vmatprep.subr.bf16.mxu0 0
  %192 = vmatpush1.bf16.msra.mxu0 0
  %193 = vmatprep.subr.bf16.mxu0 0
  %194 = vmatpush1.bf16.msra.mxu0 0
  %195 = vmatprep.subr.bf16.mxu0 0
  %196 = vmatpush1.bf16.msra.mxu0 0
  %197 = vmatprep.subr.bf16.mxu0 0
  %198 = vmatpush1.bf16.msra.mxu0 0
  %199 = vmatprep.mubr.bf16.mxu0 %v165
  %200 = vmatmul.mubr.bf16.gmra.mrb[0].mxu0 %v40
  %v201 = vpop.f32.mrb[0].mxu0
  %v202 = vadd.f32 0.0, %v201
  %v203 = vpop.f32.mrb[0].mxu0
  %v204 = vadd.f32 0.0, %v203
  %v205 = vpop.f32.mrb[0].mxu0
  %v206 = vpop.f32.mrb[0].mxu0
  %207 = vdwg.mxu0
  %208 = vst [vmem:[%s2] sm:$0xff] %v202
  %209 = vst [vmem:[%s2 + $0x8] sm:$0xff] %v204
  // Predicated region
  $region10: #{vision_transformer_forward.2} parent=0 // pred_check
    _
  $region11: #{vision_transformer_forward.2} parent=0 // pred_check_branch
    %211 = sbr.rel (0) target = $region13
  $region12: #{vision_transformer_forward.2} parent=0 // pred_region
    _
  $region13: #{vision_transformer_forward.2} parent=0 // pred_fallthru
    _
  // Predicated region
  $region14: #{vision_transformer_forward.2} parent=0 // pred_check
    _
  $region15: #{vision_transformer_forward.2} parent=0 // pred_check_branch
    %213 = sbr.rel (0) target = $region17
  $region16: #{vision_transformer_forward.2} parent=0 // pred_region
    _
  $region17: #{vision_transformer_forward.2} parent=0 // pred_fallthru
    _

// kernel: vision_transformer_forward.3
$region0: #{vision_transformer_forward.3}
  #allocation0 [shape = 'u32[]', space=smem, size = 0x4, offset = 0x4, fixed_abs, tag = 'smem constant byte address 0x4 - core index']
  #allocation1 [shape = 'u32[144,128]{1,0:T(1,128)}', space=vmem, size = 0x12000, scoped, tag = 'internal scratch']
  #allocation2 [shape = 'f32[16,256]{1,0:T(8,128)}', space=vmem, size = 0x4000, scoped, tag = 'scratch operand']
  #allocation3 [shape = 'bf16[16,256]{1,0:T(16,128)(2,1)}', space=vmem, size = 0x2000, scoped, tag = 'scratch operand']
  %s0 = inlined_call_operand.vmem [shape: f32[2,16,256], index: 0, kind: input, shape index: {}]
  %s1 = inlined_call_operand.vmem [shape: f32[1,256], index: 1, kind: input, shape index: {}]
  %s2 = inlined_call_operand.vmem [shape: f32[1,256], index: 2, kind: input, shape index: {}]
  %s3 = inlined_call_operand.vmem [shape: f32[2,1,256], index: 3, kind: input, shape index: {}]
  %s4 = inlined_call_operand.vmem [shape: f32[2,1,256], index: 4, kind: input, shape index: {}]
  %s5 = inlined_call_operand.hbm [shape: bf16[2,256,768], index: 5, kind: input, shape index: {}]
  %s6 = inlined_call_operand.vmem [shape: f32[2,1,768], index: 6, kind: input, shape index: {}]
  %s7 = inlined_call_operand.vmem [shape: bf16[2,256,256], index: 7, kind: input, shape index: {}]
  %s8 = inlined_call_operand.vmem [shape: f32[2,1,256], index: 8, kind: input, shape index: {}]
  %s9 = inlined_call_operand.vmem [shape: f32[2,1,256], index: 9, kind: input, shape index: {}]
  %s10 = inlined_call_operand.vmem [shape: f32[2,1,256], index: 10, kind: input, shape index: {}]
  %s11 = inlined_call_operand.hbm [shape: bf16[2,256,1024], index: 11, kind: input, shape index: {}]
  %s12 = inlined_call_operand.vmem [shape: f32[2,1,1024], index: 12, kind: input, shape index: {}]
  %s13 = inlined_call_operand.hbm [shape: bf16[2,1024,256], index: 13, kind: input, shape index: {}]
  %s14 = inlined_call_operand.vmem [shape: f32[2,1,256], index: 14, kind: input, shape index: {}]
  %s15 = inlined_call_operand.vmem [shape: f32[1,256], index: 15, kind: input, shape index: {}]
  %s16 = inlined_call_operand.vmem [shape: f32[1,256], index: 16, kind: input, shape index: {}]
  %s17 = inlined_call_operand.vmem [shape: bf16[256,128], index: 17, kind: input, shape index: {}]
  %s18 = inlined_call_operand.hbm [shape: f32[2,1,128], index: 18, kind: output, shape index: {}]
  %s19 = sld [smem:[#allocation0]]
  $region125: #{vision_transformer_forward.3} parent=0
    _
  %s21 = ssub.s32 1, %s19
  %s22 = scalar_select 0, %s21, %s19
  $region1: #{vision_transformer_forward.3} parent=0
    #allocation4 [shape = 'u8[786432]{0}', space=vmem, size = 0xc0000, scoped, tag = 'input window, operand 5']
    #allocation5 [shape = 's32[2]{0}', space=sflag, size = 0x8, scoped, tag = 'scoped memory for vision_transformer_forward.3']
    #allocation6 [shape = 's32[2]{0}', space=sflag, size = 0x8, scoped, tag = 'scoped memory for vision_transformer_forward.3']
    #allocation7 [shape = 'u8[1048576]{0}', space=vmem, size = 0x100000, scoped, tag = 'input window, operand 11']
    #allocation8 [shape = 's32[2]{0}', space=sflag, size = 0x8, scoped, tag = 'scoped memory for vision_transformer_forward.3']
    #allocation9 [shape = 'u8[1048576]{0}', space=vmem, size = 0x100000, scoped, tag = 'input window, operand 13']
    #allocation10 [shape = 'u8[1024]{0}', space=vmem, size = 0x400, scoped, tag = 'output window, operand 0']
    %23 = vsyncpa [#allocation5], 0
    %s24 = scalar_lea.sflag [#allocation5], 1
    %25 = vsyncpa %s24, 0
    %26 = vsyncpa [#allocation8], 0
    %s27 = scalar_lea.sflag [#allocation8], 1
    %28 = vsyncpa %s27, 0
    %29 = vsyncpa [#allocation6], 0
    %s30 = scalar_lea.sflag [#allocation6], 1
    %31 = vsyncpa %s30, 0
    loop: start=0, step=1, limit=6
    $region2: #{vision_transformer_forward.3} parent=1 // loop_pre_header
      _
    $region3: #{vision_transformer_forward.3} parent=1 // loop_header
      %s33 = sphi 0, %s37
      %p34 = scmp.ge.s32.totalorder %s33, 6
      %s40 = sphi 0, %s52
      %s41 = sphi 0, %s48
      %s42 = sphi 0, %s40
      %s43 = sphi 0, %s41
      %s44 = sphi 0, %s42
      %s45 = sphi 0, %s43
      %s55 = sphi 0, %s57
      %s58 = sphi 0, %s55
      %s59 = sphi 0, %s58
      %s75 = sphi 0, %s59
      %s79 = sphi 0, %s79
      %s81 = sphi 0, %s79
      %s82 = sphi 0, %s81
      %s96 = sphi 0, %s82
      %s100 = sphi 0, %s100
      %s102 = sphi 0, %s100
      %s103 = sphi 0, %s102
      %s117 = sphi 0, %s103
      %s123 = sphi 0, %s125
      %s126 = sphi 0, %s123
      %s127 = sphi 0, %s126
      %s143 = sphi 0, %s127
      %s149 = sphi 0, %s151
      %s152 = sphi 0, %s149
      %s153 = sphi 0, %s152
      %s169 = sphi 0, %s153
      %s175 = sphi 0, %s177
      %s178 = sphi 0, %s175
      %s179 = sphi 0, %s178
      %s195 = sphi 0, %s179
      %s201 = sphi 0, %s203
      %s204 = sphi 0, %s201
      %s205 = sphi 0, %s204
      %s221 = sphi 0, %s205
      %s227 = sphi 0, %s229
      %s230 = sphi 0, %s227
      %s231 = sphi 0, %s230
      %s247 = sphi 0, %s231
      %s253 = sphi 0, %s255
      %s256 = sphi 0, %s253
      %s257 = sphi 0, %s256
      %s273 = sphi 0, %s257
      %s279 = sphi 0, %s281
      %s282 = sphi 0, %s279
      %s283 = sphi 0, %s282
      %s299 = sphi 0, %s283
      %s305 = sphi 0, %s307
      %s308 = sphi 0, %s305
      %s309 = sphi 0, %s308
      %s325 = sphi 0, %s309
      %s331 = sphi 0, %s333
      %s334 = sphi 0, %s331
      %s335 = sphi 0, %s334
      %s351 = sphi 0, %s335
      %s357 = sphi 0, %s359
      %s360 = sphi 0, %s357
      %s361 = sphi 0, %s360
      %s377 = sphi 0, %s361
      %s383 = sphi 0, %s385
      %s386 = sphi 0, %s383
      %s387 = sphi 0, %s386
      %s403 = sphi 0, %s387
      %s409 = sphi 0, %s411
      %s412 = sphi 0, %s409
      %s413 = sphi 0, %s412
      %s429 = sphi 0, %s413
      %s433 = sphi 0, %s433
      %s435 = sphi 0, %s433
      %s436 = sphi 0, %s435
      %s450 = sphi 0, %s436
      %s454 = sphi 0, %s454
      %s456 = sphi 0, %s454
      %s457 = sphi 0, %s456
      %s471 = sphi 0, %s457
      %s475 = sphi 0, %s475
      %s477 = sphi 0, %s475
      %s478 = sphi 0, %s477
      %s492 = sphi 0, %s478
      %s498 = sphi 0, %s500
      %s501 = sphi 0, %s498
      %s502 = sphi 0, %s501
      %s518 = sphi 0, %s502
    $region4: #{vision_transformer_forward.3} parent=1 // loop_header_branch
      %36 = sbr.rel (%p34) target = $region8
    $region5: #{vision_transformer_forward.3} parent=1 // loop_body
      %s38 = ssub.s32 %s33, 1
      %s39 = ssub.s32 %s33, 2
      %s46 = sadd.s32 1, %s41
      %p47 = scmp.ge.s32.totalorder %s46, 2
      %s48 = scalar_select %p47, 0, %s46
      %s49 = sadd.s32 1, %s40
      %s50 = scalar_select %p47, %s49, %s40
      %p51 = scmp.ge.s32.totalorder %s50, 2
      %s52 = scalar_select %p51, 0, %s50
      %s53 = ssub.s32 %s40, %s52
      %p54 = scmp.eq.s32.totalorder %s53, 0
      %s56 = sadd.s32 %s55, 1
      %s57 = scalar_select %p54, %s55, %s56
      %p60 = pneg %p54
      %p61 = scmp.eq.s32.totalorder %s33, 3
      %p62 = por %p60, %p61
      %p63 = scmp.ne.s32.totalorder %s55, %s58
      %p64 = scmp.eq.s32.totalorder %s33, 0
      %p65 = por %p63, %p64
      %p66 = scmp.ne.s32.totalorder %s55, %s58
      %p67 = scmp.eq.s32.totalorder %s38, 3
      %p68 = por %p66, %p67
      %p69 = scmp.ne.s32.totalorder %s58, %s59
      %p70 = scmp.eq.s32.totalorder %s38, 0
      %p71 = por %p69, %p70
      %p72 = scmp.ne.s32.totalorder %s58, %s59
      %p73 = scmp.eq.s32.totalorder %s39, 3
      %p74 = por %p72, %p73
      %p76 = scmp.ne.s32.totalorder %s59, %s75
      %p77 = scmp.eq.s32.totalorder %s39, 0
      %p78 = por %p76, %p77
      %s80 = sadd.s32 %s79, 1
      %p83 = scmp.eq.s32.totalorder %s33, 3
      %p84 = scmp.ne.s32.totalorder %s79, %s81
      %p85 = scmp.eq.s32.totalorder %s33, 0
      %p86 = por %p84, %p85
      %p87 = scmp.ne.s32.totalorder %s79, %s81
      %p88 = scmp.eq.s32.totalorder %s38, 3
      %p89 = por %p87, %p88
      %p90 = scmp.ne.s32.totalorder %s81, %s82
      %p91 = scmp.eq.s32.totalorder %s38, 0
      %p92 = por %p90, %p91
      %p93 = scmp.ne.s32.totalorder %s81, %s82
      %p94 = scmp.eq.s32.totalorder %s39, 3
      %p95 = por %p93, %p94
      %p97 = scmp.ne.s32.totalorder %s82, %s96
      %p98 = scmp.eq.s32.totalorder %s39, 0
      %p99 = por %p97, %p98
      %s101 = sadd.s32 %s100, 1
      %p104 = scmp.eq.s32.totalorder %s33, 3
      %p105 = scmp.ne.s32.totalorder %s100, %s102
      %p106 = scmp.eq.s32.totalorder %s33, 0
      %p107 = por %p105, %p106
      %p108 = scmp.ne.s32.totalorder %s100, %s102
      %p109 = scmp.eq.s32.totalorder %s38, 3
      %p110 = por %p108, %p109
      %p111 = scmp.ne.s32.totalorder %s102, %s103
      %p112 = scmp.eq.s32.totalorder %s38, 0
      %p113 = por %p111, %p112
      %p114 = scmp.ne.s32.totalorder %s102, %s103
      %p115 = scmp.eq.s32.totalorder %s39, 3
      %p116 = por %p114, %p115
      %p118 = scmp.ne.s32.totalorder %s103, %s117
      %p119 = scmp.eq.s32.totalorder %s39, 0
      %p120 = por %p118, %p119
      %s121 = ssub.s32 %s41, %s48
      %p122 = scmp.eq.s32.totalorder %s121, 0
      %s124 = sadd.s32 %s123, 1
      %s125 = scalar_select %p122, %s123, %s124
      %p128 = pneg %p122
      %p129 = scmp.eq.s32.totalorder %s33, 3
      %p130 = por %p128, %p129
      %p131 = scmp.ne.s32.totalorder %s123, %s126
      %p132 = scmp.eq.s32.totalorder %s33, 0
      %p133 = por %p131, %p132
      %p134 = scmp.ne.s32.totalorder %s123, %s126
      %p135 = scmp.eq.s32.totalorder %s38, 3
      %p136 = por %p134, %p135
      %p137 = scmp.ne.s32.totalorder %s126, %s127
      %p138 = scmp.eq.s32.totalorder %s38, 0
      %p139 = por %p137, %p138
      %p140 = scmp.ne.s32.totalorder %s126, %s127
      %p141 = scmp.eq.s32.totalorder %s39, 3
      %p142 = por %p140, %p141
      %p144 = scmp.ne.s32.totalorder %s127, %s143
      %p145 = scmp.eq.s32.totalorder %s39, 0
      %p146 = por %p144, %p145
      %s147 = ssub.s32 %s41, %s48
      %p148 = scmp.eq.s32.totalorder %s147, 0
      %s150 = sadd.s32 %s149, 1
      %s151 = scalar_select %p148, %s149, %s150
      %p154 = pneg %p148
      %p155 = scmp.eq.s32.totalorder %s33, 3
      %p156 = por %p154, %p155
      %p157 = scmp.ne.s32.totalorder %s149, %s152
      %p158 = scmp.eq.s32.totalorder %s33, 0
      %p159 = por %p157, %p158
      %p160 = scmp.ne.s32.totalorder %s149, %s152
      %p161 = scmp.eq.s32.totalorder %s38, 3
      %p162 = por %p160, %p161
      %p163 = scmp.ne.s32.totalorder %s152, %s153
      %p164 = scmp.eq.s32.totalorder %s38, 0
      %p165 = por %p163, %p164
      %p166 = scmp.ne.s32.totalorder %s152, %s153
      %p167 = scmp.eq.s32.totalorder %s39, 3
      %p168 = por %p166, %p167
      %p170 = scmp.ne.s32.totalorder %s153, %s169
      %p171 = scmp.eq.s32.totalorder %s39, 0
      %p172 = por %p170, %p171
      %s173 = ssub.s32 %s41, %s48
      %p174 = scmp.eq.s32.totalorder %s173, 0
      %s176 = sadd.s32 %s175, 1
      %s177 = scalar_select %p174, %s175, %s176
      %p180 = pneg %p174
      %p181 = scmp.eq.s32.totalorder %s33, 3
      %p182 = por %p180, %p181
      %p183 = scmp.ne.s32.totalorder %s175, %s178
      %p184 = scmp.eq.s32.totalorder %s33, 0
      %p185 = por %p183, %p184
      %p186 = scmp.ne.s32.totalorder %s175, %s178
      %p187 = scmp.eq.s32.totalorder %s38, 3
      %p188 = por %p186, %p187
      %p189 = scmp.ne.s32.totalorder %s178, %s179
      %p190 = scmp.eq.s32.totalorder %s38, 0
      %p191 = por %p189, %p190
      %p192 = scmp.ne.s32.totalorder %s178, %s179
      %p193 = scmp.eq.s32.totalorder %s39, 3
      %p194 = por %p192, %p193
      %p196 = scmp.ne.s32.totalorder %s179, %s195
      %p197 = scmp.eq.s32.totalorder %s39, 0
      %p198 = por %p196, %p197
      %s199 = ssub.s32 %s41, %s48
      %p200 = scmp.eq.s32.totalorder %s199, 0
      %s202 = sadd.s32 %s201, 1
      %s203 = scalar_select %p200, %s201, %s202
      %p206 = pneg %p200
      %p207 = scmp.eq.s32.totalorder %s33, 3
      %p208 = por %p206, %p207
      %p209 = scmp.ne.s32.totalorder %s201, %s204
      %p210 = scmp.eq.s32.totalorder %s33, 0
      %p211 = por %p209, %p210
      %p212 = scmp.ne.s32.totalorder %s201, %s204
      %p213 = scmp.eq.s32.totalorder %s38, 3
      %p214 = por %p212, %p213
      %p215 = scmp.ne.s32.totalorder %s204, %s205
      %p216 = scmp.eq.s32.totalorder %s38, 0
      %p217 = por %p215, %p216
      %p218 = scmp.ne.s32.totalorder %s204, %s205
      %p219 = scmp.eq.s32.totalorder %s39, 3
      %p220 = por %p218, %p219
      %p222 = scmp.ne.s32.totalorder %s205, %s221
      %p223 = scmp.eq.s32.totalorder %s39, 0
      %p224 = por %p222, %p223
      %s225 = ssub.s32 %s41, %s48
      %p226 = scmp.eq.s32.totalorder %s225, 0
      %s228 = sadd.s32 %s227, 1
      %s229 = scalar_select %p226, %s227, %s228
      %p232 = pneg %p226
      %p233 = scmp.eq.s32.totalorder %s33, 3
      %p234 = por %p232, %p233
      %p235 = scmp.ne.s32.totalorder %s227, %s230
      %p236 = scmp.eq.s32.totalorder %s33, 0
      %p237 = por %p235, %p236
      %p238 = scmp.ne.s32.totalorder %s227, %s230
      %p239 = scmp.eq.s32.totalorder %s38, 3
      %p240 = por %p238, %p239
      %p241 = scmp.ne.s32.totalorder %s230, %s231
      %p242 = scmp.eq.s32.totalorder %s38, 0
      %p243 = por %p241, %p242
      %p244 = scmp.ne.s32.totalorder %s230, %s231
      %p245 = scmp.eq.s32.totalorder %s39, 3
      %p246 = por %p244, %p245
      %p248 = scmp.ne.s32.totalorder %s231, %s247
      %p249 = scmp.eq.s32.totalorder %s39, 0
      %p250 = por %p248, %p249
      %s251 = ssub.s32 %s41, %s48
      %p252 = scmp.eq.s32.totalorder %s251, 0
      %s254 = sadd.s32 %s253, 1
      %s255 = scalar_select %p252, %s253, %s254
      %p258 = pneg %p252
      %p259 = scmp.eq.s32.totalorder %s33, 3
      %p260 = por %p258, %p259
      %p261 = scmp.ne.s32.totalorder %s253, %s256
      %p262 = scmp.eq.s32.totalorder %s33, 0
      %p263 = por %p261, %p262
      %p264 = scmp.ne.s32.totalorder %s253, %s256
      %p265 = scmp.eq.s32.totalorder %s38, 3
      %p266 = por %p264, %p265
      %p267 = scmp.ne.s32.totalorder %s256, %s257
      %p268 = scmp.eq.s32.totalorder %s38, 0
      %p269 = por %p267, %p268
      %p270 = scmp.ne.s32.totalorder %s256, %s257
      %p271 = scmp.eq.s32.totalorder %s39, 3
      %p272 = por %p270, %p271
      %p274 = scmp.ne.s32.totalorder %s257, %s273
      %p275 = scmp.eq.s32.totalorder %s39, 0
      %p276 = por %p274, %p275
      %s277 = ssub.s32 %s41, %s48
      %p278 = scmp.eq.s32.totalorder %s277, 0
      %s280 = sadd.s32 %s279, 1
      %s281 = scalar_select %p278, %s279, %s280
      %p284 = pneg %p278
      %p285 = scmp.eq.s32.totalorder %s33, 3
      %p286 = por %p284, %p285
      %p287 = scmp.ne.s32.totalorder %s279, %s282
      %p288 = scmp.eq.s32.totalorder %s33, 0
      %p289 = por %p287, %p288
      %p290 = scmp.ne.s32.totalorder %s279, %s282
      %p291 = scmp.eq.s32.totalorder %s38, 3
      %p292 = por %p290, %p291
      %p293 = scmp.ne.s32.totalorder %s282, %s283
      %p294 = scmp.eq.s32.totalorder %s38, 0
      %p295 = por %p293, %p294
      %p296 = scmp.ne.s32.totalorder %s282, %s283
      %p297 = scmp.eq.s32.totalorder %s39, 3
      %p298 = por %p296, %p297
      %p300 = scmp.ne.s32.totalorder %s283, %s299
      %p301 = scmp.eq.s32.totalorder %s39, 0
      %p302 = por %p300, %p301
      %s303 = ssub.s32 %s41, %s48
      %p304 = scmp.eq.s32.totalorder %s303, 0
      %s306 = sadd.s32 %s305, 1
      %s307 = scalar_select %p304, %s305, %s306
      %p310 = pneg %p304
      %p311 = scmp.eq.s32.totalorder %s33, 3
      %p312 = por %p310, %p311
      %p313 = scmp.ne.s32.totalorder %s305, %s308
      %p314 = scmp.eq.s32.totalorder %s33, 0
      %p315 = por %p313, %p314
      %p316 = scmp.ne.s32.totalorder %s305, %s308
      %p317 = scmp.eq.s32.totalorder %s38, 3
      %p318 = por %p316, %p317
      %p319 = scmp.ne.s32.totalorder %s308, %s309
      %p320 = scmp.eq.s32.totalorder %s38, 0
      %p321 = por %p319, %p320
      %p322 = scmp.ne.s32.totalorder %s308, %s309
      %p323 = scmp.eq.s32.totalorder %s39, 3
      %p324 = por %p322, %p323
      %p326 = scmp.ne.s32.totalorder %s309, %s325
      %p327 = scmp.eq.s32.totalorder %s39, 0
      %p328 = por %p326, %p327
      %s329 = ssub.s32 %s41, %s48
      %p330 = scmp.eq.s32.totalorder %s329, 0
      %s332 = sadd.s32 %s331, 1
      %s333 = scalar_select %p330, %s331, %s332
      %p336 = pneg %p330
      %p337 = scmp.eq.s32.totalorder %s33, 3
      %p338 = por %p336, %p337
      %p339 = scmp.ne.s32.totalorder %s331, %s334
      %p340 = scmp.eq.s32.totalorder %s33, 0
      %p341 = por %p339, %p340
      %p342 = scmp.ne.s32.totalorder %s331, %s334
      %p343 = scmp.eq.s32.totalorder %s38, 3
      %p344 = por %p342, %p343
      %p345 = scmp.ne.s32.totalorder %s334, %s335
      %p346 = scmp.eq.s32.totalorder %s38, 0
      %p347 = por %p345, %p346
      %p348 = scmp.ne.s32.totalorder %s334, %s335
      %p349 = scmp.eq.s32.totalorder %s39, 3
      %p350 = por %p348, %p349
      %p352 = scmp.ne.s32.totalorder %s335, %s351
      %p353 = scmp.eq.s32.totalorder %s39, 0
      %p354 = por %p352, %p353
      %s355 = ssub.s32 %s41, %s48
      %p356 = scmp.eq.s32.totalorder %s355, 0
      %s358 = sadd.s32 %s357, 1
      %s359 = scalar_select %p356, %s357, %s358
      %p362 = pneg %p356
      %p363 = scmp.eq.s32.totalorder %s33, 3
      %p364 = por %p362, %p363
      %p365 = scmp.ne.s32.totalorder %s357, %s360
      %p366 = scmp.eq.s32.totalorder %s33, 0
      %p367 = por %p365, %p366
      %p368 = scmp.ne.s32.totalorder %s357, %s360
      %p369 = scmp.eq.s32.totalorder %s38, 3
      %p370 = por %p368, %p369
      %p371 = scmp.ne.s32.totalorder %s360, %s361
      %p372 = scmp.eq.s32.totalorder %s38, 0
      %p373 = por %p371, %p372
      %p374 = scmp.ne.s32.totalorder %s360, %s361
      %p375 = scmp.eq.s32.totalorder %s39, 3
      %p376 = por %p374, %p375
      %p378 = scmp.ne.s32.totalorder %s361, %s377
      %p379 = scmp.eq.s32.totalorder %s39, 0
      %p380 = por %p378, %p379
      %s381 = ssub.s32 %s41, %s48
      %p382 = scmp.eq.s32.totalorder %s381, 0
      %s384 = sadd.s32 %s383, 1
      %s385 = scalar_select %p382, %s383, %s384
      %p388 = pneg %p382
      %p389 = scmp.eq.s32.totalorder %s33, 3
      %p390 = por %p388, %p389
      %p391 = scmp.ne.s32.totalorder %s383, %s386
      %p392 = scmp.eq.s32.totalorder %s33, 0
      %p393 = por %p391, %p392
      %p394 = scmp.ne.s32.totalorder %s383, %s386
      %p395 = scmp.eq.s32.totalorder %s38, 3
      %p396 = por %p394, %p395
      %p397 = scmp.ne.s32.totalorder %s386, %s387
      %p398 = scmp.eq.s32.totalorder %s38, 0
      %p399 = por %p397, %p398
      %p400 = scmp.ne.s32.totalorder %s386, %s387
      %p401 = scmp.eq.s32.totalorder %s39, 3
      %p402 = por %p400, %p401
      %p404 = scmp.ne.s32.totalorder %s387, %s403
      %p405 = scmp.eq.s32.totalorder %s39, 0
      %p406 = por %p404, %p405
      %s407 = ssub.s32 %s41, %s48
      %p408 = scmp.eq.s32.totalorder %s407, 0
      %s410 = sadd.s32 %s409, 1
      %s411 = scalar_select %p408, %s409, %s410
      %p414 = pneg %p408
      %p415 = scmp.eq.s32.totalorder %s33, 3
      %p416 = por %p414, %p415
      %p417 = scmp.ne.s32.totalorder %s409, %s412
      %p418 = scmp.eq.s32.totalorder %s33, 0
      %p419 = por %p417, %p418
      %p420 = scmp.ne.s32.totalorder %s409, %s412
      %p421 = scmp.eq.s32.totalorder %s38, 3
      %p422 = por %p420, %p421
      %p423 = scmp.ne.s32.totalorder %s412, %s413
      %p424 = scmp.eq.s32.totalorder %s38, 0
      %p425 = por %p423, %p424
      %p426 = scmp.ne.s32.totalorder %s412, %s413
      %p427 = scmp.eq.s32.totalorder %s39, 3
      %p428 = por %p426, %p427
      %p430 = scmp.ne.s32.totalorder %s413, %s429
      %p431 = scmp.eq.s32.totalorder %s39, 0
      %p432 = por %p430, %p431
      %s434 = sadd.s32 %s433, 1
      %p437 = scmp.eq.s32.totalorder %s33, 3
      %p438 = scmp.ne.s32.totalorder %s433, %s435
      %p439 = scmp.eq.s32.totalorder %s33, 0
      %p440 = por %p438, %p439
      %p441 = scmp.ne.s32.totalorder %s433, %s435
      %p442 = scmp.eq.s32.totalorder %s38, 3
      %p443 = por %p441, %p442
      %p444 = scmp.ne.s32.totalorder %s435, %s436
      %p445 = scmp.eq.s32.totalorder %s38, 0
      %p446 = por %p444, %p445
      %p447 = scmp.ne.s32.totalorder %s435, %s436
      %p448 = scmp.eq.s32.totalorder %s39, 3
      %p449 = por %p447, %p448
      %p451 = scmp.ne.s32.totalorder %s436, %s450
      %p452 = scmp.eq.s32.totalorder %s39, 0
      %p453 = por %p451, %p452
      %s455 = sadd.s32 %s454, 1
      %p458 = scmp.eq.s32.totalorder %s33, 3
      %p459 = scmp.ne.s32.totalorder %s454, %s456
      %p460 = scmp.eq.s32.totalorder %s33, 0
      %p461 = por %p459, %p460
      %p462 = scmp.ne.s32.totalorder %s454, %s456
      %p463 = scmp.eq.s32.totalorder %s38, 3
      %p464 = por %p462, %p463
      %p465 = scmp.ne.s32.totalorder %s456, %s457
      %p466 = scmp.eq.s32.totalorder %s38, 0
      %p467 = por %p465, %p466
      %p468 = scmp.ne.s32.totalorder %s456, %s457
      %p469 = scmp.eq.s32.totalorder %s39, 3
      %p470 = por %p468, %p469
      %p472 = scmp.ne.s32.totalorder %s457, %s471
      %p473 = scmp.eq.s32.totalorder %s39, 0
      %p474 = por %p472, %p473
      %s476 = sadd.s32 %s475, 1
      %p479 = scmp.eq.s32.totalorder %s33, 3
      %p480 = scmp.ne.s32.totalorder %s475, %s477
      %p481 = scmp.eq.s32.totalorder %s33, 0
      %p482 = por %p480, %p481
      %p483 = scmp.ne.s32.totalorder %s475, %s477
      %p484 = scmp.eq.s32.totalorder %s38, 3
      %p485 = por %p483, %p484
      %p486 = scmp.ne.s32.totalorder %s477, %s478
      %p487 = scmp.eq.s32.totalorder %s38, 0
      %p488 = por %p486, %p487
      %p489 = scmp.ne.s32.totalorder %s477, %s478
      %p490 = scmp.eq.s32.totalorder %s39, 3
      %p491 = por %p489, %p490
      %p493 = scmp.ne.s32.totalorder %s478, %s492
      %p494 = scmp.eq.s32.totalorder %s39, 0
      %p495 = por %p493, %p494
      %s496 = ssub.s32 %s40, %s52
      %p497 = scmp.eq.s32.totalorder %s496, 0
      %s499 = sadd.s32 %s498, 1
      %s500 = scalar_select %p497, %s498, %s499
      %p503 = pneg %p497
      %p504 = scmp.eq.s32.totalorder %s33, 3
      %p505 = por %p503, %p504
      %p506 = scmp.ne.s32.totalorder %s498, %s501
      %p507 = scmp.eq.s32.totalorder %s33, 0
      %p508 = por %p506, %p507
      %p509 = scmp.ne.s32.totalorder %s498, %s501
      %p510 = scmp.eq.s32.totalorder %s38, 3
      %p511 = por %p509, %p510
      %p512 = scmp.ne.s32.totalorder %s501, %s502
      %p513 = scmp.eq.s32.totalorder %s38, 0
      %p514 = por %p512, %p513
      %p515 = scmp.ne.s32.totalorder %s501, %s502
      %p516 = scmp.eq.s32.totalorder %s39, 3
      %p517 = por %p515, %p516
      %p519 = scmp.ne.s32.totalorder %s502, %s518
      %p520 = scmp.eq.s32.totalorder %s39, 0
      %p521 = por %p519, %p520
      %p522 = scmp.le.s32.totalorder 1, %s33
      %p523 = scmp.lt.s32.totalorder %s33, 5
      %p524 = pnand %p522, %p523
      %p525 = pneg %p524
      // Predicated region
      $region9: #{vision_transformer_forward.3} parent=5 // pred_check
        _
      $region10: #{vision_transformer_forward.3} parent=5 // pred_check_branch
        %527 = sbr.rel (%p524) target = $region12
      $region11: #{vision_transformer_forward.3} parent=5 // pred_region
        %s528 = ssub.s32 %s33, 1
        // Predicated region
        $region13: #{vision_transformer_forward.3} parent=11 // pred_check
          %p529 = pneg %p92
        $region14: #{vision_transformer_forward.3} parent=11 // pred_check_branch
          %531 = sbr.rel (%p529) target = $region16
        $region15: #{vision_transformer_forward.3} parent=11 // pred_region
          _
        $region16: #{vision_transformer_forward.3} parent=11 // pred_fallthru
          _
        // Predicated region
        $region17: #{vision_transformer_forward.3} parent=11 // pred_check
          %p532 = pneg %p113
        $region18: #{vision_transformer_forward.3} parent=11 // pred_check_branch
          %534 = sbr.rel (%p532) target = $region20
        $region19: #{vision_transformer_forward.3} parent=11 // pred_region
          _
        $region20: #{vision_transformer_forward.3} parent=11 // pred_fallthru
          _
        // Predicated region
        $region21: #{vision_transformer_forward.3} parent=11 // pred_check
          %p535 = pneg %p446
        $region22: #{vision_transformer_forward.3} parent=11 // pred_check_branch
          %537 = sbr.rel (%p535) target = $region24
        $region23: #{vision_transformer_forward.3} parent=11 // pred_region
          _
        $region24: #{vision_transformer_forward.3} parent=11 // pred_fallthru
          _
        // Predicated region
        $region25: #{vision_transformer_forward.3} parent=11 // pred_check
          %p538 = pneg %p467
        $region26: #{vision_transformer_forward.3} parent=11 // pred_check_branch
          %540 = sbr.rel (%p538) target = $region28
        $region27: #{vision_transformer_forward.3} parent=11 // pred_region
          _
        $region28: #{vision_transformer_forward.3} parent=11 // pred_fallthru
          _
        // Predicated region
        $region29: #{vision_transformer_forward.3} parent=11 // pred_check
          %p541 = pneg %p488
        $region30: #{vision_transformer_forward.3} parent=11 // pred_check_branch
          %543 = sbr.rel (%p541) target = $region32
        $region31: #{vision_transformer_forward.3} parent=11 // pred_region
          _
        $region32: #{vision_transformer_forward.3} parent=11 // pred_fallthru
          _
      $region12: #{vision_transformer_forward.3} parent=5 // pred_fallthru
        _
      %p544 = scmp.lt.s32.totalorder %s33, 4
      // Predicated region
      $region33: #{vision_transformer_forward.3} parent=5 // pred_check
        %p545 = pneg %p544
      $region34: #{vision_transformer_forward.3} parent=5 // pred_check_branch
        %547 = sbr.rel (%p545) target = $region36
      $region35: #{vision_transformer_forward.3} parent=5 // pred_region
        // Predicated region
        $region37: #{vision_transformer_forward.3} parent=35 // pred_check
          %p548 = pneg %p65
        $region38: #{vision_transformer_forward.3} parent=35 // pred_check_branch
          %550 = sbr.rel (%p548) target = $region40
        $region39: #{vision_transformer_forward.3} parent=35 // pred_region
          %p551 = scmp.lt.s32.totalorder %s40, 1
          %s552 = scalar_select %p551, %s40, 1
          %s553 = smul.addr %s552, 4
          %s554 = smul.addr %s553, 8
          %s555 = scalar_lea.vmem %s0, %s554
        $region40: #{vision_transformer_forward.3} parent=35 // pred_fallthru
          _
        // Predicated region
        $region41: #{vision_transformer_forward.3} parent=35 // pred_check
          %p556 = pneg %p133
        $region42: #{vision_transformer_forward.3} parent=35 // pred_check_branch
          %558 = sbr.rel (%p556) target = $region44
        $region43: #{vision_transformer_forward.3} parent=35 // pred_region
          %p559 = scmp.lt.s32.totalorder %s41, 1
          %s560 = scalar_select %p559, %s41, 1
          %s561 = smul.addr %s560, 2
          %s562 = scalar_lea.vmem %s3, %s561
        $region44: #{vision_transformer_forward.3} parent=35 // pred_fallthru
          _
        // Predicated region
        $region45: #{vision_transformer_forward.3} parent=35 // pred_check
          %p563 = pneg %p159
        $region46: #{vision_transformer_forward.3} parent=35 // pred_check_branch
          %565 = sbr.rel (%p563) target = $region48
        $region47: #{vision_transformer_forward.3} parent=35 // pred_region
          %p566 = scmp.lt.s32.totalorder %s41, 1
          %s567 = scalar_select %p566, %s41, 1
          %s568 = smul.addr %s567, 2
          %s569 = scalar_lea.vmem %s4, %s568
        $region48: #{vision_transformer_forward.3} parent=35 // pred_fallthru
          _
        // Predicated region
        $region49: #{vision_transformer_forward.3} parent=35 // pred_check
          %p570 = pneg %p185
        $region50: #{vision_transformer_forward.3} parent=35 // pred_check_branch
          %572 = sbr.rel (%p570) target = $region52
        $region51: #{vision_transformer_forward.3} parent=35 // pred_region
          %s573 = sand.u32 %s175, 1
          %s574 = scalar_lea.sflag [#allocation5], %s573
          %s575 = sand.u32 %s175, 1
          %s576 = smul.addr %s575, 768
          %s577 = scalar_lea.vmem [#allocation4], %s576
          %s579 = ssub.s32 12288, 12288
          %580 = vsyncadd %s574, %s579
          %s581 = smul.addr %s41, 192
          %s582 = smul.addr %s581, 64
          %s583 = scalar_lea.hbm %s5, %s582
          %s584 = sshll.u32 %s577, 4
          %s585 = int_to_ptr.vmem [resolvable:$true] %s584
          %590 = dma.hbm_to_vmem [thread:$0]  %s583, 12288, %s585, %s574, 384, 384, 24
        $region52: #{vision_transformer_forward.3} parent=35 // pred_fallthru
          _
        // Predicated region
        $region53: #{vision_transformer_forward.3} parent=35 // pred_check
          %p591 = pneg %p211
        $region54: #{vision_transformer_forward.3} parent=35 // pred_check_branch
          %593 = sbr.rel (%p591) target = $region56
        $region55: #{vision_transformer_forward.3} parent=35 // pred_region
          %p594 = scmp.lt.s32.totalorder %s41, 1
          %s595 = scalar_select %p594, %s41, 1
          %s596 = smul.addr %s595, 6
          %s597 = scalar_lea.vmem %s6, %s596
        $region56: #{vision_transformer_forward.3} parent=35 // pred_fallthru
          _
        // Predicated region
        $region57: #{vision_transformer_forward.3} parent=35 // pred_check
          %p598 = pneg %p237
        $region58: #{vision_transformer_forward.3} parent=35 // pred_check_branch
          %600 = sbr.rel (%p598) target = $region60
        $region59: #{vision_transformer_forward.3} parent=35 // pred_region
          %p601 = scmp.lt.s32.totalorder %s41, 1
          %s602 = scalar_select %p601, %s41, 1
          %s603 = smul.addr %s602, 64
          %s604 = smul.addr %s603, 4
          %s605 = scalar_lea.vmem %s7, %s604
        $region60: #{vision_transformer_forward.3} parent=35 // pred_fallthru
          _
        // Predicated region
        $region61: #{vision_transformer_forward.3} parent=35 // pred_check
          %p606 = pneg %p263
        $region62: #{vision_transformer_forward.3} parent=35 // pred_check_branch
          %608 = sbr.rel (%p606) target = $region64
        $region63: #{vision_transformer_forward.3} parent=35 // pred_region
          %p609 = scmp.lt.s32.totalorder %s41, 1
          %s610 = scalar_select %p609, %s41, 1
          %s611 = smul.addr %s610, 2
          %s612 = scalar_lea.vmem %s8, %s611
        $region64: #{vision_transformer_forward.3} parent=35 // pred_fallthru
          _
        // Predicated region
        $region65: #{vision_transformer_forward.3} parent=35 // pred_check
          %p613 = pneg %p289
        $region66: #{vision_transformer_forward.3} parent=35 // pred_check_branch
          %615 = sbr.rel (%p613) target = $region68
        $region67: #{vision_transformer_forward.3} parent=35 // pred_region
          %p616 = scmp.lt.s32.totalorder %s41, 1
          %s617 = scalar_select %p616, %s41, 1
          %s618 = smul.addr %s617, 2
          %s619 = scalar_lea.vmem %s9, %s618
        $region68: #{vision_transformer_forward.3} parent=35 // pred_fallthru
          _
        // Predicated region
        $region69: #{vision_transformer_forward.3} parent=35 // pred_check
          %p620 = pneg %p315
        $region70: #{vision_transformer_forward.3} parent=35 // pred_check_branch
          %622 = sbr.rel (%p620) target = $region72
        $region71: #{vision_transformer_forward.3} parent=35 // pred_region
          %p623 = scmp.lt.s32.totalorder %s41, 1
          %s624 = scalar_select %p623, %s41, 1
          %s625 = smul.addr %s624, 2
          %s626 = scalar_lea.vmem %s10, %s625
        $region72: #{vision_transformer_forward.3} parent=35 // pred_fallthru
          _
        // Predicated region
        $region73: #{vision_transformer_forward.3} parent=35 // pred_check
          %p627 = pneg %p341
        $region74: #{vision_transformer_forward.3} parent=35 // pred_check_branch
          %629 = sbr.rel (%p627) target = $region76
        $region75: #{vision_transformer_forward.3} parent=35 // pred_region
          %s630 = sand.u32 %s33, 1
          %s631 = scalar_lea.sflag [#allocation8], %s630
          %s632 = sand.u32 %s331, 1
          %s633 = smul.addr %s632, 1024
          %s634 = scalar_lea.vmem [#allocation7], %s633
          %s636 = ssub.s32 16384, 16384
          %637 = vsyncadd %s631, %s636
          %s638 = smul.addr %s41, 256
          %s639 = smul.addr %s638, 64
          %s640 = scalar_lea.hbm %s11, %s639
          %s641 = sshll.u32 %s634, 4
          %s642 = int_to_ptr.vmem [resolvable:$true] %s641
          %647 = dma.hbm_to_vmem [thread:$0]  %s640, 16384, %s642, %s631, 512, 512, 32
        $region76: #{vision_transformer_forward.3} parent=35 // pred_fallthru
          _
        // Predicated region
        $region77: #{vision_transformer_forward.3} parent=35 // pred_check
          %p648 = pneg %p367
        $region78: #{vision_transformer_forward.3} parent=35 // pred_check_branch
          %650 = sbr.rel (%p648) target = $region80
        $region79: #{vision_transformer_forward.3} parent=35 // pred_region
          %p651 = scmp.lt.s32.totalorder %s41, 1
          %s652 = scalar_select %p651, %s41, 1
          %s653 = smul.addr %s652, 8
          %s654 = scalar_lea.vmem %s12, %s653
        $region80: #{vision_transformer_forward.3} parent=35 // pred_fallthru
          _
        // Predicated region
        $region81: #{vision_transformer_forward.3} parent=35 // pred_check
          %p655 = pneg %p393
        $region82: #{vision_transformer_forward.3} parent=35 // pred_check_branch
          %657 = sbr.rel (%p655) target = $region84
        $region83: #{vision_transformer_forward.3} parent=35 // pred_region
          %s658 = sand.u32 %s33, 1
          %s659 = scalar_lea.sflag [#allocation8], %s658
          %s660 = sand.u32 %s383, 1
          %s661 = smul.addr %s660, 1024
          %s662 = scalar_lea.vmem [#allocation9], %s661
          %s664 = ssub.s32 16384, 16384
          %665 = vsyncadd %s659, %s664
          %s666 = smul.addr %s41, 256
          %s667 = smul.addr %s666, 64
          %s668 = scalar_lea.hbm %s13, %s667
          %s669 = sshll.u32 %s662, 4
          %s670 = int_to_ptr.vmem [resolvable:$true] %s669
          %675 = dma.hbm_to_vmem [thread:$0]  %s668, 16384, %s670, %s659, 128, 128, 8
        $region84: #{vision_transformer_forward.3} parent=35 // pred_fallthru
          _
        // Predicated region
        $region85: #{vision_transformer_forward.3} parent=35 // pred_check
          %p676 = pneg %p419
        $region86: #{vision_transformer_forward.3} parent=35 // pred_check_branch
          %678 = sbr.rel (%p676) target = $region88
        $region87: #{vision_transformer_forward.3} parent=35 // pred_region
          %p679 = scmp.lt.s32.totalorder %s41, 1
          %s680 = scalar_select %p679, %s41, 1
          %s681 = smul.addr %s680, 2
          %s682 = scalar_lea.vmem %s14, %s681
        $region88: #{vision_transformer_forward.3} parent=35 // pred_fallthru
          _
      $region36: #{vision_transformer_forward.3} parent=5 // pred_fallthru
        _
      %p683 = scmp.le.s32.totalorder 1, %s33
      %p684 = scmp.lt.s32.totalorder %s33, 5
      %p685 = pnand %p683, %p684
      %p686 = pneg %p685
      // Predicated region
      $region89: #{vision_transformer_forward.3} parent=5 // pred_check
        _
      $region90: #{vision_transformer_forward.3} parent=5 // pred_check_branch
        %688 = sbr.rel (%p685) target = $region92
      $region91: #{vision_transformer_forward.3} parent=5 // pred_region
        %s689 = ssub.s32 %s33, 1
        %s690 = sand.u32 %s178, 1
        %s691 = scalar_lea.sflag [#allocation5], %s690
        %s692 = sand.u32 %s178, 1
        %s693 = smul.addr %s692, 768
        %s694 = scalar_lea.vmem [#allocation4], %s693
        // Predicated region
        $region93: #{vision_transformer_forward.3} parent=91 // pred_check
          %p695 = pneg %p191
        $region94: #{vision_transformer_forward.3} parent=91 // pred_check_branch
          %697 = sbr.rel (%p695) target = $region96
        $region95: #{vision_transformer_forward.3} parent=91 // pred_region
          %698 = dma.done %s691, 12288
        $region96: #{vision_transformer_forward.3} parent=91 // pred_fallthru
          _
        %s699 = sand.u32 %s38, 1
        %s700 = scalar_lea.sflag [#allocation8], %s699
        %s701 = sand.u32 %s334, 1
        %s702 = smul.addr %s701, 1024
        %s703 = scalar_lea.vmem [#allocation7], %s702
        // Predicated region
        $region97: #{vision_transformer_forward.3} parent=91 // pred_check
          %p704 = pneg %p347
        $region98: #{vision_transformer_forward.3} parent=91 // pred_check_branch
          %706 = sbr.rel (%p704) target = $region100
        $region99: #{vision_transformer_forward.3} parent=91 // pred_region
          %707 = dma.done %s700, 16384
        $region100: #{vision_transformer_forward.3} parent=91 // pred_fallthru
          _
        %s708 = sand.u32 %s38, 1
        %s709 = scalar_lea.sflag [#allocation8], %s708
        %s710 = sand.u32 %s386, 1
        %s711 = smul.addr %s710, 1024
        %s712 = scalar_lea.vmem [#allocation9], %s711
        // Predicated region
        $region101: #{vision_transformer_forward.3} parent=91 // pred_check
          %p713 = pneg %p399
        $region102: #{vision_transformer_forward.3} parent=91 // pred_check_branch
          %715 = sbr.rel (%p713) target = $region104
        $region103: #{vision_transformer_forward.3} parent=91 // pred_region
          %716 = dma.done %s709, 16384
        $region104: #{vision_transformer_forward.3} parent=91 // pred_fallthru
          _
        %p717 = scmp.lt.s32.totalorder %s42, 1
        %s718 = scalar_select %p717, %s42, 1
        %s719 = smul.addr %s718, 4
        %s720 = smul.addr %s719, 8
        %s721 = scalar_lea.vmem %s0, %s720
        %p722 = pneg %p71
        %p723 = pneg %p68
        %p724 = pneg %p92
        %p725 = pneg %p89
        %p726 = pneg %p113
        %p727 = pneg %p110
        %p728 = scmp.lt.s32.totalorder %s43, 1
        %s729 = scalar_select %p728, %s43, 1
        %s730 = smul.addr %s729, 2
        %s731 = scalar_lea.vmem %s3, %s730
        %p732 = pneg %p139
        %p733 = pneg %p136
        %p734 = scmp.lt.s32.totalorder %s43, 1
        %s735 = scalar_select %p734, %s43, 1
        %s736 = smul.addr %s735, 2
        %s737 = scalar_lea.vmem %s4, %s736
        %p738 = pneg %p165
        %p739 = pneg %p162
        %s740 = sand.u32 %s178, 1
        %s741 = scalar_lea.sflag [#allocation5], %s740
        %s742 = sand.u32 %s178, 1
        %s743 = smul.addr %s742, 768
        %s744 = scalar_lea.vmem [#allocation4], %s743
        %p745 = pneg %p191
        %p746 = pneg %p188
        %p747 = scmp.lt.s32.totalorder %s43, 1
        %s748 = scalar_select %p747, %s43, 1
        %s749 = smul.addr %s748, 6
        %s750 = scalar_lea.vmem %s6, %s749
        %p751 = pneg %p217
        %p752 = pneg %p214
        %p753 = scmp.lt.s32.totalorder %s43, 1
        %s754 = scalar_select %p753, %s43, 1
        %s755 = smul.addr %s754, 64
        %s756 = smul.addr %s755, 4
        %s757 = scalar_lea.vmem %s7, %s756
        %p758 = pneg %p243
        %p759 = pneg %p240
        %p760 = scmp.lt.s32.totalorder %s43, 1
        %s761 = scalar_select %p760, %s43, 1
        %s762 = smul.addr %s761, 2
        %s763 = scalar_lea.vmem %s8, %s762
        %p764 = pneg %p269
        %p765 = pneg %p266
        %p766 = scmp.lt.s32.totalorder %s43, 1
        %s767 = scalar_select %p766, %s43, 1
        %s768 = smul.addr %s767, 2
        %s769 = scalar_lea.vmem %s9, %s768
        %p770 = pneg %p295
        %p771 = pneg %p292
        %p772 = scmp.lt.s32.totalorder %s43, 1
        %s773 = scalar_select %p772, %s43, 1
        %s774 = smul.addr %s773, 2
        %s775 = scalar_lea.vmem %s10, %s774
        %p776 = pneg %p321
        %p777 = pneg %p318
        %s778 = sand.u32 %s38, 1
        %s779 = scalar_lea.sflag [#allocation8], %s778
        %s780 = sand.u32 %s334, 1
        %s781 = smul.addr %s780, 1024
        %s782 = scalar_lea.vmem [#allocation7], %s781
        %p783 = pneg %p347
        %p784 = pneg %p344
        %p785 = scmp.lt.s32.totalorder %s43, 1
        %s786 = scalar_select %p785, %s43, 1
        %s787 = smul.addr %s786, 8
        %s788 = scalar_lea.vmem %s12, %s787
        %p789 = pneg %p373
        %p790 = pneg %p370
        %s791 = sand.u32 %s38, 1
        %s792 = scalar_lea.sflag [#allocation8], %s791
        %s793 = sand.u32 %s386, 1
        %s794 = smul.addr %s793, 1024
        %s795 = scalar_lea.vmem [#allocation9], %s794
        %p796 = pneg %p399
        %p797 = pneg %p396
        %p798 = scmp.lt.s32.totalorder %s43, 1
        %s799 = scalar_select %p798, %s43, 1
        %s800 = smul.addr %s799, 2
        %s801 = scalar_lea.vmem %s14, %s800
        %p802 = pneg %p425
        %p803 = pneg %p422
        %p804 = pneg %p446
        %p805 = pneg %p443
        %p806 = pneg %p467
        %p807 = pneg %p464
        %p808 = pneg %p488
        %p809 = pneg %p485
        %p810 = pneg %p514
        %p811 = pneg %p511
        %s812 = sand.u32 %s501, 1
        %s813 = scalar_lea.sflag [#allocation6], %s812
        %s814 = sand.u32 %s501, 1
        %s815 = scalar_lea.vmem [#allocation10], %s814
        %p816 = scmp.lt.s32.totalorder %s42, 1
        %s817 = scalar_select %p816, %s42, 1
        %s818 = smul.addr %s817, 4
        %s819 = smul.addr %s818, 8
        %s820 = scalar_lea.vmem %s0, %s819
        %p821 = scmp.lt.s32.totalorder %s43, 1
        %s822 = scalar_select %p821, %s43, 1
        %s823 = smul.addr %s822, 2
        %s824 = scalar_lea.vmem %s3, %s823
        %p825 = scmp.lt.s32.totalorder %s43, 1
        %s826 = scalar_select %p825, %s43, 1
        %s827 = smul.addr %s826, 2
        %s828 = scalar_lea.vmem %s4, %s827
        %p829 = scmp.lt.s32.totalorder %s43, 1
        %s830 = scalar_select %p829, %s43, 1
        %s831 = smul.addr %s830, 6
        %s832 = scalar_lea.vmem %s6, %s831
        %p833 = scmp.lt.s32.totalorder %s43, 1
        %s834 = scalar_select %p833, %s43, 1
        %s835 = smul.addr %s834, 64
        %s836 = smul.addr %s835, 4
        %s837 = scalar_lea.vmem %s7, %s836
        %p838 = scmp.lt.s32.totalorder %s43, 1
        %s839 = scalar_select %p838, %s43, 1
        %s840 = smul.addr %s839, 2
        %s841 = scalar_lea.vmem %s8, %s840
        %p842 = scmp.lt.s32.totalorder %s43, 1
        %s843 = scalar_select %p842, %s43, 1
        %s844 = smul.addr %s843, 2
        %s845 = scalar_lea.vmem %s9, %s844
        %p846 = scmp.lt.s32.totalorder %s43, 1
        %s847 = scalar_select %p846, %s43, 1
        %s848 = smul.addr %s847, 2
        %s849 = scalar_lea.vmem %s10, %s848
        %p850 = scmp.lt.s32.totalorder %s43, 1
        %s851 = scalar_select %p850, %s43, 1
        %s852 = smul.addr %s851, 8
        %s853 = scalar_lea.vmem %s12, %s852
        %p854 = scmp.lt.s32.totalorder %s43, 1
        %s855 = scalar_select %p854, %s43, 1
        %s856 = smul.addr %s855, 2
        %s857 = scalar_lea.vmem %s14, %s856
        %p859 = scmp.eq.s32.totalorder %s43, 0
        // Predicated region
        $region105: #{vision_transformer_forward.3} parent=91 // pred_check
          %p860 = pneg %p859
        $region106: #{vision_transformer_forward.3} parent=91 // pred_check_branch
          %862 = sbr.rel (%p860) target = $region108
        $region107: #{vision_transformer_forward.3} parent=91 // pred_region
          %v863 = vld [vmem:[%s820] sm:$0xff]
          %v864 = vld [vmem:[%s820 + $0x8] sm:$0xff]
          %v865 = vld [vmem:[%s820 + $0x10] sm:$0xff]
          %v866 = vld [vmem:[%s820 + $0x18] sm:$0xff]
          %v867 = vld [vmem:[%s1] sm:$0x3]
          %v868 = vld [vmem:[%s2] sm:$0x3]
          %v869 = vadd.f32 %v863, %v864
          %870 = vadd.xlane.f32.xlu0 %v869
          %v871 = vpop.xlane.xlu0 %870
          %v872 = vadd.f32 %v865, %v866
          %873 = vadd.xlane.f32.xlu0 %v872
          %v874 = vpop.xlane.xlu0 %873
          %v875 = vrcp.pop 256.0
          %v876 = vmul.f32 %v871, %v875
          %v877 = vmul.f32 %v874, %v875
          %v878 = vsub.f32 %v863, %v876
          %v879 = vsub.f32 %v864, %v876
          %v880 = vsub.f32 %v865, %v877
          %v881 = vsub.f32 %v866, %v877
          %v882 = vmul.f32 %v878, %v878
          %v883 = vmul.f32 %v879, %v879
          %v884 = vmul.f32 %v880, %v880
          %v885 = vmul.f32 %v881, %v881
          %v886 = vadd.f32 %v882, %v883
          %887 = vadd.xlane.f32.xlu0 %v886
          %v888 = vpop.xlane.xlu0 %887
          %v889 = vadd.f32 %v884, %v885
          %890 = vadd.xlane.f32.xlu0 %v889
          %v891 = vpop.xlane.xlu0 %890
          %v892 = vmul.f32 %v888, %v875
          %v893 = vmul.f32 %v891, %v875
          %v894 = vadd.f32 %v892, 1e-05
          %v895 = vadd.f32 %v893, 1e-05
          %v896 = vrsqrt.pop %v894
          %v897 = vrsqrt.pop %v895
          %v898 = vmul.f32 %v878, %v896
          %v899 = vmul.f32 %v879, %v896
          %v900 = vmul.f32 %v880, %v897
          %v901 = vmul.f32 %v881, %v897
          %v903 = vlaneseq
          %v904 = vshrl.u32 %v903, 7
          %v905 = vsub.s32 0, %v904
          %v906 = vrot.slane %v867, %v905
          %v907 = vlaneseq
          %v908 = vshrl.u32 %v907, 7
          %v909 = vsub.s32 1, %v908
          %v910 = vrot.slane %v867, %v909
          %v913 = vmul.f32 %v898, %v906
          %v914 = vmul.f32 %v899, %v910
          %v915 = vmul.f32 %v900, %v906
          %v916 = vmul.f32 %v901, %v910
          %v918 = vlaneseq
          %v919 = vshrl.u32 %v918, 7
          %v920 = vsub.s32 0, %v919
          %v921 = vrot.slane %v868, %v920
          %v922 = vlaneseq
          %v923 = vshrl.u32 %v922, 7
          %v924 = vsub.s32 1, %v923
          %v925 = vrot.slane %v868, %v924
          %v928 = vadd.f32 %v913, %v921
          %v929 = vadd.f32 %v914, %v925
          %v930 = vadd.f32 %v915, %v921
          %v931 = vadd.f32 %v916, %v925
          %932 = vst [vmem:[#allocation2] sm:$0xff] %v928
          %933 = vst [vmem:[#allocation2 + $0x8] sm:$0xff] %v929
          %934 = vst [vmem:[#allocation2 + $0x10] sm:$0xff] %v930
          %935 = vst [vmem:[#allocation2 + $0x18] sm:$0xff] %v931
        $region108: #{vision_transformer_forward.3} parent=91 // pred_fallthru
          _
        %v936 = vld [vmem:[#allocation2] sm:$0xff]
        %v937 = vld [vmem:[#allocation2 + $0x8] sm:$0xff]
        %v938 = vld [vmem:[#allocation2 + $0x10] sm:$0xff]
        %v939 = vld [vmem:[#allocation2 + $0x18] sm:$0xff]
        %v940 = vld [vmem:[%s824] sm:$0x3]
        %v941 = vld [vmem:[%s828] sm:$0x3]
        %v942 = vadd.f32 %v936, %v937
        %943 = vadd.xlane.f32.xlu0 %v942
        %v944 = vpop.xlane.xlu0 %943
        %v945 = vadd.f32 %v938, %v939
        %946 = vadd.xlane.f32.xlu0 %v945
        %v947 = vpop.xlane.xlu0 %946
        %v948 = vrcp.pop 256.0
        %v949 = vmul.f32 %v944, %v948
        %v950 = vmul.f32 %v947, %v948
        %v951 = vsub.f32 %v936, %v949
        %v952 = vsub.f32 %v937, %v949
        %v953 = vsub.f32 %v938, %v950
        %v954 = vsub.f32 %v939, %v950
        %v955 = vmul.f32 %v951, %v951
        %v956 = vmul.f32 %v952, %v952
        %v957 = vmul.f32 %v953, %v953
        %v958 = vmul.f32 %v954, %v954
        %v959 = vadd.f32 %v955, %v956
        %960 = vadd.xlane.f32.xlu0 %v959
        %v961 = vpop.xlane.xlu0 %960
        %v962 = vadd.f32 %v957, %v958
        %963 = vadd.xlane.f32.xlu0 %v962
        %v964 = vpop.xlane.xlu0 %963
        %v965 = vmul.f32 %v961, %v948
        %v966 = vmul.f32 %v964, %v948
        %v967 = vadd.f32 %v965, 1e-05
        %v968 = vadd.f32 %v966, 1e-05
        %v969 = vrsqrt.pop %v967
        %v970 = vrsqrt.pop %v968
        %v971 = vmul.f32 %v951, %v969
        %v972 = vmul.f32 %v952, %v969
        %v973 = vmul.f32 %v953, %v970
        %v974 = vmul.f32 %v954, %v970
        %v976 = vlaneseq
        %v977 = vshrl.u32 %v976, 7
        %v978 = vsub.s32 0, %v977
        %v979 = vrot.slane %v940, %v978
        %v980 = vlaneseq
        %v981 = vshrl.u32 %v980, 7
        %v982 = vsub.s32 1, %v981
        %v983 = vrot.slane %v940, %v982
        %v986 = vmul.f32 %v971, %v979
        %v987 = vmul.f32 %v972, %v983
        %v988 = vmul.f32 %v973, %v979
        %v989 = vmul.f32 %v974, %v983
        %v991 = vlaneseq
        %v992 = vshrl.u32 %v991, 7
        %v993 = vsub.s32 0, %v992
        %v994 = vrot.slane %v941, %v993
        %v995 = vlaneseq
        %v996 = vshrl.u32 %v995, 7
        %v997 = vsub.s32 1, %v996
        %v998 = vrot.slane %v941, %v997
        %v1001 = vadd.f32 %v986, %v994
        %v1002 = vadd.f32 %v987, %v998
        %v1003 = vadd.f32 %v988, %v994
        %v1004 = vadd.f32 %v989, %v998
        %v1005 = vpack.c.bf16 %v1003, %v1001
        %v1006 = vpack.c.bf16 %v1004, %v1002
        %v1007 = vld [vmem:[%s694] sm:$0xff]
        %v1008 = vld [vmem:[%s694 + $0x8] sm:$0xff]
        %v1009 = vld [vmem:[%s694 + $0x10] sm:$0xff]
        %v1010 = vld [vmem:[%s694 + $0x18] sm:$0xff]
        %v1011 = vld [vmem:[%s694 + $0x20] sm:$0xff]
        %v1012 = vld [vmem:[%s694 + $0x28] sm:$0xff]
        %v1013 = vld [vmem:[%s694 + $0x30] sm:$0xff]
        %v1014 = vld [vmem:[%s694 + $0x38] sm:$0xff]
        %v1015 = vld [vmem:[%s694 + $0x40] sm:$0xff]
        %v1016 = vld [vmem:[%s694 + $0x48] sm:$0xff]
        %v1017 = vld [vmem:[%s694 + $0x50] sm:$0xff]
        %v1018 = vld [vmem:[%s694 + $0x58] sm:$0xff]
        %v1019 = vld [vmem:[%s694 + $0x60] sm:$0xff]
        %v1020 = vld [vmem:[%s694 + $0x68] sm:$0xff]
        %v1021 = vld [vmem:[%s694 + $0x70] sm:$0xff]
        %v1022 = vld [vmem:[%s694 + $0x78] sm:$0xff]
        %v1023 = vld [vmem:[%s694 + $0x80] sm:$0xff]
        %v1024 = vld [vmem:[%s694 + $0x88] sm:$0xff]
        %v1025 = vld [vmem:[%s694 + $0x90] sm:$0xff]
        %v1026 = vld [vmem:[%s694 + $0x98] sm:$0xff]
        %v1027 = vld [vmem:[%s694 + $0xa0] sm:$0xff]
        %v1028 = vld [vmem:[%s694 + $0xa8] sm:$0xff]
        %v1029 = vld [vmem:[%s694 + $0xb0] sm:$0xff]
        %v1030 = vld [vmem:[%s694 + $0xb8] sm:$0xff]
        %v1031 = vld [vmem:[%s694 + $0xc0] sm:$0xff]
        %v1032 = vld [vmem:[%s694 + $0xc8] sm:$0xff]
        %v1033 = vld [vmem:[%s694 + $0xd0] sm:$0xff]
        %v1034 = vld [vmem:[%s694 + $0xd8] sm:$0xff]
        %v1035 = vld [vmem:[%s694 + $0xe0] sm:$0xff]
        %v1036 = vld [vmem:[%s694 + $0xe8] sm:$0xff]
        %v1037 = vld [vmem:[%s694 + $0xf0] sm:$0xff]
        %v1038 = vld [vmem:[%s694 + $0xf8] sm:$0xff]
        %v1039 = vld [vmem:[%s694 + $0x100] sm:$0xff]
        %v1040 = vld [vmem:[%s694 + $0x108] sm:$0xff]
        %v1041 = vld [vmem:[%s694 + $0x110] sm:$0xff]
        %v1042 = vld [vmem:[%s694 + $0x118] sm:$0xff]
        %v1043 = vld [vmem:[%s694 + $0x120] sm:$0xff]
        %v1044 = vld [vmem:[%s694 + $0x128] sm:$0xff]
        %v1045 = vld [vmem:[%s694 + $0x130] sm:$0xff]
        %v1046 = vld [vmem:[%s694 + $0x138] sm:$0xff]
        %v1047 = vld [vmem:[%s694 + $0x140] sm:$0xff]
        %v1048 = vld [vmem:[%s694 + $0x148] sm:$0xff]
        %v1049 = vld [vmem:[%s694 + $0x150] sm:$0xff]
        %v1050 = vld [vmem:[%s694 + $0x158] sm:$0xff]
        %v1051 = vld [vmem:[%s694 + $0x160] sm:$0xff]
        %v1052 = vld [vmem:[%s694 + $0x168] sm:$0xff]
        %v1053 = vld [vmem:[%s694 + $0x170] sm:$0xff]
        %v1054 = vld [vmem:[%s694 + $0x178] sm:$0xff]
        %v1055 = vld [vmem:[%s694 + $0x180] sm:$0xff]
        %v1056 = vld [vmem:[%s694 + $0x188] sm:$0xff]
        %v1057 = vld [vmem:[%s694 + $0x190] sm:$0xff]
        %v1058 = vld [vmem:[%s694 + $0x198] sm:$0xff]
        %v1059 = vld [vmem:[%s694 + $0x1a0] sm:$0xff]
        %v1060 = vld [vmem:[%s694 + $0x1a8] sm:$0xff]
        %v1061 = vld [vmem:[%s694 + $0x1b0] sm:$0xff]
        %v1062 = vld [vmem:[%s694 + $0x1b8] sm:$0xff]
        %v1063 = vld [vmem:[%s694 + $0x1c0] sm:$0xff]
        %v1064 = vld [vmem:[%s694 + $0x1c8] sm:$0xff]
        %v1065 = vld [vmem:[%s694 + $0x1d0] sm:$0xff]
        %v1066 = vld [vmem:[%s694 + $0x1d8] sm:$0xff]
        %v1067 = vld [vmem:[%s694 + $0x1e0] sm:$0xff]
        %v1068 = vld [vmem:[%s694 + $0x1e8] sm:$0xff]
        %v1069 = vld [vmem:[%s694 + $0x1f0] sm:$0xff]
        %v1070 = vld [vmem:[%s694 + $0x1f8] sm:$0xff]
        %v1071 = vld [vmem:[%s694 + $0x200] sm:$0xff]
        %v1072 = vld [vmem:[%s694 + $0x208] sm:$0xff]
        %v1073 = vld [vmem:[%s694 + $0x210] sm:$0xff]
        %v1074 = vld [vmem:[%s694 + $0x218] sm:$0xff]
        %v1075 = vld [vmem:[%s694 + $0x220] sm:$0xff]
        %v1076 = vld [vmem:[%s694 + $0x228] sm:$0xff]
        %v1077 = vld [vmem:[%s694 + $0x230] sm:$0xff]
        %v1078 = vld [vmem:[%s694 + $0x238] sm:$0xff]
        %v1079 = vld [vmem:[%s694 + $0x240] sm:$0xff]
        %v1080 = vld [vmem:[%s694 + $0x248] sm:$0xff]
        %v1081 = vld [vmem:[%s694 + $0x250] sm:$0xff]
        %v1082 = vld [vmem:[%s694 + $0x258] sm:$0xff]
        %v1083 = vld [vmem:[%s694 + $0x260] sm:$0xff]
        %v1084 = vld [vmem:[%s694 + $0x268] sm:$0xff]
        %v1085 = vld [vmem:[%s694 + $0x270] sm:$0xff]
        %v1086 = vld [vmem:[%s694 + $0x278] sm:$0xff]
        %v1087 = vld [vmem:[%s694 + $0x280] sm:$0xff]
        %v1088 = vld [vmem:[%s694 + $0x288] sm:$0xff]
        %v1089 = vld [vmem:[%s694 + $0x290] sm:$0xff]
        %v1090 = vld [vmem:[%s694 + $0x298] sm:$0xff]
        %v1091 = vld [vmem:[%s694 + $0x2a0] sm:$0xff]
        %v1092 = vld [vmem:[%s694 + $0x2a8] sm:$0xff]
        %v1093 = vld [vmem:[%s694 + $0x2b0] sm:$0xff]
        %v1094 = vld [vmem:[%s694 + $0x2b8] sm:$0xff]
        %v1095 = vld [vmem:[%s694 + $0x2c0] sm:$0xff]
        %v1096 = vld [vmem:[%s694 + $0x2c8] sm:$0xff]
        %v1097 = vld [vmem:[%s694 + $0x2d0] sm:$0xff]
        %v1098 = vld [vmem:[%s694 + $0x2d8] sm:$0xff]
        %v1099 = vld [vmem:[%s694 + $0x2e0] sm:$0xff]
        %v1100 = vld [vmem:[%s694 + $0x2e8] sm:$0xff]
        %v1101 = vld [vmem:[%s694 + $0x2f0] sm:$0xff]
        %v1102 = vld [vmem:[%s694 + $0x2f8] sm:$0xff]
        %v1103 = vld [vmem:[%s832] sm:$0x3f]
        %v1105 = vlaneseq
        %v1106 = vshrl.u32 %v1105, 7
        %v1107 = vsub.s32 0, %v1106
        %v1108 = vrot.slane %v1103, %v1107
        %v1109 = vlaneseq
        %v1110 = vshrl.u32 %v1109, 7
        %v1111 = vsub.s32 1, %v1110
        %v1112 = vrot.slane %v1103, %v1111
        %v1113 = vlaneseq
        %v1114 = vshrl.u32 %v1113, 7
        %v1115 = vsub.s32 2, %v1114
        %v1116 = vrot.slane %v1103, %v1115
        %v1117 = vlaneseq
        %v1118 = vshrl.u32 %v1117, 7
        %v1119 = vsub.s32 3, %v1118
        %v1120 = vrot.slane %v1103, %v1119
        %v1121 = vlaneseq
        %v1122 = vshrl.u32 %v1121, 7
        %v1123 = vsub.s32 4, %v1122
        %v1124 = vrot.slane %v1103, %v1123
        %v1125 = vlaneseq
        %v1126 = vshrl.u32 %v1125, 7
        %v1127 = vsub.s32 5, %v1126
        %v1128 = vrot.slane %v1103, %v1127
        %v1231 = vunpack.c.l.b16 %v1007
        %v1232 = vunpack.c.h.b16 %v1007
        %v1233 = vunpack.c.l.b16 %v1008
        %v1234 = vunpack.c.h.b16 %v1008
        %v1235 = vunpack.c.l.b16 %v1009
        %v1236 = vunpack.c.h.b16 %v1009
        %v1237 = vunpack.c.l.b16 %v1010
        %v1238 = vunpack.c.h.b16 %v1010
        %v1239 = vunpack.c.l.b16 %v1011
        %v1240 = vunpack.c.h.b16 %v1011
        %v1241 = vunpack.c.l.b16 %v1012
        %v1242 = vunpack.c.h.b16 %v1012
        %v1243 = vunpack.c.l.b16 %v1013
        %v1244 = vunpack.c.h.b16 %v1013
        %v1245 = vunpack.c.l.b16 %v1014
        %v1246 = vunpack.c.h.b16 %v1014
        %v1247 = vunpack.c.l.b16 %v1015
        %v1248 = vunpack.c.h.b16 %v1015
        %v1249 = vunpack.c.l.b16 %v1016
        %v1250 = vunpack.c.h.b16 %v1016
        %v1251 = vunpack.c.l.b16 %v1017
        %v1252 = vunpack.c.h.b16 %v1017
        %v1253 = vunpack.c.l.b16 %v1018
        %v1254 = vunpack.c.h.b16 %v1018
        %v1255 = vunpack.c.l.b16 %v1019
        %v1256 = vunpack.c.h.b16 %v1019
        %v1257 = vunpack.c.l.b16 %v1020
        %v1258 = vunpack.c.h.b16 %v1020
        %v1259 = vunpack.c.l.b16 %v1021
        %v1260 = vunpack.c.h.b16 %v1021
        %v1261 = vunpack.c.l.b16 %v1022
        %v1262 = vunpack.c.h.b16 %v1022
        %v1263 = vunpack.c.l.b16 %v1023
        %v1264 = vunpack.c.h.b16 %v1023
        %v1265 = vunpack.c.l.b16 %v1024
        %v1266 = vunpack.c.h.b16 %v1024
        %v1267 = vunpack.c.l.b16 %v1025
        %v1268 = vunpack.c.h.b16 %v1025
        %v1269 = vunpack.c.l.b16 %v1026
        %v1270 = vunpack.c.h.b16 %v1026
        %v1271 = vunpack.c.l.b16 %v1027
        %v1272 = vunpack.c.h.b16 %v1027
        %v1273 = vunpack.c.l.b16 %v1028
        %v1274 = vunpack.c.h.b16 %v1028
        %v1275 = vunpack.c.l.b16 %v1029
        %v1276 = vunpack.c.h.b16 %v1029
        %v1277 = vunpack.c.l.b16 %v1030
        %v1278 = vunpack.c.h.b16 %v1030
        %v1279 = vunpack.c.l.b16 %v1031
        %v1280 = vunpack.c.h.b16 %v1031
        %v1281 = vunpack.c.l.b16 %v1032
        %v1282 = vunpack.c.h.b16 %v1032
        %v1283 = vunpack.c.l.b16 %v1033
        %v1284 = vunpack.c.h.b16 %v1033
        %v1285 = vunpack.c.l.b16 %v1034
        %v1286 = vunpack.c.h.b16 %v1034
        %v1287 = vunpack.c.l.b16 %v1035
        %v1288 = vunpack.c.h.b16 %v1035
        %v1289 = vunpack.c.l.b16 %v1036
        %v1290 = vunpack.c.h.b16 %v1036
        %v1291 = vunpack.c.l.b16 %v1037
        %v1292 = vunpack.c.h.b16 %v1037
        %v1293 = vunpack.c.l.b16 %v1038
        %v1294 = vunpack.c.h.b16 %v1038
        %v1295 = vunpack.c.l.b16 %v1039
        %v1296 = vunpack.c.h.b16 %v1039
        %v1297 = vunpack.c.l.b16 %v1040
        %v1298 = vunpack.c.h.b16 %v1040
        %v1299 = vunpack.c.l.b16 %v1041
        %v1300 = vunpack.c.h.b16 %v1041
        %v1301 = vunpack.c.l.b16 %v1042
        %v1302 = vunpack.c.h.b16 %v1042
        %v1303 = vunpack.c.l.b16 %v1043
        %v1304 = vunpack.c.h.b16 %v1043
        %v1305 = vunpack.c.l.b16 %v1044
        %v1306 = vunpack.c.h.b16 %v1044
        %v1307 = vunpack.c.l.b16 %v1045
        %v1308 = vunpack.c.h.b16 %v1045
        %v1309 = vunpack.c.l.b16 %v1046
        %v1310 = vunpack.c.h.b16 %v1046
        %v1311 = vunpack.c.l.b16 %v1047
        %v1312 = vunpack.c.h.b16 %v1047
        %v1313 = vunpack.c.l.b16 %v1048
        %v1314 = vunpack.c.h.b16 %v1048
        %v1315 = vunpack.c.l.b16 %v1049
        %v1316 = vunpack.c.h.b16 %v1049
        %v1317 = vunpack.c.l.b16 %v1050
        %v1318 = vunpack.c.h.b16 %v1050
        %v1319 = vunpack.c.l.b16 %v1051
        %v1320 = vunpack.c.h.b16 %v1051
        %v1321 = vunpack.c.l.b16 %v1052
        %v1322 = vunpack.c.h.b16 %v1052
        %v1323 = vunpack.c.l.b16 %v1053
        %v1324 = vunpack.c.h.b16 %v1053
        %v1325 = vunpack.c.l.b16 %v1054
        %v1326 = vunpack.c.h.b16 %v1054
        %v1327 = vunpack.c.l.b16 %v1055
        %v1328 = vunpack.c.h.b16 %v1055
        %v1329 = vunpack.c.l.b16 %v1056
        %v1330 = vunpack.c.h.b16 %v1056
        %v1331 = vunpack.c.l.b16 %v1057
        %v1332 = vunpack.c.h.b16 %v1057
        %v1333 = vunpack.c.l.b16 %v1058
        %v1334 = vunpack.c.h.b16 %v1058
        %v1335 = vunpack.c.l.b16 %v1059
        %v1336 = vunpack.c.h.b16 %v1059
        %v1337 = vunpack.c.l.b16 %v1060
        %v1338 = vunpack.c.h.b16 %v1060
        %v1339 = vunpack.c.l.b16 %v1061
        %v1340 = vunpack.c.h.b16 %v1061
        %v1341 = vunpack.c.l.b16 %v1062
        %v1342 = vunpack.c.h.b16 %v1062
        %v1343 = vunpack.c.l.b16 %v1063
        %v1344 = vunpack.c.h.b16 %v1063
        %v1345 = vunpack.c.l.b16 %v1064
        %v1346 = vunpack.c.h.b16 %v1064
        %v1347 = vunpack.c.l.b16 %v1065
        %v1348 = vunpack.c.h.b16 %v1065
        %v1349 = vunpack.c.l.b16 %v1066
        %v1350 = vunpack.c.h.b16 %v1066
        %v1351 = vunpack.c.l.b16 %v1067
        %v1352 = vunpack.c.h.b16 %v1067
        %v1353 = vunpack.c.l.b16 %v1068
        %v1354 = vunpack.c.h.b16 %v1068
        %v1355 = vunpack.c.l.b16 %v1069
        %v1356 = vunpack.c.h.b16 %v1069
        %v1357 = vunpack.c.l.b16 %v1070
        %v1358 = vunpack.c.h.b16 %v1070
        %v1359 = vunpack.c.l.b16 %v1071
        %v1360 = vunpack.c.h.b16 %v1071
        %v1361 = vunpack.c.l.b16 %v1072
        %v1362 = vunpack.c.h.b16 %v1072
        %v1363 = vunpack.c.l.b16 %v1073
        %v1364 = vunpack.c.h.b16 %v1073
        %v1365 = vunpack.c.l.b16 %v1074
        %v1366 = vunpack.c.h.b16 %v1074
        %v1367 = vunpack.c.l.b16 %v1075
        %v1368 = vunpack.c.h.b16 %v1075
        %v1369 = vunpack.c.l.b16 %v1076
        %v1370 = vunpack.c.h.b16 %v1076
        %v1371 = vunpack.c.l.b16 %v1077
        %v1372 = vunpack.c.h.b16 %v1077
        %v1373 = vunpack.c.l.b16 %v1078
        %v1374 = vunpack.c.h.b16 %v1078
        %v1375 = vunpack.c.l.b16 %v1079
        %v1376 = vunpack.c.h.b16 %v1079
        %v1377 = vunpack.c.l.b16 %v1080
        %v1378 = vunpack.c.h.b16 %v1080
        %v1379 = vunpack.c.l.b16 %v1081
        %v1380 = vunpack.c.h.b16 %v1081
        %v1381 = vunpack.c.l.b16 %v1082
        %v1382 = vunpack.c.h.b16 %v1082
        %v1383 = vunpack.c.l.b16 %v1083
        %v1384 = vunpack.c.h.b16 %v1083
        %v1385 = vunpack.c.l.b16 %v1084
        %v1386 = vunpack.c.h.b16 %v1084
        %v1387 = vunpack.c.l.b16 %v1085
        %v1388 = vunpack.c.h.b16 %v1085
        %v1389 = vunpack.c.l.b16 %v1086
        %v1390 = vunpack.c.h.b16 %v1086
        %v1391 = vunpack.c.l.b16 %v1087
        %v1392 = vunpack.c.h.b16 %v1087
        %v1393 = vunpack.c.l.b16 %v1088
        %v1394 = vunpack.c.h.b16 %v1088
        %v1395 = vunpack.c.l.b16 %v1089
        %v1396 = vunpack.c.h.b16 %v1089
        %v1397 = vunpack.c.l.b16 %v1090
        %v1398 = vunpack.c.h.b16 %v1090
        %v1399 = vunpack.c.l.b16 %v1091
        %v1400 = vunpack.c.h.b16 %v1091
        %v1401 = vunpack.c.l.b16 %v1092
        %v1402 = vunpack.c.h.b16 %v1092
        %v1403 = vunpack.c.l.b16 %v1093
        %v1404 = vunpack.c.h.b16 %v1093
        %v1405 = vunpack.c.l.b16 %v1094
        %v1406 = vunpack.c.h.b16 %v1094
        %v1407 = vunpack.c.l.b16 %v1095
        %v1408 = vunpack.c.h.b16 %v1095
        %v1409 = vunpack.c.l.b16 %v1096
        %v1410 = vunpack.c.h.b16 %v1096
        %v1411 = vunpack.c.l.b16 %v1097
        %v1412 = vunpack.c.h.b16 %v1097
        %v1413 = vunpack.c.l.b16 %v1098
        %v1414 = vunpack.c.h.b16 %v1098
        %v1415 = vunpack.c.l.b16 %v1099
        %v1416 = vunpack.c.h.b16 %v1099
        %v1417 = vunpack.c.l.b16 %v1100
        %v1418 = vunpack.c.h.b16 %v1100
        %v1419 = vunpack.c.l.b16 %v1101
        %v1420 = vunpack.c.h.b16 %v1101
        %v1421 = vunpack.c.l.b16 %v1102
        %v1422 = vunpack.c.h.b16 %v1102
        %v1423 = vpack.c.b16 %v1237, %v1231
        %v1424 = vpack.c.b16 %v1238, %v1232
        %v1425 = vpack.c.b16 %v1239, %v1233
        %v1426 = vpack.c.b16 %v1240, %v1234
        %v1427 = vpack.c.b16 %v1241, %v1235
        %v1428 = vpack.c.b16 %v1242, %v1236
        %v1429 = vpack.c.b16 %v1249, %v1243
        %v1430 = vpack.c.b16 %v1250, %v1244
        %v1431 = vpack.c.b16 %v1251, %v1245
        %v1432 = vpack.c.b16 %v1252, %v1246
        %v1433 = vpack.c.b16 %v1253, %v1247
        %v1434 = vpack.c.b16 %v1254, %v1248
        %v1435 = vpack.c.b16 %v1261, %v1255
        %v1436 = vpack.c.b16 %v1262, %v1256
        %v1437 = vpack.c.b16 %v1263, %v1257
        %v1438 = vpack.c.b16 %v1264, %v1258
        %v1439 = vpack.c.b16 %v1265, %v1259
        %v1440 = vpack.c.b16 %v1266, %v1260
        %v1441 = vpack.c.b16 %v1273, %v1267
        %v1442 = vpack.c.b16 %v1274, %v1268
        %v1443 = vpack.c.b16 %v1275, %v1269
        %v1444 = vpack.c.b16 %v1276, %v1270
        %v1445 = vpack.c.b16 %v1277, %v1271
        %v1446 = vpack.c.b16 %v1278, %v1272
        %v1447 = vpack.c.b16 %v1285, %v1279
        %v1448 = vpack.c.b16 %v1286, %v1280
        %v1449 = vpack.c.b16 %v1287, %v1281
        %v1450 = vpack.c.b16 %v1288, %v1282
        %v1451 = vpack.c.b16 %v1289, %v1283
        %v1452 = vpack.c.b16 %v1290, %v1284
        %v1453 = vpack.c.b16 %v1297, %v1291
        %v1454 = vpack.c.b16 %v1298, %v1292
        %v1455 = vpack.c.b16 %v1299, %v1293
        %v1456 = vpack.c.b16 %v1300, %v1294
        %v1457 = vpack.c.b16 %v1301, %v1295
        %v1458 = vpack.c.b16 %v1302, %v1296
        %v1459 = vpack.c.b16 %v1309, %v1303
        %v1460 = vpack.c.b16 %v1310, %v1304
        %v1461 = vpack.c.b16 %v1311, %v1305
        %v1462 = vpack.c.b16 %v1312, %v1306
        %v1463 = vpack.c.b16 %v1313, %v1307
        %v1464 = vpack.c.b16 %v1314, %v1308
        %v1465 = vpack.c.b16 %v1321, %v1315
        %v1466 = vpack.c.b16 %v1322, %v1316
        %v1467 = vpack.c.b16 %v1323, %v1317
        %v1468 = vpack.c.b16 %v1324, %v1318
        %v1469 = vpack.c.b16 %v1325, %v1319
        %v1470 = vpack.c.b16 %v1326, %v1320
        %v1471 = vpack.c.b16 %v1333, %v1327
        %v1472 = vpack.c.b16 %v1334, %v1328
        %v1473 = vpack.c.b16 %v1335, %v1329
        %v1474 = vpack.c.b16 %v1336, %v1330
        %v1475 = vpack.c.b16 %v1337, %v1331
        %v1476 = vpack.c.b16 %v1338, %v1332
        %v1477 = vpack.c.b16 %v1345, %v1339
        %v1478 = vpack.c.b16 %v1346, %v1340
        %v1479 = vpack.c.b16 %v1347, %v1341
        %v1480 = vpack.c.b16 %v1348, %v1342
        %v1481 = vpack.c.b16 %v1349, %v1343
        %v1482 = vpack.c.b16 %v1350, %v1344
        %v1483 = vpack.c.b16 %v1357, %v1351
        %v1484 = vpack.c.b16 %v1358, %v1352
        %v1485 = vpack.c.b16 %v1359, %v1353
        %v1486 = vpack.c.b16 %v1360, %v1354
        %v1487 = vpack.c.b16 %v1361, %v1355
        %v1488 = vpack.c.b16 %v1362, %v1356
        %v1489 = vpack.c.b16 %v1369, %v1363
        %v1490 = vpack.c.b16 %v1370, %v1364
        %v1491 = vpack.c.b16 %v1371, %v1365
        %v1492 = vpack.c.b16 %v1372, %v1366
        %v1493 = vpack.c.b16 %v1373, %v1367
        %v1494 = vpack.c.b16 %v1374, %v1368
        %v1495 = vpack.c.b16 %v1381, %v1375
        %v1496 = vpack.c.b16 %v1382, %v1376
        %v1497 = vpack.c.b16 %v1383, %v1377
        %v1498 = vpack.c.b16 %v1384, %v1378
        %v1499 = vpack.c.b16 %v1385, %v1379
        %v1500 = vpack.c.b16 %v1386, %v1380
        %v1501 = vpack.c.b16 %v1393, %v1387
        %v1502 = vpack.c.b16 %v1394, %v1388
        %v1503 = vpack.c.b16 %v1395, %v1389
        %v1504 = vpack.c.b16 %v1396, %v1390
        %v1505 = vpack.c.b16 %v1397, %v1391
        %v1506 = vpack.c.b16 %v1398, %v1392
        %v1507 = vpack.c.b16 %v1405, %v1399
        %v1508 = vpack.c.b16 %v1406, %v1400
        %v1509 = vpack.c.b16 %v1407, %v1401
        %v1510 = vpack.c.b16 %v1408, %v1402
        %v1511 = vpack.c.b16 %v1409, %v1403
        %v1512 = vpack.c.b16 %v1410, %v1404
        %v1513 = vpack.c.b16 %v1417, %v1411
        %v1514 = vpack.c.b16 %v1418, %v1412
        %v1515 = vpack.c.b16 %v1419, %v1413
        %v1516 = vpack.c.b16 %v1420, %v1414
        %v1517 = vpack.c.b16 %v1421, %v1415
        %v1518 = vpack.c.b16 %v1422, %v1416
        %1615 = vmatprep.subr.bf16.mxu0 %v1424
        %1616 = vmatpush1.bf16.msra.mxu0 %v1423
        %1617 = vmatprep.subr.bf16.mxu0 %v1430
        %1618 = vmatpush1.bf16.msra.mxu0 %v1429
        %1619 = vmatprep.subr.bf16.mxu0 %v1436
        %1620 = vmatpush1.bf16.msra.mxu0 %v1435
        %1621 = vmatprep.subr.bf16.mxu0 %v1442
        %1622 = vmatpush1.bf16.msra.mxu0 %v1441
        %1623 = vmatprep.subr.bf16.mxu0 %v1448
        %1624 = vmatpush1.bf16.msra.mxu0 %v1447
        %1625 = vmatprep.subr.bf16.mxu0 %v1454
        %1626 = vmatpush1.bf16.msra.mxu0 %v1453
        %1627 = vmatprep.subr.bf16.mxu0 %v1460
        %1628 = vmatpush1.bf16.msra.mxu0 %v1459
        %1629 = vmatprep.subr.bf16.mxu0 %v1466
        %1630 = vmatpush1.bf16.msra.mxu0 %v1465
        %1631 = vmatprep.subr.bf16.mxu0 %v1472
        %1632 = vmatpush1.bf16.msra.mxu0 %v1471
        %1633 = vmatprep.subr.bf16.mxu0 %v1478
        %1634 = vmatpush1.bf16.msra.mxu0 %v1477
        %1635 = vmatprep.subr.bf16.mxu0 %v1484
        %1636 = vmatpush1.bf16.msra.mxu0 %v1483
        %1637 = vmatprep.subr.bf16.mxu0 %v1490
        %1638 = vmatpush1.bf16.msra.mxu0 %v1489
        %1639 = vmatprep.subr.bf16.mxu0 %v1496
        %1640 = vmatpush1.bf16.msra.mxu0 %v1495
        %1641 = vmatprep.subr.bf16.mxu0 %v1502
        %1642 = vmatpush1.bf16.msra.mxu0 %v1501
        %1643 = vmatprep.subr.bf16.mxu0 %v1508
        %1644 = vmatpush1.bf16.msra.mxu0 %v1507
        %1645 = vmatprep.subr.bf16.mxu0 %v1514
        %1646 = vmatpush1.bf16.msra.mxu0 %v1513
        %1647 = vmatprep.mubr.bf16.mxu0 %v1006
        %1648 = vmatmul.mubr.bf16.gmra.mrb[0].mxu0 %v1005
        %v1649 = vpop.f32.mrb[0].mxu0
        %v1650 = vadd.f32 %v1108, %v1649
        %v1651 = vpop.f32.mrb[0].mxu0
        %v1652 = vadd.f32 %v1112, %v1651
        %v1653 = vpop.f32.mrb[0].mxu0
        %v1654 = vadd.f32 %v1108, %v1653
        %v1655 = vpop.f32.mrb[0].mxu0
        %v1656 = vadd.f32 %v1112, %v1655
        %1657 = vdwg.mxu0
        %1658 = vmatprep.subr.bf16.mxu0 %v1426
        %1659 = vmatpush1.bf16.msra.mxu0 %v1425
        %1660 = vmatprep.subr.bf16.mxu0 %v1432
        %1661 = vmatpush1.bf16.msra.mxu0 %v1431
        %1662 = vmatprep.subr.bf16.mxu0 %v1438
        %1663 = vmatpush1.bf16.msra.mxu0 %v1437
        %1664 = vmatprep.subr.bf16.mxu0 %v1444
        %1665 = vmatpush1.bf16.msra.mxu0 %v1443
        %1666 = vmatprep.subr.bf16.mxu0 %v1450
        %1667 = vmatpush1.bf16.msra.mxu0 %v1449
        %1668 = vmatprep.subr.bf16.mxu0 %v1456
        %1669 = vmatpush1.bf16.msra.mxu0 %v1455
        %1670 = vmatprep.subr.bf16.mxu0 %v1462
        %1671 = vmatpush1.bf16.msra.mxu0 %v1461
        %1672 = vmatprep.subr.bf16.mxu0 %v1468
        %1673 = vmatpush1.bf16.msra.mxu0 %v1467
        %1674 = vmatprep.subr.bf16.mxu0 %v1474
        %1675 = vmatpush1.bf16.msra.mxu0 %v1473
        %1676 = vmatprep.subr.bf16.mxu0 %v1480
        %1677 = vmatpush1.bf16.msra.mxu0 %v1479
        %1678 = vmatprep.subr.bf16.mxu0 %v1486
        %1679 = vmatpush1.bf16.msra.mxu0 %v1485
        %1680 = vmatprep.subr.bf16.mxu0 %v1492
        %1681 = vmatpush1.bf16.msra.mxu0 %v1491
        %1682 = vmatprep.subr.bf16.mxu0 %v1498
        %1683 = vmatpush1.bf16.msra.mxu0 %v1497
        %1684 = vmatprep.subr.bf16.mxu0 %v1504
        %1685 = vmatpush1.bf16.msra.mxu0 %v1503
        %1686 = vmatprep.subr.bf16.mxu0 %v1510
        %1687 = vmatpush1.bf16.msra.mxu0 %v1509
        %1688 = vmatprep.subr.bf16.mxu0 %v1516
        %1689 = vmatpush1.bf16.msra.mxu0 %v1515
        %1690 = vmatprep.mubr.bf16.mxu0 %v1006
        %1691 = vmatmul.mubr.bf16.gmra.mrb[0].mxu0 %v1005
        %v1692 = vpop.f32.mrb[0].mxu0
        %v1693 = vadd.f32 %v1116, %v1692
        %v1694 = vpop.f32.mrb[0].mxu0
        %v1695 = vadd.f32 %v1120, %v1694
        %v1696 = vpop.f32.mrb[0].mxu0
        %v1697 = vadd.f32 %v1116, %v1696
        %v1698 = vpop.f32.mrb[0].mxu0
        %v1699 = vadd.f32 %v1120, %v1698
        %1700 = vdwg.mxu0
        %1701 = vmatprep.subr.bf16.mxu0 %v1428
        %1702 = vmatpush1.bf16.msra.mxu0 %v1427
        %1703 = vmatprep.subr.bf16.mxu0 %v1434
        %1704 = vmatpush1.bf16.msra.mxu0 %v1433
        %1705 = vmatprep.subr.bf16.mxu0 %v1440
        %1706 = vmatpush1.bf16.msra.mxu0 %v1439
        %1707 = vmatprep.subr.bf16.mxu0 %v1446
        %1708 = vmatpush1.bf16.msra.mxu0 %v1445
        %1709 = vmatprep.subr.bf16.mxu0 %v1452
        %1710 = vmatpush1.bf16.msra.mxu0 %v1451
        %1711 = vmatprep.subr.bf16.mxu0 %v1458
        %1712 = vmatpush1.bf16.msra.mxu0 %v1457
        %1713 = vmatprep.subr.bf16.mxu0 %v1464
        %1714 = vmatpush1.bf16.msra.mxu0 %v1463
        %1715 = vmatprep.subr.bf16.mxu0 %v1470
        %1716 = vmatpush1.bf16.msra.mxu0 %v1469
        %1717 = vmatprep.subr.bf16.mxu0 %v1476
        %1718 = vmatpush1.bf16.msra.mxu0 %v1475
        %1719 = vmatprep.subr.bf16.mxu0 %v1482
        %1720 = vmatpush1.bf16.msra.mxu0 %v1481
        %1721 = vmatprep.subr.bf16.mxu0 %v1488
        %1722 = vmatpush1.bf16.msra.mxu0 %v1487
        %1723 = vmatprep.subr.bf16.mxu0 %v1494
        %1724 = vmatpush1.bf16.msra.mxu0 %v1493
        %1725 = vmatprep.subr.bf16.mxu0 %v1500
        %1726 = vmatpush1.bf16.msra.mxu0 %v1499
        %1727 = vmatprep.subr.bf16.mxu0 %v1506
        %1728 = vmatpush1.bf16.msra.mxu0 %v1505
        %1729 = vmatprep.subr.bf16.mxu0 %v1512
        %1730 = vmatpush1.bf16.msra.mxu0 %v1511
        %1731 = vmatprep.subr.bf16.mxu0 %v1518
        %1732 = vmatpush1.bf16.msra.mxu0 %v1517
        %1733 = vmatprep.mubr.bf16.mxu0 %v1006
        %1734 = vmatmul.mubr.bf16.gmra.mrb[0].mxu0 %v1005
        %v1735 = vpop.f32.mrb[0].mxu0
        %v1736 = vadd.f32 %v1124, %v1735
        %v1737 = vpop.f32.mrb[0].mxu0
        %v1738 = vadd.f32 %v1128, %v1737
        %v1739 = vpop.f32.mrb[0].mxu0
        %v1740 = vadd.f32 %v1124, %v1739
        %v1741 = vpop.f32.mrb[0].mxu0
        %v1742 = vadd.f32 %v1128, %v1741
        %1743 = vdwg.mxu0
        %v1744 = vmul.f32 %v1650, 0.088388346
        %v1745 = vmul.f32 %v1652, 0.088388346
        %v1746 = vmul.f32 %v1654, 0.088388346
        %v1747 = vmul.f32 %v1656, 0.088388346
        %v1748 = vlaneseq
        %v1749 = vshrl.u32 %v1748, 7
        %v1750 = vadd.s32 %v1749, 8
        %vm1751 = vcmp.lt.s32.totalorder %v1749, 0
        %v1752 = vsub.s32 0, %v1749
        %v1753 = vsel %vm1751, %v1752, %v1749
        %v1754 = vshrl.u32 %v1753, 4
        %v1755 = vand.u32 %v1753, 15
        %v1756 = vsub.s32 0, %v1755
        %v1757 = vsel %vm1751, %v1756, %v1755
        %vm1758 = vcmp.lt.s32.totalorder %v1750, 0
        %v1759 = vsub.s32 0, %v1750
        %v1760 = vsel %vm1758, %v1759, %v1750
        %v1761 = vshrl.u32 %v1760, 4
        %v1762 = vand.u32 %v1760, 15
        %v1763 = vsub.s32 0, %v1762
        %v1764 = vsel %vm1758, %v1763, %v1762
        %vm1765 = vcmp.ne.s32.totalorder %v1757, 0
        %vm1766 = vcmp.ne.s32.totalorder %v1764, 0
        %vm1767 = vcmp.lt.s32.totalorder %v1757, 0
        %vm1768 = vcmp.lt.s32.totalorder %v1764, 0
        %vm1769 = vmand %vm1767, %vm1765
        %vm1770 = vmand %vm1768, %vm1766
        %v1771 = vadd.s32 %v1757, 16
        %v1772 = vadd.s32 %v1764, 16
        %v1773 = vsel %vm1769, %v1771, %v1757
        %v1774 = vsel %vm1770, %v1772, %v1764
        %vm1775 = vcmp.lt.s32.totalorder %v1773, 5
        %vm1776 = vcmp.lt.s32.totalorder %v1774, 5
        %v1777 = vsel %vm1775, 1, 0
        %v1778 = vsel %vm1776, 1, 0
        %vm1779 = vcmp.eq.s32.totalorder %v1777, 1
        %vm1780 = vcmp.eq.s32.totalorder %v1778, 1
        %v1781 = vsel %vm1779, %v1736, 0.0
        %v1782 = vsel %vm1779, %v1738, 0.0
        %v1783 = vsel %vm1780, %v1740, 0.0
        %v1784 = vsel %vm1780, %v1742, 0.0
        %v1785 = vlaneseq
        %v1786 = vand.u32 %v1785, 127
        %vm1787 = vcmp.lt.s32.totalorder %v1786, 5
        %v1788 = vpack.c.bf16 %v1746, %v1744
        %v1789 = vpack.c.bf16 %v1747, %v1745
        %v1790 = vpack.c.bf16 %v1697, %v1693
        %v1791 = vpack.c.bf16 %v1699, %v1695
        %v1792 = vpack.c.bf16 %v1783, %v1781
        %v1793 = vpack.c.bf16 %v1784, %v1782
        %1794 = vmatprep.subr.bf16.mxu0 0
        %1795 = vmatpush1.bf16.xpose.msra.mxu0 %v1790
        %1796 = vmatprep.subr.bf16.mxu0 0
        %1797 = vmatpush1.bf16.xpose.msra.mxu0 0
        %1798 = vmatprep.subr.bf16.mxu0 0
        %1799 = vmatpush1.bf16.xpose.msra.mxu0 0
        %1800 = vmatprep.subr.bf16.mxu0 0
        %1801 = vmatpush1.bf16.xpose.msra.mxu0 0
        %1802 = vmatprep.subr.bf16.mxu0 0
        %1803 = vmatpush1.bf16.xpose.msra.mxu0 0
        %1804 = vmatprep.subr.bf16.mxu0 0
        %1805 = vmatpush1.bf16.xpose.msra.mxu0 0
        %1806 = vmatprep.subr.bf16.mxu0 0
        %1807 = vmatpush1.bf16.xpose.msra.mxu0 0
        %1808 = vmatprep.subr.bf16.mxu0 0
        %1809 = vmatpush1.bf16.xpose.msra.mxu0 0
        %1810 = vmatprep.subr.bf16.mxu0 0
        %1811 = vmatpush1.bf16.xpose.msra.mxu0 0
        %1812 = vmatprep.subr.bf16.mxu0 0
        %1813 = vmatpush1.bf16.xpose.msra.mxu0 0
        %1814 = vmatprep.subr.bf16.mxu0 0
        %1815 = vmatpush1.bf16.xpose.msra.mxu0 0
        %1816 = vmatprep.subr.bf16.mxu0 0
        %1817 = vmatpush1.bf16.xpose.msra.mxu0 0
        %1818 = vmatprep.subr.bf16.mxu0 0
        %1819 = vmatpush1.bf16.xpose.msra.mxu0 0
        %1820 = vmatprep.subr.bf16.mxu0 0
        %1821 = vmatpush1.bf16.xpose.msra.mxu0 0
        %1822 = vmatprep.subr.bf16.mxu0 0
        %1823 = vmatpush1.bf16.xpose.msra.mxu0 0
        %1824 = vmatprep.subr.bf16.mxu0 0
        %1825 = vmatpush1.bf16.xpose.msra.mxu0 0
        %1826 = vmatprep.mubr.bf16.mxu0 0
        %1827 = vmatmul.mubr.bf16.gmra.mrb[0].mxu0 %v1788
        %v1828 = vpop.f32.mrb[0].mxu0
        %v1829 = vadd.f32 0.0, %v1828
        %v1830 = vpop.f32.mrb[0].mxu0
        %v1831 = vpop.f32.mrb[0].mxu0
        %v1832 = vadd.f32 0.0, %v1831
        %v1833 = vpop.f32.mrb[0].mxu0
        %1834 = vdwg.mxu0
        %v1835 = vsel %vm1787, 1, 0
        %vm1836 = vcmp.eq.s32.totalorder %v1835, 1
        %v1837 = vsel %vm1836, %v1829, -1e+30
        %v1838 = vsel %vm1836, %v1832, -1e+30
        %vm1839 = vcmask 130048
        %v1840 = vsel %vm1839, %v1837, -inf
        %1841 = vmax.xlane.f32.xlu0 %v1840
        %v1842 = vpop.xlane.xlu0 %1841
        %v1843 = vsel %vm1839, %v1838, -inf
        %1844 = vmax.xlane.f32.xlu0 %v1843
        %v1845 = vpop.xlane.xlu0 %1844
        %v1846 = vsub.f32 %v1837, %v1842
        %v1847 = vsub.f32 %v1838, %v1845
        %v1848 = vmul.f32 %v1846, 1.442695
        %v1849 = vpow.pop %v1848
        %v1850 = vmul.f32 %v1847, 1.442695
        %v1851 = vpow.pop %v1850
        %v1852 = vsel %vm1839, %v1849, 0.0
        %1853 = vadd.xlane.f32.xlu0 %v1852
        %v1854 = vpop.xlane.xlu0 %1853
        %v1855 = vsel %vm1839, %v1851, 0.0
        %1856 = vadd.xlane.f32.xlu0 %v1855
        %v1857 = vpop.xlane.xlu0 %1856
        %v1858 = vrcp.pop %v1854
        %v1859 = vrcp.pop %v1857
        %v1860 = vmul.f32 %v1849, %v1858
        %v1861 = vmul.f32 %v1851, %v1859
        %v1862 = vpack.c.bf16 %v1861, %v1860
        %v1864 = vsel %vm1839, %v1862, 0
        %1866 = vmatprep.subr.bf16.mxu0 0
        %1867 = vmatpush1.bf16.msra.mxu0 %v1792
        %1868 = vmatprep.subr.bf16.mxu0 0
        %1869 = vmatpush1.bf16.msra.mxu0 0
        %1870 = vmatprep.subr.bf16.mxu0 0
        %1871 = vmatpush1.bf16.msra.mxu0 0
        %1872 = vmatprep.subr.bf16.mxu0 0
        %1873 = vmatpush1.bf16.msra.mxu0 0
        %1874 = vmatprep.subr.bf16.mxu0 0
        %1875 = vmatpush1.bf16.msra.mxu0 0
        %1876 = vmatprep.subr.bf16.mxu0 0
        %1877 = vmatpush1.bf16.msra.mxu0 0
        %1878 = vmatprep.subr.bf16.mxu0 0
        %1879 = vmatpush1.bf16.msra.mxu0 0
        %1880 = vmatprep.subr.bf16.mxu0 0
        %1881 = vmatpush1.bf16.msra.mxu0 0
        %1882 = vmatprep.subr.bf16.mxu0 0
        %1883 = vmatpush1.bf16.msra.mxu0 0
        %1884 = vmatprep.subr.bf16.mxu0 0
        %1885 = vmatpush1.bf16.msra.mxu0 0
        %1886 = vmatprep.subr.bf16.mxu0 0
        %1887 = vmatpush1.bf16.msra.mxu0 0
        %1888 = vmatprep.subr.bf16.mxu0 0
        %1889 = vmatpush1.bf16.msra.mxu0 0
        %1890 = vmatprep.subr.bf16.mxu0 0
        %1891 = vmatpush1.bf16.msra.mxu0 0
        %1892 = vmatprep.subr.bf16.mxu0 0
        %1893 = vmatpush1.bf16.msra.mxu0 0
        %1894 = vmatprep.subr.bf16.mxu0 0
        %1895 = vmatpush1.bf16.msra.mxu0 0
        %1896 = vmatprep.subr.bf16.mxu0 0
        %1897 = vmatpush1.bf16.msra.mxu0 0
        %1898 = vmatprep.mubr.bf16.mxu0 0
        %1899 = vmatmul.mubr.bf16.gmra.mrb[0].mxu0 %v1864
        %v1900 = vpop.f32.mrb[0].mxu0
        %v1901 = vadd.f32 0.0, %v1900
        %v1902 = vpop.f32.mrb[0].mxu0
        %v1903 = vpop.f32.mrb[0].mxu0
        %v1904 = vadd.f32 0.0, %v1903
        %v1905 = vpop.f32.mrb[0].mxu0
        %1906 = vdwg.mxu0
        %v1907 = vpack.c.bf16 %v1904, %v1901
        %1908 = vst [vmem:[#allocation3] sm:$0xff] %v1907
        %1909 = vmatprep.subr.bf16.mxu0 0
        %1910 = vmatpush1.bf16.xpose.msra.mxu0 %v1791
        %1911 = vmatprep.subr.bf16.mxu0 0
        %1912 = vmatpush1.bf16.xpose.msra.mxu0 0
        %1913 = vmatprep.subr.bf16.mxu0 0
        %1914 = vmatpush1.bf16.xpose.msra.mxu0 0
        %1915 = vmatprep.subr.bf16.mxu0 0
        %1916 = vmatpush1.bf16.xpose.msra.mxu0 0
        %1917 = vmatprep.subr.bf16.mxu0 0
        %1918 = vmatpush1.bf16.xpose.msra.mxu0 0
        %1919 = vmatprep.subr.bf16.mxu0 0
        %1920 = vmatpush1.bf16.xpose.msra.mxu0 0
        %1921 = vmatprep.subr.bf16.mxu0 0
        %1922 = vmatpush1.bf16.xpose.msra.mxu0 0
        %1923 = vmatprep.subr.bf16.mxu0 0
        %1924 = vmatpush1.bf16.xpose.msra.mxu0 0
        %1925 = vmatprep.subr.bf16.mxu0 0
        %1926 = vmatpush1.bf16.xpose.msra.mxu0 0
        %1927 = vmatprep.subr.bf16.mxu0 0
        %1928 = vmatpush1.bf16.xpose.msra.mxu0 0
        %1929 = vmatprep.subr.bf16.mxu0 0
        %1930 = vmatpush1.bf16.xpose.msra.mxu0 0
        %1931 = vmatprep.subr.bf16.mxu0 0
        %1932 = vmatpush1.bf16.xpose.msra.mxu0 0
        %1933 = vmatprep.subr.bf16.mxu0 0
        %1934 = vmatpush1.bf16.xpose.msra.mxu0 0
        %1935 = vmatprep.subr.bf16.mxu0 0
        %1936 = vmatpush1.bf16.xpose.msra.mxu0 0
        %1937 = vmatprep.subr.bf16.mxu0 0
        %1938 = vmatpush1.bf16.xpose.msra.mxu0 0
        %1939 = vmatprep.subr.bf16.mxu0 0
        %1940 = vmatpush1.bf16.xpose.msra.mxu0 0
        %1941 = vmatprep.mubr.bf16.mxu0 0
        %1942 = vmatmul.mubr.bf16.gmra.mrb[0].mxu0 %v1789
        %v1943 = vpop.f32.mrb[0].mxu0
        %v1944 = vadd.f32 0.0, %v1943
        %v1945 = vpop.f32.mrb[0].mxu0
        %v1946 = vpop.f32.mrb[0].mxu0
        %v1947 = vadd.f32 0.0, %v1946
        %v1948 = vpop.f32.mrb[0].mxu0
        %1949 = vdwg.mxu0
        %v1950 = vsel %vm1836, %v1944, -1e+30
        %v1951 = vsel %vm1836, %v1947, -1e+30
        %v1952 = vsel %vm1839, %v1950, -inf
        %1953 = vmax.xlane.f32.xlu0 %v1952
        %v1954 = vpop.xlane.xlu0 %1953
        %v1955 = vsel %vm1839, %v1951, -inf
        %1956 = vmax.xlane.f32.xlu0 %v1955
        %v1957 = vpop.xlane.xlu0 %1956
        %v1958 = vsub.f32 %v1950, %v1954
        %v1959 = vsub.f32 %v1951, %v1957
        %v1960 = vmul.f32 %v1958, 1.442695
        %v1961 = vpow.pop %v1960
        %v1962 = vmul.f32 %v1959, 1.442695
        %v1963 = vpow.pop %v1962
        %v1964 = vsel %vm1839, %v1961, 0.0
        %1965 = vadd.xlane.f32.xlu0 %v1964
        %v1966 = vpop.xlane.xlu0 %1965
        %v1967 = vsel %vm1839, %v1963, 0.0
        %1968 = vadd.xlane.f32.xlu0 %v1967
        %v1969 = vpop.xlane.xlu0 %1968
        %v1970 = vrcp.pop %v1966
        %v1971 = vrcp.pop %v1969
        %v1972 = vmul.f32 %v1961, %v1970
        %v1973 = vmul.f32 %v1963, %v1971
        %v1974 = vpack.c.bf16 %v1973, %v1972
        %v1976 = vsel %vm1839, %v1974, 0
        %1978 = vmatprep.subr.bf16.mxu0 0
        %1979 = vmatpush1.bf16.msra.mxu0 %v1793
        %1980 = vmatprep.subr.bf16.mxu0 0
        %1981 = vmatpush1.bf16.msra.mxu0 0
        %1982 = vmatprep.subr.bf16.mxu0 0
        %1983 = vmatpush1.bf16.msra.mxu0 0
        %1984 = vmatprep.subr.bf16.mxu0 0
        %1985 = vmatpush1.bf16.msra.mxu0 0
        %1986 = vmatprep.subr.bf16.mxu0 0
        %1987 = vmatpush1.bf16.msra.mxu0 0
        %1988 = vmatprep.subr.bf16.mxu0 0
        %1989 = vmatpush1.bf16.msra.mxu0 0
        %1990 = vmatprep.subr.bf16.mxu0 0
        %1991 = vmatpush1.bf16.msra.mxu0 0
        %1992 = vmatprep.subr.bf16.mxu0 0
        %1993 = vmatpush1.bf16.msra.mxu0 0
        %1994 = vmatprep.subr.bf16.mxu0 0
        %1995 = vmatpush1.bf16.msra.mxu0 0
        %1996 = vmatprep.subr.bf16.mxu0 0
        %1997 = vmatpush1.bf16.msra.mxu0 0
        %1998 = vmatprep.subr.bf16.mxu0 0
        %1999 = vmatpush1.bf16.msra.mxu0 0
        %2000 = vmatprep.subr.bf16.mxu0 0
        %2001 = vmatpush1.bf16.msra.mxu0 0
        %2002 = vmatprep.subr.bf16.mxu0 0
        %2003 = vmatpush1.bf16.msra.mxu0 0
        %2004 = vmatprep.subr.bf16.mxu0 0
        %2005 = vmatpush1.bf16.msra.mxu0 0
        %2006 = vmatprep.subr.bf16.mxu0 0
        %2007 = vmatpush1.bf16.msra.mxu0 0
        %2008 = vmatprep.subr.bf16.mxu0 0
        %2009 = vmatpush1.bf16.msra.mxu0 0
        %2010 = vmatprep.mubr.bf16.mxu0 0
        %2011 = vmatmul.mubr.bf16.gmra.mrb[0].mxu0 %v1976
        %v2012 = vpop.f32.mrb[0].mxu0
        %v2013 = vadd.f32 0.0, %v2012
        %v2014 = vpop.f32.mrb[0].mxu0
        %v2015 = vpop.f32.mrb[0].mxu0
        %v2016 = vadd.f32 0.0, %v2015
        %v2017 = vpop.f32.mrb[0].mxu0
        %2018 = vdwg.mxu0
        %v2019 = vpack.c.bf16 %v2016, %v2013
        %2020 = vst [vmem:[#allocation3 + $0x8] sm:$0xff] %v2019
        %v2021 = vld [vmem:[#allocation3] sm:$0xff]
        %v2022 = vld [vmem:[#allocation3 + $0x8] sm:$0xff]
        %v2023 = vld [vmem:[%s837] sm:$0xff]
        %v2024 = vld [vmem:[%s837 + $0x8] sm:$0xff]
        %v2025 = vld [vmem:[%s837 + $0x10] sm:$0xff]
        %v2026 = vld [vmem:[%s837 + $0x18] sm:$0xff]
        %v2027 = vld [vmem:[%s837 + $0x20] sm:$0xff]
        %v2028 = vld [vmem:[%s837 + $0x28] sm:$0xff]
        %v2029 = vld [vmem:[%s837 + $0x30] sm:$0xff]
        %v2030 = vld [vmem:[%s837 + $0x38] sm:$0xff]
        %v2031 = vld [vmem:[%s837 + $0x40] sm:$0xff]
        %v2032 = vld [vmem:[%s837 + $0x48] sm:$0xff]
        %v2033 = vld [vmem:[%s837 + $0x50] sm:$0xff]
        %v2034 = vld [vmem:[%s837 + $0x58] sm:$0xff]
        %v2035 = vld [vmem:[%s837 + $0x60] sm:$0xff]
        %v2036 = vld [vmem:[%s837 + $0x68] sm:$0xff]
        %v2037 = vld [vmem:[%s837 + $0x70] sm:$0xff]
        %v2038 = vld [vmem:[%s837 + $0x78] sm:$0xff]
        %v2039 = vld [vmem:[%s837 + $0x80] sm:$0xff]
        %v2040 = vld [vmem:[%s837 + $0x88] sm:$0xff]
        %v2041 = vld [vmem:[%s837 + $0x90] sm:$0xff]
        %v2042 = vld [vmem:[%s837 + $0x98] sm:$0xff]
        %v2043 = vld [vmem:[%s837 + $0xa0] sm:$0xff]
        %v2044 = vld [vmem:[%s837 + $0xa8] sm:$0xff]
        %v2045 = vld [vmem:[%s837 + $0xb0] sm:$0xff]
        %v2046 = vld [vmem:[%s837 + $0xb8] sm:$0xff]
        %v2047 = vld [vmem:[%s837 + $0xc0] sm:$0xff]
        %v2048 = vld [vmem:[%s837 + $0xc8] sm:$0xff]
        %v2049 = vld [vmem:[%s837 + $0xd0] sm:$0xff]
        %v2050 = vld [vmem:[%s837 + $0xd8] sm:$0xff]
        %v2051 = vld [vmem:[%s837 + $0xe0] sm:$0xff]
        %v2052 = vld [vmem:[%s837 + $0xe8] sm:$0xff]
        %v2053 = vld [vmem:[%s837 + $0xf0] sm:$0xff]
        %v2054 = vld [vmem:[%s837 + $0xf8] sm:$0xff]
        %v2087 = vunpack.c.l.b16 %v2023
        %v2088 = vunpack.c.h.b16 %v2023
        %v2089 = vunpack.c.l.b16 %v2024
        %v2090 = vunpack.c.h.b16 %v2024
        %v2091 = vunpack.c.l.b16 %v2025
        %v2092 = vunpack.c.h.b16 %v2025
        %v2093 = vunpack.c.l.b16 %v2026
        %v2094 = vunpack.c.h.b16 %v2026
        %v2095 = vunpack.c.l.b16 %v2027
        %v2096 = vunpack.c.h.b16 %v2027
        %v2097 = vunpack.c.l.b16 %v2028
        %v2098 = vunpack.c.h.b16 %v2028
        %v2099 = vunpack.c.l.b16 %v2029
        %v2100 = vunpack.c.h.b16 %v2029
        %v2101 = vunpack.c.l.b16 %v2030
        %v2102 = vunpack.c.h.b16 %v2030
        %v2103 = vunpack.c.l.b16 %v2031
        %v2104 = vunpack.c.h.b16 %v2031
        %v2105 = vunpack.c.l.b16 %v2032
        %v2106 = vunpack.c.h.b16 %v2032
        %v2107 = vunpack.c.l.b16 %v2033
        %v2108 = vunpack.c.h.b16 %v2033
        %v2109 = vunpack.c.l.b16 %v2034
        %v2110 = vunpack.c.h.b16 %v2034
        %v2111 = vunpack.c.l.b16 %v2035
        %v2112 = vunpack.c.h.b16 %v2035
        %v2113 = vunpack.c.l.b16 %v2036
        %v2114 = vunpack.c.h.b16 %v2036
        %v2115 = vunpack.c.l.b16 %v2037
        %v2116 = vunpack.c.h.b16 %v2037
        %v2117 = vunpack.c.l.b16 %v2038
        %v2118 = vunpack.c.h.b16 %v2038
        %v2119 = vunpack.c.l.b16 %v2039
        %v2120 = vunpack.c.h.b16 %v2039
        %v2121 = vunpack.c.l.b16 %v2040
        %v2122 = vunpack.c.h.b16 %v2040
        %v2123 = vunpack.c.l.b16 %v2041
        %v2124 = vunpack.c.h.b16 %v2041
        %v2125 = vunpack.c.l.b16 %v2042
        %v2126 = vunpack.c.h.b16 %v2042
        %v2127 = vunpack.c.l.b16 %v2043
        %v2128 = vunpack.c.h.b16 %v2043
        %v2129 = vunpack.c.l.b16 %v2044
        %v2130 = vunpack.c.h.b16 %v2044
        %v2131 = vunpack.c.l.b16 %v2045
        %v2132 = vunpack.c.h.b16 %v2045
        %v2133 = vunpack.c.l.b16 %v2046
        %v2134 = vunpack.c.h.b16 %v2046
        %v2135 = vunpack.c.l.b16 %v2047
        %v2136 = vunpack.c.h.b16 %v2047
        %v2137 = vunpack.c.l.b16 %v2048
        %v2138 = vunpack.c.h.b16 %v2048
        %v2139 = vunpack.c.l.b16 %v2049
        %v2140 = vunpack.c.h.b16 %v2049
        %v2141 = vunpack.c.l.b16 %v2050
        %v2142 = vunpack.c.h.b16 %v2050
        %v2143 = vunpack.c.l.b16 %v2051
        %v2144 = vunpack.c.h.b16 %v2051
        %v2145 = vunpack.c.l.b16 %v2052
        %v2146 = vunpack.c.h.b16 %v2052
        %v2147 = vunpack.c.l.b16 %v2053
        %v2148 = vunpack.c.h.b16 %v2053
        %v2149 = vunpack.c.l.b16 %v2054
        %v2150 = vunpack.c.h.b16 %v2054
        %v2151 = vpack.c.b16 %v2089, %v2087
        %v2152 = vpack.c.b16 %v2090, %v2088
        %v2153 = vpack.c.b16 %v2093, %v2091
        %v2154 = vpack.c.b16 %v2094, %v2092
        %v2155 = vpack.c.b16 %v2097, %v2095
        %v2156 = vpack.c.b16 %v2098, %v2096
        %v2157 = vpack.c.b16 %v2101, %v2099
        %v2158 = vpack.c.b16 %v2102, %v2100
        %v2159 = vpack.c.b16 %v2105, %v2103
        %v2160 = vpack.c.b16 %v2106, %v2104
        %v2161 = vpack.c.b16 %v2109, %v2107
        %v2162 = vpack.c.b16 %v2110, %v2108
        %v2163 = vpack.c.b16 %v2113, %v2111
        %v2164 = vpack.c.b16 %v2114, %v2112
        %v2165 = vpack.c.b16 %v2117, %v2115
        %v2166 = vpack.c.b16 %v2118, %v2116
        %v2167 = vpack.c.b16 %v2121, %v2119
        %v2168 = vpack.c.b16 %v2122, %v2120
        %v2169 = vpack.c.b16 %v2125, %v2123
        %v2170 = vpack.c.b16 %v2126, %v2124
        %v2171 = vpack.c.b16 %v2129, %v2127
        %v2172 = vpack.c.b16 %v2130, %v2128
        %v2173 = vpack.c.b16 %v2133, %v2131
        %v2174 = vpack.c.b16 %v2134, %v2132
        %v2175 = vpack.c.b16 %v2137, %v2135
        %v2176 = vpack.c.b16 %v2138, %v2136
        %v2177 = vpack.c.b16 %v2141, %v2139
        %v2178 = vpack.c.b16 %v2142, %v2140
        %v2179 = vpack.c.b16 %v2145, %v2143
        %v2180 = vpack.c.b16 %v2146, %v2144
        %v2181 = vpack.c.b16 %v2149, %v2147
        %v2182 = vpack.c.b16 %v2150, %v2148
        %2215 = vmatprep.subr.bf16.mxu0 %v2152
        %2216 = vmatpush1.bf16.msra.mxu0 %v2151
        %2217 = vmatprep.subr.bf16.mxu0 %v2154
        %2218 = vmatpush1.bf16.msra.mxu0 %v2153
        %2219 = vmatprep.subr.bf16.mxu0 %v2156
        %2220 = vmatpush1.bf16.msra.mxu0 %v2155
        %2221 = vmatprep.subr.bf16.mxu0 %v2158
        %2222 = vmatpush1.bf16.msra.mxu0 %v2157
        %2223 = vmatprep.subr.bf16.mxu0 %v2160
        %2224 = vmatpush1.bf16.msra.mxu0 %v2159
        %2225 = vmatprep.subr.bf16.mxu0 %v2162
        %2226 = vmatpush1.bf16.msra.mxu0 %v2161
        %2227 = vmatprep.subr.bf16.mxu0 %v2164
        %2228 = vmatpush1.bf16.msra.mxu0 %v2163
        %2229 = vmatprep.subr.bf16.mxu0 %v2166
        %2230 = vmatpush1.bf16.msra.mxu0 %v2165
        %2231 = vmatprep.subr.bf16.mxu0 %v2168
        %2232 = vmatpush1.bf16.msra.mxu0 %v2167
        %2233 = vmatprep.subr.bf16.mxu0 %v2170
        %2234 = vmatpush1.bf16.msra.mxu0 %v2169
        %2235 = vmatprep.subr.bf16.mxu0 %v2172
        %2236 = vmatpush1.bf16.msra.mxu0 %v2171
        %2237 = vmatprep.subr.bf16.mxu0 %v2174
        %2238 = vmatpush1.bf16.msra.mxu0 %v2173
        %2239 = vmatprep.subr.bf16.mxu0 %v2176
        %2240 = vmatpush1.bf16.msra.mxu0 %v2175
        %2241 = vmatprep.subr.bf16.mxu0 %v2178
        %2242 = vmatpush1.bf16.msra.mxu0 %v2177
        %2243 = vmatprep.subr.bf16.mxu0 %v2180
        %2244 = vmatpush1.bf16.msra.mxu0 %v2179
        %2245 = vmatprep.subr.bf16.mxu0 %v2182
        %2246 = vmatpush1.bf16.msra.mxu0 %v2181
        %2247 = vmatprep.mubr.bf16.mxu0 %v2022
        %2248 = vmatmul.mubr.bf16.gmra.mrb[0].mxu0 %v2021
        %v2249 = vpop.f32.mrb[0].mxu0
        %v2250 = vadd.f32 0.0, %v2249
        %v2251 = vpop.f32.mrb[0].mxu0
        %v2252 = vadd.f32 0.0, %v2251
        %v2253 = vpop.f32.mrb[0].mxu0
        %v2254 = vadd.f32 0.0, %v2253
        %v2255 = vpop.f32.mrb[0].mxu0
        %v2256 = vadd.f32 0.0, %v2255
        %2257 = vdwg.mxu0
        %v2258 = vadd.f32 %v936, %v2250
        %v2259 = vadd.f32 %v937, %v2252
        %v2260 = vadd.f32 %v938, %v2254
        %v2261 = vadd.f32 %v939, %v2256
        %v2262 = vld [vmem:[%s841] sm:$0x3]
        %v2264 = vlaneseq
        %v2265 = vshrl.u32 %v2264, 7
        %v2266 = vsub.s32 0, %v2265
        %v2267 = vrot.slane %v2262, %v2266
        %v2268 = vlaneseq
        %v2269 = vshrl.u32 %v2268, 7
        %v2270 = vsub.s32 1, %v2269
        %v2271 = vrot.slane %v2262, %v2270
        %v2274 = vadd.f32 %v2258, %v2267
        %v2275 = vadd.f32 %v2259, %v2271
        %v2276 = vadd.f32 %v2260, %v2267
        %v2277 = vadd.f32 %v2261, %v2271
        %v2278 = vld [vmem:[%s845] sm:$0x3]
        %v2279 = vld [vmem:[%s849] sm:$0x3]
        %v2280 = vadd.f32 %v2274, %v2275
        %2281 = vadd.xlane.f32.xlu0 %v2280
        %v2282 = vpop.xlane.xlu0 %2281
        %v2283 = vadd.f32 %v2276, %v2277
        %2284 = vadd.xlane.f32.xlu0 %v2283
        %v2285 = vpop.xlane.xlu0 %2284
        %v2286 = vmul.f32 %v2282, %v948
        %v2287 = vmul.f32 %v2285, %v948
        %v2288 = vsub.f32 %v2274, %v2286
        %v2289 = vsub.f32 %v2275, %v2286
        %v2290 = vsub.f32 %v2276, %v2287
        %v2291 = vsub.f32 %v2277, %v2287
        %v2292 = vmul.f32 %v2288, %v2288
        %v2293 = vmul.f32 %v2289, %v2289
        %v2294 = vmul.f32 %v2290, %v2290
        %v2295 = vmul.f32 %v2291, %v2291
        %v2296 = vadd.f32 %v2292, %v2293
        %2297 = vadd.xlane.f32.xlu0 %v2296
        %v2298 = vpop.xlane.xlu0 %2297
        %v2299 = vadd.f32 %v2294, %v2295
        %2300 = vadd.xlane.f32.xlu0 %v2299
        %v2301 = vpop.xlane.xlu0 %2300
        %v2302 = vmul.f32 %v2298, %v948
        %v2303 = vmul.f32 %v2301, %v948
        %v2304 = vadd.f32 %v2302, 1e-05
        %v2305 = vadd.f32 %v2303, 1e-05
        %v2306 = vrsqrt.pop %v2304
        %v2307 = vrsqrt.pop %v2305
        %v2308 = vmul.f32 %v2288, %v2306
        %v2309 = vmul.f32 %v2289, %v2306
        %v2310 = vmul.f32 %v2290, %v2307
        %v2311 = vmul.f32 %v2291, %v2307
        %v2313 = vlaneseq
        %v2314 = vshrl.u32 %v2313, 7
        %v2315 = vsub.s32 0, %v2314
        %v2316 = vrot.slane %v2278, %v2315
        %v2317 = vlaneseq
        %v2318 = vshrl.u32 %v2317, 7
        %v2319 = vsub.s32 1, %v2318
        %v2320 = vrot.slane %v2278, %v2319
        %v2323 = vmul.f32 %v2308, %v2316
        %v2324 = vmul.f32 %v2309, %v2320
        %v2325 = vmul.f32 %v2310, %v2316
        %v2326 = vmul.f32 %v2311, %v2320
        %v2328 = vlaneseq
        %v2329 = vshrl.u32 %v2328, 7
        %v2330 = vsub.s32 0, %v2329
        %v2331 = vrot.slane %v2279, %v2330
        %v2332 = vlaneseq
        %v2333 = vshrl.u32 %v2332, 7
        %v2334 = vsub.s32 1, %v2333
        %v2335 = vrot.slane %v2279, %v2334
        %v2338 = vadd.f32 %v2323, %v2331
        %v2339 = vadd.f32 %v2324, %v2335
        %v2340 = vadd.f32 %v2325, %v2331
        %v2341 = vadd.f32 %v2326, %v2335
        %v2342 = vpack.c.bf16 %v2340, %v2338
        %v2343 = vpack.c.bf16 %v2341, %v2339
        %v2344 = vld [vmem:[%s703] sm:$0xff]
        %v2345 = vld [vmem:[%s703 + $0x8] sm:$0xff]
        %v2346 = vld [vmem:[%s703 + $0x10] sm:$0xff]
        %v2347 = vld [vmem:[%s703 + $0x18] sm:$0xff]
        %v2348 = vld [vmem:[%s703 + $0x20] sm:$0xff]
        %v2349 = vld [vmem:[%s703 + $0x28] sm:$0xff]
        %v2350 = vld [vmem:[%s703 + $0x30] sm:$0xff]
        %v2351 = vld [vmem:[%s703 + $0x38] sm:$0xff]
        %v2352 = vld [vmem:[%s703 + $0x40] sm:$0xff]
        %v2353 = vld [vmem:[%s703 + $0x48] sm:$0xff]
        %v2354 = vld [vmem:[%s703 + $0x50] sm:$0xff]
        %v2355 = vld [vmem:[%s703 + $0x58] sm:$0xff]
        %v2356 = vld [vmem:[%s703 + $0x60] sm:$0xff]
        %v2357 = vld [vmem:[%s703 + $0x68] sm:$0xff]
        %v2358 = vld [vmem:[%s703 + $0x70] sm:$0xff]
        %v2359 = vld [vmem:[%s703 + $0x78] sm:$0xff]
        %v2360 = vld [vmem:[%s703 + $0x80] sm:$0xff]
        %v2361 = vld [vmem:[%s703 + $0x88] sm:$0xff]
        %v2362 = vld [vmem:[%s703 + $0x90] sm:$0xff]
        %v2363 = vld [vmem:[%s703 + $0x98] sm:$0xff]
        %v2364 = vld [vmem:[%s703 + $0xa0] sm:$0xff]
        %v2365 = vld [vmem:[%s703 + $0xa8] sm:$0xff]
        %v2366 = vld [vmem:[%s703 + $0xb0] sm:$0xff]
        %v2367 = vld [vmem:[%s703 + $0xb8] sm:$0xff]
        %v2368 = vld [vmem:[%s703 + $0xc0] sm:$0xff]
        %v2369 = vld [vmem:[%s703 + $0xc8] sm:$0xff]
        %v2370 = vld [vmem:[%s703 + $0xd0] sm:$0xff]
        %v2371 = vld [vmem:[%s703 + $0xd8] sm:$0xff]
        %v2372 = vld [vmem:[%s703 + $0xe0] sm:$0xff]
        %v2373 = vld [vmem:[%s703 + $0xe8] sm:$0xff]
        %v2374 = vld [vmem:[%s703 + $0xf0] sm:$0xff]
        %v2375 = vld [vmem:[%s703 + $0xf8] sm:$0xff]
        %v2376 = vld [vmem:[%s703 + $0x100] sm:$0xff]
        %v2377 = vld [vmem:[%s703 + $0x108] sm:$0xff]
        %v2378 = vld [vmem:[%s703 + $0x110] sm:$0xff]
        %v2379 = vld [vmem:[%s703 + $0x118] sm:$0xff]
        %v2380 = vld [vmem:[%s703 + $0x120] sm:$0xff]
        %v2381 = vld [vmem:[%s703 + $0x128] sm:$0xff]
        %v2382 = vld [vmem:[%s703 + $0x130] sm:$0xff]
        %v2383 = vld [vmem:[%s703 + $0x138] sm:$0xff]
        %v2384 = vld [vmem:[%s703 + $0x140] sm:$0xff]
        %v2385 = vld [vmem:[%s703 + $0x148] sm:$0xff]
        %v2386 = vld [vmem:[%s703 + $0x150] sm:$0xff]
        %v2387 = vld [vmem:[%s703 + $0x158] sm:$0xff]
        %v2388 = vld [vmem:[%s703 + $0x160] sm:$0xff]
        %v2389 = vld [vmem:[%s703 + $0x168] sm:$0xff]
        %v2390 = vld [vmem:[%s703 + $0x170] sm:$0xff]
        %v2391 = vld [vmem:[%s703 + $0x178] sm:$0xff]
        %v2392 = vld [vmem:[%s703 + $0x180] sm:$0xff]
        %v2393 = vld [vmem:[%s703 + $0x188] sm:$0xff]
        %v2394 = vld [vmem:[%s703 + $0x190] sm:$0xff]
        %v2395 = vld [vmem:[%s703 + $0x198] sm:$0xff]
        %v2396 = vld [vmem:[%s703 + $0x1a0] sm:$0xff]
        %v2397 = vld [vmem:[%s703 + $0x1a8] sm:$0xff]
        %v2398 = vld [vmem:[%s703 + $0x1b0] sm:$0xff]
        %v2399 = vld [vmem:[%s703 + $0x1b8] sm:$0xff]
        %v2400 = vld [vmem:[%s703 + $0x1c0] sm:$0xff]
        %v2401 = vld [vmem:[%s703 + $0x1c8] sm:$0xff]
        %v2402 = vld [vmem:[%s703 + $0x1d0] sm:$0xff]
        %v2403 = vld [vmem:[%s703 + $0x1d8] sm:$0xff]
        %v2404 = vld [vmem:[%s703 + $0x1e0] sm:$0xff]
        %v2405 = vld [vmem:[%s703 + $0x1e8] sm:$0xff]
        %v2406 = vld [vmem:[%s703 + $0x1f0] sm:$0xff]
        %v2407 = vld [vmem:[%s703 + $0x1f8] sm:$0xff]
        %v2408 = vld [vmem:[%s703 + $0x200] sm:$0xff]
        %v2409 = vld [vmem:[%s703 + $0x208] sm:$0xff]
        %v2410 = vld [vmem:[%s703 + $0x210] sm:$0xff]
        %v2411 = vld [vmem:[%s703 + $0x218] sm:$0xff]
        %v2412 = vld [vmem:[%s703 + $0x220] sm:$0xff]
        %v2413 = vld [vmem:[%s703 + $0x228] sm:$0xff]
        %v2414 = vld [vmem:[%s703 + $0x230] sm:$0xff]
        %v2415 = vld [vmem:[%s703 + $0x238] sm:$0xff]
        %v2416 = vld [vmem:[%s703 + $0x240] sm:$0xff]
        %v2417 = vld [vmem:[%s703 + $0x248] sm:$0xff]
        %v2418 = vld [vmem:[%s703 + $0x250] sm:$0xff]
        %v2419 = vld [vmem:[%s703 + $0x258] sm:$0xff]
        %v2420 = vld [vmem:[%s703 + $0x260] sm:$0xff]
        %v2421 = vld [vmem:[%s703 + $0x268] sm:$0xff]
        %v2422 = vld [vmem:[%s703 + $0x270] sm:$0xff]
        %v2423 = vld [vmem:[%s703 + $0x278] sm:$0xff]
        %v2424 = vld [vmem:[%s703 + $0x280] sm:$0xff]
        %v2425 = vld [vmem:[%s703 + $0x288] sm:$0xff]
        %v2426 = vld [vmem:[%s703 + $0x290] sm:$0xff]
        %v2427 = vld [vmem:[%s703 + $0x298] sm:$0xff]
        %v2428 = vld [vmem:[%s703 + $0x2a0] sm:$0xff]
        %v2429 = vld [vmem:[%s703 + $0x2a8] sm:$0xff]
        %v2430 = vld [vmem:[%s703 + $0x2b0] sm:$0xff]
        %v2431 = vld [vmem:[%s703 + $0x2b8] sm:$0xff]
        %v2432 = vld [vmem:[%s703 + $0x2c0] sm:$0xff]
        %v2433 = vld [vmem:[%s703 + $0x2c8] sm:$0xff]
        %v2434 = vld [vmem:[%s703 + $0x2d0] sm:$0xff]
        %v2435 = vld [vmem:[%s703 + $0x2d8] sm:$0xff]
        %v2436 = vld [vmem:[%s703 + $0x2e0] sm:$0xff]
        %v2437 = vld [vmem:[%s703 + $0x2e8] sm:$0xff]
        %v2438 = vld [vmem:[%s703 + $0x2f0] sm:$0xff]
        %v2439 = vld [vmem:[%s703 + $0x2f8] sm:$0xff]
        %v2440 = vld [vmem:[%s703 + $0x300] sm:$0xff]
        %v2441 = vld [vmem:[%s703 + $0x308] sm:$0xff]
        %v2442 = vld [vmem:[%s703 + $0x310] sm:$0xff]
        %v2443 = vld [vmem:[%s703 + $0x318] sm:$0xff]
        %v2444 = vld [vmem:[%s703 + $0x320] sm:$0xff]
        %v2445 = vld [vmem:[%s703 + $0x328] sm:$0xff]
        %v2446 = vld [vmem:[%s703 + $0x330] sm:$0xff]
        %v2447 = vld [vmem:[%s703 + $0x338] sm:$0xff]
        %v2448 = vld [vmem:[%s703 + $0x340] sm:$0xff]
        %v2449 = vld [vmem:[%s703 + $0x348] sm:$0xff]
        %v2450 = vld [vmem:[%s703 + $0x350] sm:$0xff]
        %v2451 = vld [vmem:[%s703 + $0x358] sm:$0xff]
        %v2452 = vld [vmem:[%s703 + $0x360] sm:$0xff]
        %v2453 = vld [vmem:[%s703 + $0x368] sm:$0xff]
        %v2454 = vld [vmem:[%s703 + $0x370] sm:$0xff]
        %v2455 = vld [vmem:[%s703 + $0x378] sm:$0xff]
        %v2456 = vld [vmem:[%s703 + $0x380] sm:$0xff]
        %v2457 = vld [vmem:[%s703 + $0x388] sm:$0xff]
        %v2458 = vld [vmem:[%s703 + $0x390] sm:$0xff]
        %v2459 = vld [vmem:[%s703 + $0x398] sm:$0xff]
        %v2460 = vld [vmem:[%s703 + $0x3a0] sm:$0xff]
        %v2461 = vld [vmem:[%s703 + $0x3a8] sm:$0xff]
        %v2462 = vld [vmem:[%s703 + $0x3b0] sm:$0xff]
        %v2463 = vld [vmem:[%s703 + $0x3b8] sm:$0xff]
        %v2464 = vld [vmem:[%s703 + $0x3c0] sm:$0xff]
        %v2465 = vld [vmem:[%s703 + $0x3c8] sm:$0xff]
        %v2466 = vld [vmem:[%s703 + $0x3d0] sm:$0xff]
        %v2467 = vld [vmem:[%s703 + $0x3d8] sm:$0xff]
        %v2468 = vld [vmem:[%s703 + $0x3e0] sm:$0xff]
        %v2469 = vld [vmem:[%s703 + $0x3e8] sm:$0xff]
        %v2470 = vld [vmem:[%s703 + $0x3f0] sm:$0xff]
        %v2471 = vld [vmem:[%s703 + $0x3f8] sm:$0xff]
        %v2472 = vld [vmem:[%s853] sm:$0xff]
        %v2474 = vlaneseq
        %v2475 = vshrl.u32 %v2474, 7
        %v2476 = vsub.s32 0, %v2475
        %v2477 = vrot.slane %v2472, %v2476
        %v2478 = vlaneseq
        %v2479 = vshrl.u32 %v2478, 7
        %v2480 = vsub.s32 1, %v2479
        %v2481 = vrot.slane %v2472, %v2480
        %v2482 = vlaneseq
        %v2483 = vshrl.u32 %v2482, 7
        %v2484 = vsub.s32 2, %v2483
        %v2485 = vrot.slane %v2472, %v2484
        %v2486 = vlaneseq
        %v2487 = vshrl.u32 %v2486, 7
        %v2488 = vsub.s32 3, %v2487
        %v2489 = vrot.slane %v2472, %v2488
        %v2490 = vlaneseq
        %v2491 = vshrl.u32 %v2490, 7
        %v2492 = vsub.s32 4, %v2491
        %v2493 = vrot.slane %v2472, %v2492
        %v2494 = vlaneseq
        %v2495 = vshrl.u32 %v2494, 7
        %v2496 = vsub.s32 5, %v2495
        %v2497 = vrot.slane %v2472, %v2496
        %v2498 = vlaneseq
        %v2499 = vshrl.u32 %v2498, 7
        %v2500 = vsub.s32 6, %v2499
        %v2501 = vrot.slane %v2472, %v2500
        %v2502 = vlaneseq
        %v2503 = vshrl.u32 %v2502, 7
        %v2504 = vsub.s32 7, %v2503
        %v2505 = vrot.slane %v2472, %v2504
        %v2642 = vunpack.c.l.b16 %v2344
        %v2643 = vunpack.c.h.b16 %v2344
        %v2644 = vunpack.c.l.b16 %v2345
        %v2645 = vunpack.c.h.b16 %v2345
        %v2646 = vunpack.c.l.b16 %v2346
        %v2647 = vunpack.c.h.b16 %v2346
        %v2648 = vunpack.c.l.b16 %v2347
        %v2649 = vunpack.c.h.b16 %v2347
        %v2650 = vunpack.c.l.b16 %v2348
        %v2651 = vunpack.c.h.b16 %v2348
        %v2652 = vunpack.c.l.b16 %v2349
        %v2653 = vunpack.c.h.b16 %v2349
        %v2654 = vunpack.c.l.b16 %v2350
        %v2655 = vunpack.c.h.b16 %v2350
        %v2656 = vunpack.c.l.b16 %v2351
        %v2657 = vunpack.c.h.b16 %v2351
        %v2658 = vunpack.c.l.b16 %v2352
        %v2659 = vunpack.c.h.b16 %v2352
        %v2660 = vunpack.c.l.b16 %v2353
        %v2661 = vunpack.c.h.b16 %v2353
        %v2662 = vunpack.c.l.b16 %v2354
        %v2663 = vunpack.c.h.b16 %v2354
        %v2664 = vunpack.c.l.b16 %v2355
        %v2665 = vunpack.c.h.b16 %v2355
        %v2666 = vunpack.c.l.b16 %v2356
        %v2667 = vunpack.c.h.b16 %v2356
        %v2668 = vunpack.c.l.b16 %v2357
        %v2669 = vunpack.c.h.b16 %v2357
        %v2670 = vunpack.c.l.b16 %v2358
        %v2671 = vunpack.c.h.b16 %v2358
        %v2672 = vunpack.c.l.b16 %v2359
        %v2673 = vunpack.c.h.b16 %v2359
        %v2674 = vunpack.c.l.b16 %v2360
        %v2675 = vunpack.c.h.b16 %v2360
        %v2676 = vunpack.c.l.b16 %v2361
        %v2677 = vunpack.c.h.b16 %v2361
        %v2678 = vunpack.c.l.b16 %v2362
        %v2679 = vunpack.c.h.b16 %v2362
        %v2680 = vunpack.c.l.b16 %v2363
        %v2681 = vunpack.c.h.b16 %v2363
        %v2682 = vunpack.c.l.b16 %v2364
        %v2683 = vunpack.c.h.b16 %v2364
        %v2684 = vunpack.c.l.b16 %v2365
        %v2685 = vunpack.c.h.b16 %v2365
        %v2686 = vunpack.c.l.b16 %v2366
        %v2687 = vunpack.c.h.b16 %v2366
        %v2688 = vunpack.c.l.b16 %v2367
        %v2689 = vunpack.c.h.b16 %v2367
        %v2690 = vunpack.c.l.b16 %v2368
        %v2691 = vunpack.c.h.b16 %v2368
        %v2692 = vunpack.c.l.b16 %v2369
        %v2693 = vunpack.c.h.b16 %v2369
        %v2694 = vunpack.c.l.b16 %v2370
        %v2695 = vunpack.c.h.b16 %v2370
        %v2696 = vunpack.c.l.b16 %v2371
        %v2697 = vunpack.c.h.b16 %v2371
        %v2698 = vunpack.c.l.b16 %v2372
        %v2699 = vunpack.c.h.b16 %v2372
        %v2700 = vunpack.c.l.b16 %v2373
        %v2701 = vunpack.c.h.b16 %v2373
        %v2702 = vunpack.c.l.b16 %v2374
        %v2703 = vunpack.c.h.b16 %v2374
        %v2704 = vunpack.c.l.b16 %v2375
        %v2705 = vunpack.c.h.b16 %v2375
        %v2706 = vunpack.c.l.b16 %v2376
        %v2707 = vunpack.c.h.b16 %v2376
        %v2708 = vunpack.c.l.b16 %v2377
        %v2709 = vunpack.c.h.b16 %v2377
        %v2710 = vunpack.c.l.b16 %v2378
        %v2711 = vunpack.c.h.b16 %v2378
        %v2712 = vunpack.c.l.b16 %v2379
        %v2713 = vunpack.c.h.b16 %v2379
        %v2714 = vunpack.c.l.b16 %v2380
        %v2715 = vunpack.c.h.b16 %v2380
        %v2716 = vunpack.c.l.b16 %v2381
        %v2717 = vunpack.c.h.b16 %v2381
        %v2718 = vunpack.c.l.b16 %v2382
        %v2719 = vunpack.c.h.b16 %v2382
        %v2720 = vunpack.c.l.b16 %v2383
        %v2721 = vunpack.c.h.b16 %v2383
        %v2722 = vunpack.c.l.b16 %v2384
        %v2723 = vunpack.c.h.b16 %v2384
        %v2724 = vunpack.c.l.b16 %v2385
        %v2725 = vunpack.c.h.b16 %v2385
        %v2726 = vunpack.c.l.b16 %v2386
        %v2727 = vunpack.c.h.b16 %v2386
        %v2728 = vunpack.c.l.b16 %v2387
        %v2729 = vunpack.c.h.b16 %v2387
        %v2730 = vunpack.c.l.b16 %v2388
        %v2731 = vunpack.c.h.b16 %v2388
        %v2732 = vunpack.c.l.b16 %v2389
        %v2733 = vunpack.c.h.b16 %v2389
        %v2734 = vunpack.c.l.b16 %v2390
        %v2735 = vunpack.c.h.b16 %v2390
        %v2736 = vunpack.c.l.b16 %v2391
        %v2737 = vunpack.c.h.b16 %v2391
        %v2738 = vunpack.c.l.b16 %v2392
        %v2739 = vunpack.c.h.b16 %v2392
        %v2740 = vunpack.c.l.b16 %v2393
        %v2741 = vunpack.c.h.b16 %v2393
        %v2742 = vunpack.c.l.b16 %v2394
        %v2743 = vunpack.c.h.b16 %v2394
        %v2744 = vunpack.c.l.b16 %v2395
        %v2745 = vunpack.c.h.b16 %v2395
        %v2746 = vunpack.c.l.b16 %v2396
        %v2747 = vunpack.c.h.b16 %v2396
        %v2748 = vunpack.c.l.b16 %v2397
        %v2749 = vunpack.c.h.b16 %v2397
        %v2750 = vunpack.c.l.b16 %v2398
        %v2751 = vunpack.c.h.b16 %v2398
        %v2752 = vunpack.c.l.b16 %v2399
        %v2753 = vunpack.c.h.b16 %v2399
        %v2754 = vunpack.c.l.b16 %v2400
        %v2755 = vunpack.c.h.b16 %v2400
        %v2756 = vunpack.c.l.b16 %v2401
        %v2757 = vunpack.c.h.b16 %v2401
        %v2758 = vunpack.c.l.b16 %v2402
        %v2759 = vunpack.c.h.b16 %v2402
        %v2760 = vunpack.c.l.b16 %v2403
        %v2761 = vunpack.c.h.b16 %v2403
        %v2762 = vunpack.c.l.b16 %v2404
        %v2763 = vunpack.c.h.b16 %v2404
        %v2764 = vunpack.c.l.b16 %v2405
        %v2765 = vunpack.c.h.b16 %v2405
        %v2766 = vunpack.c.l.b16 %v2406
        %v2767 = vunpack.c.h.b16 %v2406
        %v2768 = vunpack.c.l.b16 %v2407
        %v2769 = vunpack.c.h.b16 %v2407
        %v2770 = vunpack.c.l.b16 %v2408
        %v2771 = vunpack.c.h.b16 %v2408
        %v2772 = vunpack.c.l.b16 %v2409
        %v2773 = vunpack.c.h.b16 %v2409
        %v2774 = vunpack.c.l.b16 %v2410
        %v2775 = vunpack.c.h.b16 %v2410
        %v2776 = vunpack.c.l.b16 %v2411
        %v2777 = vunpack.c.h.b16 %v2411
        %v2778 = vunpack.c.l.b16 %v2412
        %v2779 = vunpack.c.h.b16 %v2412
        %v2780 = vunpack.c.l.b16 %v2413
        %v2781 = vunpack.c.h.b16 %v2413
        %v2782 = vunpack.c.l.b16 %v2414
        %v2783 = vunpack.c.h.b16 %v2414
        %v2784 = vunpack.c.l.b16 %v2415
        %v2785 = vunpack.c.h.b16 %v2415
        %v2786 = vunpack.c.l.b16 %v2416
        %v2787 = vunpack.c.h.b16 %v2416
        %v2788 = vunpack.c.l.b16 %v2417
        %v2789 = vunpack.c.h.b16 %v2417
        %v2790 = vunpack.c.l.b16 %v2418
        %v2791 = vunpack.c.h.b16 %v2418
        %v2792 = vunpack.c.l.b16 %v2419
        %v2793 = vunpack.c.h.b16 %v2419
        %v2794 = vunpack.c.l.b16 %v2420
        %v2795 = vunpack.c.h.b16 %v2420
        %v2796 = vunpack.c.l.b16 %v2421
        %v2797 = vunpack.c.h.b16 %v2421
        %v2798 = vunpack.c.l.b16 %v2422
        %v2799 = vunpack.c.h.b16 %v2422
        %v2800 = vunpack.c.l.b16 %v2423
        %v2801 = vunpack.c.h.b16 %v2423
        %v2802 = vunpack.c.l.b16 %v2424
        %v2803 = vunpack.c.h.b16 %v2424
        %v2804 = vunpack.c.l.b16 %v2425
        %v2805 = vunpack.c.h.b16 %v2425
        %v2806 = vunpack.c.l.b16 %v2426
        %v2807 = vunpack.c.h.b16 %v2426
        %v2808 = vunpack.c.l.b16 %v2427
        %v2809 = vunpack.c.h.b16 %v2427
        %v2810 = vunpack.c.l.b16 %v2428
        %v2811 = vunpack.c.h.b16 %v2428
        %v2812 = vunpack.c.l.b16 %v2429
        %v2813 = vunpack.c.h.b16 %v2429
        %v2814 = vunpack.c.l.b16 %v2430
        %v2815 = vunpack.c.h.b16 %v2430
        %v2816 = vunpack.c.l.b16 %v2431
        %v2817 = vunpack.c.h.b16 %v2431
        %v2818 = vunpack.c.l.b16 %v2432
        %v2819 = vunpack.c.h.b16 %v2432
        %v2820 = vunpack.c.l.b16 %v2433
        %v2821 = vunpack.c.h.b16 %v2433
        %v2822 = vunpack.c.l.b16 %v2434
        %v2823 = vunpack.c.h.b16 %v2434
        %v2824 = vunpack.c.l.b16 %v2435
        %v2825 = vunpack.c.h.b16 %v2435
        %v2826 = vunpack.c.l.b16 %v2436
        %v2827 = vunpack.c.h.b16 %v2436
        %v2828 = vunpack.c.l.b16 %v2437
        %v2829 = vunpack.c.h.b16 %v2437
        %v2830 = vunpack.c.l.b16 %v2438
        %v2831 = vunpack.c.h.b16 %v2438
        %v2832 = vunpack.c.l.b16 %v2439
        %v2833 = vunpack.c.h.b16 %v2439
        %v2834 = vunpack.c.l.b16 %v2440
        %v2835 = vunpack.c.h.b16 %v2440
        %v2836 = vunpack.c.l.b16 %v2441
        %v2837 = vunpack.c.h.b16 %v2441
        %v2838 = vunpack.c.l.b16 %v2442
        %v2839 = vunpack.c.h.b16 %v2442
        %v2840 = vunpack.c.l.b16 %v2443
        %v2841 = vunpack.c.h.b16 %v2443
        %v2842 = vunpack.c.l.b16 %v2444
        %v2843 = vunpack.c.h.b16 %v2444
        %v2844 = vunpack.c.l.b16 %v2445
        %v2845 = vunpack.c.h.b16 %v2445
        %v2846 = vunpack.c.l.b16 %v2446
        %v2847 = vunpack.c.h.b16 %v2446
        %v2848 = vunpack.c.l.b16 %v2447
        %v2849 = vunpack.c.h.b16 %v2447
        %v2850 = vunpack.c.l.b16 %v2448
        %v2851 = vunpack.c.h.b16 %v2448
        %v2852 = vunpack.c.l.b16 %v2449
        %v2853 = vunpack.c.h.b16 %v2449
        %v2854 = vunpack.c.l.b16 %v2450
        %v2855 = vunpack.c.h.b16 %v2450
        %v2856 = vunpack.c.l.b16 %v2451
        %v2857 = vunpack.c.h.b16 %v2451
        %v2858 = vunpack.c.l.b16 %v2452
        %v2859 = vunpack.c.h.b16 %v2452
        %v2860 = vunpack.c.l.b16 %v2453
        %v2861 = vunpack.c.h.b16 %v2453
        %v2862 = vunpack.c.l.b16 %v2454
        %v2863 = vunpack.c.h.b16 %v2454
        %v2864 = vunpack.c.l.b16 %v2455
        %v2865 = vunpack.c.h.b16 %v2455
        %v2866 = vunpack.c.l.b16 %v2456
        %v2867 = vunpack.c.h.b16 %v2456
        %v2868 = vunpack.c.l.b16 %v2457
        %v2869 = vunpack.c.h.b16 %v2457
        %v2870 = vunpack.c.l.b16 %v2458
        %v2871 = vunpack.c.h.b16 %v2458
        %v2872 = vunpack.c.l.b16 %v2459
        %v2873 = vunpack.c.h.b16 %v2459
        %v2874 = vunpack.c.l.b16 %v2460
        %v2875 = vunpack.c.h.b16 %v2460
        %v2876 = vunpack.c.l.b16 %v2461
        %v2877 = vunpack.c.h.b16 %v2461
        %v2878 = vunpack.c.l.b16 %v2462
        %v2879 = vunpack.c.h.b16 %v2462
        %v2880 = vunpack.c.l.b16 %v2463
        %v2881 = vunpack.c.h.b16 %v2463
        %v2882 = vunpack.c.l.b16 %v2464
        %v2883 = vunpack.c.h.b16 %v2464
        %v2884 = vunpack.c.l.b16 %v2465
        %v2885 = vunpack.c.h.b16 %v2465
        %v2886 = vunpack.c.l.b16 %v2466
        %v2887 = vunpack.c.h.b16 %v2466
        %v2888 = vunpack.c.l.b16 %v2467
        %v2889 = vunpack.c.h.b16 %v2467
        %v2890 = vunpack.c.l.b16 %v2468
        %v2891 = vunpack.c.h.b16 %v2468
        %v2892 = vunpack.c.l.b16 %v2469
        %v2893 = vunpack.c.h.b16 %v2469
        %v2894 = vunpack.c.l.b16 %v2470
        %v2895 = vunpack.c.h.b16 %v2470
        %v2896 = vunpack.c.l.b16 %v2471
        %v2897 = vunpack.c.h.b16 %v2471
        %v2898 = vpack.c.b16 %v2650, %v2642
        %v2899 = vpack.c.b16 %v2651, %v2643
        %v2900 = vpack.c.b16 %v2652, %v2644
        %v2901 = vpack.c.b16 %v2653, %v2645
        %v2902 = vpack.c.b16 %v2654, %v2646
        %v2903 = vpack.c.b16 %v2655, %v2647
        %v2904 = vpack.c.b16 %v2656, %v2648
        %v2905 = vpack.c.b16 %v2657, %v2649
        %v2906 = vpack.c.b16 %v2666, %v2658
        %v2907 = vpack.c.b16 %v2667, %v2659
        %v2908 = vpack.c.b16 %v2668, %v2660
        %v2909 = vpack.c.b16 %v2669, %v2661
        %v2910 = vpack.c.b16 %v2670, %v2662
        %v2911 = vpack.c.b16 %v2671, %v2663
        %v2912 = vpack.c.b16 %v2672, %v2664
        %v2913 = vpack.c.b16 %v2673, %v2665
        %v2914 = vpack.c.b16 %v2682, %v2674
        %v2915 = vpack.c.b16 %v2683, %v2675
        %v2916 = vpack.c.b16 %v2684, %v2676
        %v2917 = vpack.c.b16 %v2685, %v2677
        %v2918 = vpack.c.b16 %v2686, %v2678
        %v2919 = vpack.c.b16 %v2687, %v2679
        %v2920 = vpack.c.b16 %v2688, %v2680
        %v2921 = vpack.c.b16 %v2689, %v2681
        %v2922 = vpack.c.b16 %v2698, %v2690
        %v2923 = vpack.c.b16 %v2699, %v2691
        %v2924 = vpack.c.b16 %v2700, %v2692
        %v2925 = vpack.c.b16 %v2701, %v2693
        %v2926 = vpack.c.b16 %v2702, %v2694
        %v2927 = vpack.c.b16 %v2703, %v2695
        %v2928 = vpack.c.b16 %v2704, %v2696
        %v2929 = vpack.c.b16 %v2705, %v2697
        %v2930 = vpack.c.b16 %v2714, %v2706
        %v2931 = vpack.c.b16 %v2715, %v2707
        %v2932 = vpack.c.b16 %v2716, %v2708
        %v2933 = vpack.c.b16 %v2717, %v2709
        %v2934 = vpack.c.b16 %v2718, %v2710
        %v2935 = vpack.c.b16 %v2719, %v2711
        %v2936 = vpack.c.b16 %v2720, %v2712
        %v2937 = vpack.c.b16 %v2721, %v2713
        %v2938 = vpack.c.b16 %v2730, %v2722
        %v2939 = vpack.c.b16 %v2731, %v2723
        %v2940 = vpack.c.b16 %v2732, %v2724
        %v2941 = vpack.c.b16 %v2733, %v2725
        %v2942 = vpack.c.b16 %v2734, %v2726
        %v2943 = vpack.c.b16 %v2735, %v2727
        %v2944 = vpack.c.b16 %v2736, %v2728
        %v2945 = vpack.c.b16 %v2737, %v2729
        %v2946 = vpack.c.b16 %v2746, %v2738
        %v2947 = vpack.c.b16 %v2747, %v2739
        %v2948 = vpack.c.b16 %v2748, %v2740
        %v2949 = vpack.c.b16 %v2749, %v2741
        %v2950 = vpack.c.b16 %v2750, %v2742
        %v2951 = vpack.c.b16 %v2751, %v2743
        %v2952 = vpack.c.b16 %v2752, %v2744
        %v2953 = vpack.c.b16 %v2753, %v2745
        %v2954 = vpack.c.b16 %v2762, %v2754
        %v2955 = vpack.c.b16 %v2763, %v2755
        %v2956 = vpack.c.b16 %v2764, %v2756
        %v2957 = vpack.c.b16 %v2765, %v2757
        %v2958 = vpack.c.b16 %v2766, %v2758
        %v2959 = vpack.c.b16 %v2767, %v2759
        %v2960 = vpack.c.b16 %v2768, %v2760
        %v2961 = vpack.c.b16 %v2769, %v2761
        %v2962 = vpack.c.b16 %v2778, %v2770
        %v2963 = vpack.c.b16 %v2779, %v2771
        %v2964 = vpack.c.b16 %v2780, %v2772
        %v2965 = vpack.c.b16 %v2781, %v2773
        %v2966 = vpack.c.b16 %v2782, %v2774
        %v2967 = vpack.c.b16 %v2783, %v2775
        %v2968 = vpack.c.b16 %v2784, %v2776
        %v2969 = vpack.c.b16 %v2785, %v2777
        %v2970 = vpack.c.b16 %v2794, %v2786
        %v2971 = vpack.c.b16 %v2795, %v2787
        %v2972 = vpack.c.b16 %v2796, %v2788
        %v2973 = vpack.c.b16 %v2797, %v2789
        %v2974 = vpack.c.b16 %v2798, %v2790
        %v2975 = vpack.c.b16 %v2799, %v2791
        %v2976 = vpack.c.b16 %v2800, %v2792
        %v2977 = vpack.c.b16 %v2801, %v2793
        %v2978 = vpack.c.b16 %v2810, %v2802
        %v2979 = vpack.c.b16 %v2811, %v2803
        %v2980 = vpack.c.b16 %v2812, %v2804
        %v2981 = vpack.c.b16 %v2813, %v2805
        %v2982 = vpack.c.b16 %v2814, %v2806
        %v2983 = vpack.c.b16 %v2815, %v2807
        %v2984 = vpack.c.b16 %v2816, %v2808
        %v2985 = vpack.c.b16 %v2817, %v2809
        %v2986 = vpack.c.b16 %v2826, %v2818
        %v2987 = vpack.c.b16 %v2827, %v2819
        %v2988 = vpack.c.b16 %v2828, %v2820
        %v2989 = vpack.c.b16 %v2829, %v2821
        %v2990 = vpack.c.b16 %v2830, %v2822
        %v2991 = vpack.c.b16 %v2831, %v2823
        %v2992 = vpack.c.b16 %v2832, %v2824
        %v2993 = vpack.c.b16 %v2833, %v2825
        %v2994 = vpack.c.b16 %v2842, %v2834
        %v2995 = vpack.c.b16 %v2843, %v2835
        %v2996 = vpack.c.b16 %v2844, %v2836
        %v2997 = vpack.c.b16 %v2845, %v2837
        %v2998 = vpack.c.b16 %v2846, %v2838
        %v2999 = vpack.c.b16 %v2847, %v2839
        %v3000 = vpack.c.b16 %v2848, %v2840
        %v3001 = vpack.c.b16 %v2849, %v2841
        %v3002 = vpack.c.b16 %v2858, %v2850
        %v3003 = vpack.c.b16 %v2859, %v2851
        %v3004 = vpack.c.b16 %v2860, %v2852
        %v3005 = vpack.c.b16 %v2861, %v2853
        %v3006 = vpack.c.b16 %v2862, %v2854
        %v3007 = vpack.c.b16 %v2863, %v2855
        %v3008 = vpack.c.b16 %v2864, %v2856
        %v3009 = vpack.c.b16 %v2865, %v2857
        %v3010 = vpack.c.b16 %v2874, %v2866
        %v3011 = vpack.c.b16 %v2875, %v2867
        %v3012 = vpack.c.b16 %v2876, %v2868
        %v3013 = vpack.c.b16 %v2877, %v2869
        %v3014 = vpack.c.b16 %v2878, %v2870
        %v3015 = vpack.c.b16 %v2879, %v2871
        %v3016 = vpack.c.b16 %v2880, %v2872
        %v3017 = vpack.c.b16 %v2881, %v2873
        %v3018 = vpack.c.b16 %v2890, %v2882
        %v3019 = vpack.c.b16 %v2891, %v2883
        %v3020 = vpack.c.b16 %v2892, %v2884
        %v3021 = vpack.c.b16 %v2893, %v2885
        %v3022 = vpack.c.b16 %v2894, %v2886
        %v3023 = vpack.c.b16 %v2895, %v2887
        %v3024 = vpack.c.b16 %v2896, %v2888
        %v3025 = vpack.c.b16 %v2897, %v2889
        %3154 = vmatprep.subr.bf16.mxu0 %v2899
        %3155 = vmatpush1.bf16.msra.mxu0 %v2898
        %3156 = vmatprep.subr.bf16.mxu0 %v2907
        %3157 = vmatpush1.bf16.msra.mxu0 %v2906
        %3158 = vmatprep.subr.bf16.mxu0 %v2915
        %3159 = vmatpush1.bf16.msra.mxu0 %v2914
        %3160 = vmatprep.subr.bf16.mxu0 %v2923
        %3161 = vmatpush1.bf16.msra.mxu0 %v2922
        %3162 = vmatprep.subr.bf16.mxu0 %v2931
        %3163 = vmatpush1.bf16.msra.mxu0 %v2930
        %3164 = vmatprep.subr.bf16.mxu0 %v2939
        %3165 = vmatpush1.bf16.msra.mxu0 %v2938
        %3166 = vmatprep.subr.bf16.mxu0 %v2947
        %3167 = vmatpush1.bf16.msra.mxu0 %v2946
        %3168 = vmatprep.subr.bf16.mxu0 %v2955
        %3169 = vmatpush1.bf16.msra.mxu0 %v2954
        %3170 = vmatprep.subr.bf16.mxu0 %v2963
        %3171 = vmatpush1.bf16.msra.mxu0 %v2962
        %3172 = vmatprep.subr.bf16.mxu0 %v2971
        %3173 = vmatpush1.bf16.msra.mxu0 %v2970
        %3174 = vmatprep.subr.bf16.mxu0 %v2979
        %3175 = vmatpush1.bf16.msra.mxu0 %v2978
        %3176 = vmatprep.subr.bf16.mxu0 %v2987
        %3177 = vmatpush1.bf16.msra.mxu0 %v2986
        %3178 = vmatprep.subr.bf16.mxu0 %v2995
        %3179 = vmatpush1.bf16.msra.mxu0 %v2994
        %3180 = vmatprep.subr.bf16.mxu0 %v3003
        %3181 = vmatpush1.bf16.msra.mxu0 %v3002
        %3182 = vmatprep.subr.bf16.mxu0 %v3011
        %3183 = vmatpush1.bf16.msra.mxu0 %v3010
        %3184 = vmatprep.subr.bf16.mxu0 %v3019
        %3185 = vmatpush1.bf16.msra.mxu0 %v3018
        %3186 = vmatprep.mubr.bf16.mxu0 %v2343
        %3187 = vmatmul.mubr.bf16.gmra.mrb[0].mxu0 %v2342
        %v3188 = vpop.f32.mrb[0].mxu0
        %v3189 = vadd.f32 %v2477, %v3188
        %v3190 = vpop.f32.mrb[0].mxu0
        %v3191 = vadd.f32 %v2481, %v3190
        %v3192 = vpop.f32.mrb[0].mxu0
        %v3193 = vadd.f32 %v2477, %v3192
        %v3194 = vpop.f32.mrb[0].mxu0
        %v3195 = vadd.f32 %v2481, %v3194
        %3196 = vdwg.mxu0
        %3197 = vmatprep.subr.bf16.mxu0 %v2901
        %3198 = vmatpush1.bf16.msra.mxu0 %v2900
        %3199 = vmatprep.subr.bf16.mxu0 %v2909
        %3200 = vmatpush1.bf16.msra.mxu0 %v2908
        %3201 = vmatprep.subr.bf16.mxu0 %v2917
        %3202 = vmatpush1.bf16.msra.mxu0 %v2916
        %3203 = vmatprep.subr.bf16.mxu0 %v2925
        %3204 = vmatpush1.bf16.msra.mxu0 %v2924
        %3205 = vmatprep.subr.bf16.mxu0 %v2933
        %3206 = vmatpush1.bf16.msra.mxu0 %v2932
        %3207 = vmatprep.subr.bf16.mxu0 %v2941
        %3208 = vmatpush1.bf16.msra.mxu0 %v2940
        %3209 = vmatprep.subr.bf16.mxu0 %v2949
        %3210 = vmatpush1.bf16.msra.mxu0 %v2948
        %3211 = vmatprep.subr.bf16.mxu0 %v2957
        %3212 = vmatpush1.bf16.msra.mxu0 %v2956
        %3213 = vmatprep.subr.bf16.mxu0 %v2965
        %3214 = vmatpush1.bf16.msra.mxu0 %v2964
        %3215 = vmatprep.subr.bf16.mxu0 %v2973
        %3216 = vmatpush1.bf16.msra.mxu0 %v2972
        %3217 = vmatprep.subr.bf16.mxu0 %v2981
        %3218 = vmatpush1.bf16.msra.mxu0 %v2980
        %3219 = vmatprep.subr.bf16.mxu0 %v2989
        %3220 = vmatpush1.bf16.msra.mxu0 %v2988
        %3221 = vmatprep.subr.bf16.mxu0 %v2997
        %3222 = vmatpush1.bf16.msra.mxu0 %v2996
        %3223 = vmatprep.subr.bf16.mxu0 %v3005
        %3224 = vmatpush1.bf16.msra.mxu0 %v3004
        %3225 = vmatprep.subr.bf16.mxu0 %v3013
        %3226 = vmatpush1.bf16.msra.mxu0 %v3012
        %3227 = vmatprep.subr.bf16.mxu0 %v3021
        %3228 = vmatpush1.bf16.msra.mxu0 %v3020
        %3229 = vmatprep.mubr.bf16.mxu0 %v2343
        %3230 = vmatmul.mubr.bf16.gmra.mrb[0].mxu0 %v2342
        %v3231 = vpop.f32.mrb[0].mxu0
        %v3232 = vadd.f32 %v2485, %v3231
        %v3233 = vpop.f32.mrb[0].mxu0
        %v3234 = vadd.f32 %v2489, %v3233
        %v3235 = vpop.f32.mrb[0].mxu0
        %v3236 = vadd.f32 %v2485, %v3235
        %v3237 = vpop.f32.mrb[0].mxu0
        %v3238 = vadd.f32 %v2489, %v3237
        %3239 = vdwg.mxu0
        %3240 = vmatprep.subr.bf16.mxu0 %v2903
        %3241 = vmatpush1.bf16.msra.mxu0 %v2902
        %3242 = vmatprep.subr.bf16.mxu0 %v2911
        %3243 = vmatpush1.bf16.msra.mxu0 %v2910
        %3244 = vmatprep.subr.bf16.mxu0 %v2919
        %3245 = vmatpush1.bf16.msra.mxu0 %v2918
        %3246 = vmatprep.subr.bf16.mxu0 %v2927
        %3247 = vmatpush1.bf16.msra.mxu0 %v2926
        %3248 = vmatprep.subr.bf16.mxu0 %v2935
        %3249 = vmatpush1.bf16.msra.mxu0 %v2934
        %3250 = vmatprep.subr.bf16.mxu0 %v2943
        %3251 = vmatpush1.bf16.msra.mxu0 %v2942
        %3252 = vmatprep.subr.bf16.mxu0 %v2951
        %3253 = vmatpush1.bf16.msra.mxu0 %v2950
        %3254 = vmatprep.subr.bf16.mxu0 %v2959
        %3255 = vmatpush1.bf16.msra.mxu0 %v2958
        %3256 = vmatprep.subr.bf16.mxu0 %v2967
        %3257 = vmatpush1.bf16.msra.mxu0 %v2966
        %3258 = vmatprep.subr.bf16.mxu0 %v2975
        %3259 = vmatpush1.bf16.msra.mxu0 %v2974
        %3260 = vmatprep.subr.bf16.mxu0 %v2983
        %3261 = vmatpush1.bf16.msra.mxu0 %v2982
        %3262 = vmatprep.subr.bf16.mxu0 %v2991
        %3263 = vmatpush1.bf16.msra.mxu0 %v2990
        %3264 = vmatprep.subr.bf16.mxu0 %v2999
        %3265 = vmatpush1.bf16.msra.mxu0 %v2998
        %3266 = vmatprep.subr.bf16.mxu0 %v3007
        %3267 = vmatpush1.bf16.msra.mxu0 %v3006
        %3268 = vmatprep.subr.bf16.mxu0 %v3015
        %3269 = vmatpush1.bf16.msra.mxu0 %v3014
        %3270 = vmatprep.subr.bf16.mxu0 %v3023
        %3271 = vmatpush1.bf16.msra.mxu0 %v3022
        %3272 = vmatprep.mubr.bf16.mxu0 %v2343
        %3273 = vmatmul.mubr.bf16.gmra.mrb[0].mxu0 %v2342
        %v3274 = vpop.f32.mrb[0].mxu0
        %v3275 = vadd.f32 %v2493, %v3274
        %v3276 = vpop.f32.mrb[0].mxu0
        %v3277 = vadd.f32 %v2497, %v3276
        %v3278 = vpop.f32.mrb[0].mxu0
        %v3279 = vadd.f32 %v2493, %v3278
        %v3280 = vpop.f32.mrb[0].mxu0
        %v3281 = vadd.f32 %v2497, %v3280
        %3282 = vdwg.mxu0
        %3283 = vmatprep.subr.bf16.mxu0 %v2905
        %3284 = vmatpush1.bf16.msra.mxu0 %v2904
        %3285 = vmatprep.subr.bf16.mxu0 %v2913
        %3286 = vmatpush1.bf16.msra.mxu0 %v2912
        %3287 = vmatprep.subr.bf16.mxu0 %v2921
        %3288 = vmatpush1.bf16.msra.mxu0 %v2920
        %3289 = vmatprep.subr.bf16.mxu0 %v2929
        %3290 = vmatpush1.bf16.msra.mxu0 %v2928
        %3291 = vmatprep.subr.bf16.mxu0 %v2937
        %3292 = vmatpush1.bf16.msra.mxu0 %v2936
        %3293 = vmatprep.subr.bf16.mxu0 %v2945
        %3294 = vmatpush1.bf16.msra.mxu0 %v2944
        %3295 = vmatprep.subr.bf16.mxu0 %v2953
        %3296 = vmatpush1.bf16.msra.mxu0 %v2952
        %3297 = vmatprep.subr.bf16.mxu0 %v2961
        %3298 = vmatpush1.bf16.msra.mxu0 %v2960
        %3299 = vmatprep.subr.bf16.mxu0 %v2969
        %3300 = vmatpush1.bf16.msra.mxu0 %v2968
        %3301 = vmatprep.subr.bf16.mxu0 %v2977
        %3302 = vmatpush1.bf16.msra.mxu0 %v2976
        %3303 = vmatprep.subr.bf16.mxu0 %v2985
        %3304 = vmatpush1.bf16.msra.mxu0 %v2984
        %3305 = vmatprep.subr.bf16.mxu0 %v2993
        %3306 = vmatpush1.bf16.msra.mxu0 %v2992
        %3307 = vmatprep.subr.bf16.mxu0 %v3001
        %3308 = vmatpush1.bf16.msra.mxu0 %v3000
        %3309 = vmatprep.subr.bf16.mxu0 %v3009
        %3310 = vmatpush1.bf16.msra.mxu0 %v3008
        %3311 = vmatprep.subr.bf16.mxu0 %v3017
        %3312 = vmatpush1.bf16.msra.mxu0 %v3016
        %3313 = vmatprep.subr.bf16.mxu0 %v3025
        %3314 = vmatpush1.bf16.msra.mxu0 %v3024
        %3315 = vmatprep.mubr.bf16.mxu0 %v2343
        %3316 = vmatmul.mubr.bf16.gmra.mrb[0].mxu0 %v2342
        %v3317 = vpop.f32.mrb[0].mxu0
        %v3318 = vadd.f32 %v2501, %v3317
        %v3319 = vpop.f32.mrb[0].mxu0
        %v3320 = vadd.f32 %v2505, %v3319
        %v3321 = vpop.f32.mrb[0].mxu0
        %v3322 = vadd.f32 %v2501, %v3321
        %v3323 = vpop.f32.mrb[0].mxu0
        %v3324 = vadd.f32 %v2505, %v3323
        %3325 = vdwg.mxu0
        %v3326 = vmul.f32 %v3189, 1.702
        %v3327 = vmul.f32 %v3191, 1.702
        %v3328 = vmul.f32 %v3232, 1.702
        %v3329 = vmul.f32 %v3234, 1.702
        %v3330 = vmul.f32 %v3275, 1.702
        %v3331 = vmul.f32 %v3277, 1.702
        %v3332 = vmul.f32 %v3318, 1.702
        %v3333 = vmul.f32 %v3320, 1.702
        %v3334 = vmul.f32 %v3193, 1.702
        %v3335 = vmul.f32 %v3195, 1.702
        %v3336 = vmul.f32 %v3236, 1.702
        %v3337 = vmul.f32 %v3238, 1.702
        %v3338 = vmul.f32 %v3279, 1.702
        %v3339 = vmul.f32 %v3281, 1.702
        %v3340 = vmul.f32 %v3322, 1.702
        %v3341 = vmul.f32 %v3324, 1.702
        %v3342 = vxor.u32 %v3326, 2147483648
        %v3343 = vxor.u32 %v3327, 2147483648
        %v3344 = vxor.u32 %v3328, 2147483648
        %v3345 = vxor.u32 %v3329, 2147483648
        %v3346 = vxor.u32 %v3330, 2147483648
        %v3347 = vxor.u32 %v3331, 2147483648
        %v3348 = vxor.u32 %v3332, 2147483648
        %v3349 = vxor.u32 %v3333, 2147483648
        %v3350 = vxor.u32 %v3334, 2147483648
        %v3351 = vxor.u32 %v3335, 2147483648
        %v3352 = vxor.u32 %v3336, 2147483648
        %v3353 = vxor.u32 %v3337, 2147483648
        %v3354 = vxor.u32 %v3338, 2147483648
        %v3355 = vxor.u32 %v3339, 2147483648
        %v3356 = vxor.u32 %v3340, 2147483648
        %v3357 = vxor.u32 %v3341, 2147483648
        %v3358 = vmul.f32 %v3342, 1.442695
        %v3359 = vpow.pop %v3358
        %v3360 = vmul.f32 %v3343, 1.442695
        %v3361 = vpow.pop %v3360
        %v3362 = vmul.f32 %v3344, 1.442695
        %v3363 = vpow.pop %v3362
        %v3364 = vmul.f32 %v3345, 1.442695
        %v3365 = vpow.pop %v3364
        %v3366 = vmul.f32 %v3346, 1.442695
        %v3367 = vpow.pop %v3366
        %v3368 = vmul.f32 %v3347, 1.442695
        %v3369 = vpow.pop %v3368
        %v3370 = vmul.f32 %v3348, 1.442695
        %v3371 = vpow.pop %v3370
        %v3372 = vmul.f32 %v3349, 1.442695
        %v3373 = vpow.pop %v3372
        %v3374 = vmul.f32 %v3350, 1.442695
        %v3375 = vpow.pop %v3374
        %v3376 = vmul.f32 %v3351, 1.442695
        %v3377 = vpow.pop %v3376
        %v3378 = vmul.f32 %v3352, 1.442695
        %v3379 = vpow.pop %v3378
        %v3380 = vmul.f32 %v3353, 1.442695
        %v3381 = vpow.pop %v3380
        %v3382 = vmul.f32 %v3354, 1.442695
        %v3383 = vpow.pop %v3382
        %v3384 = vmul.f32 %v3355, 1.442695
        %v3385 = vpow.pop %v3384
        %v3386 = vmul.f32 %v3356, 1.442695
        %v3387 = vpow.pop %v3386
        %v3388 = vmul.f32 %v3357, 1.442695
        %v3389 = vpow.pop %v3388
        %v3390 = vadd.f32 %v3359, 1.0
        %v3391 = vadd.f32 %v3361, 1.0
        %v3392 = vadd.f32 %v3363, 1.0
        %v3393 = vadd.f32 %v3365, 1.0
        %v3394 = vadd.f32 %v3367, 1.0
        %v3395 = vadd.f32 %v3369, 1.0
        %v3396 = vadd.f32 %v3371, 1.0
        %v3397 = vadd.f32 %v3373, 1.0
        %v3398 = vadd.f32 %v3375, 1.0
        %v3399 = vadd.f32 %v3377, 1.0
        %v3400 = vadd.f32 %v3379, 1.0
        %v3401 = vadd.f32 %v3381, 1.0
        %v3402 = vadd.f32 %v3383, 1.0
        %v3403 = vadd.f32 %v3385, 1.0
        %v3404 = vadd.f32 %v3387, 1.0
        %v3405 = vadd.f32 %v3389, 1.0
        %v3406 = vrcp.pop %v3390
        %v3407 = vmul.f32 1.0, %v3406
        %v3408 = vrcp.pop %v3391
        %v3409 = vmul.f32 1.0, %v3408
        %v3410 = vrcp.pop %v3392
        %v3411 = vmul.f32 1.0, %v3410
        %v3412 = vrcp.pop %v3393
        %v3413 = vmul.f32 1.0, %v3412
        %v3414 = vrcp.pop %v3394
        %v3415 = vmul.f32 1.0, %v3414
        %v3416 = vrcp.pop %v3395
        %v3417 = vmul.f32 1.0, %v3416
        %v3418 = vrcp.pop %v3396
        %v3419 = vmul.f32 1.0, %v3418
        %v3420 = vrcp.pop %v3397
        %v3421 = vmul.f32 1.0, %v3420
        %v3422 = vrcp.pop %v3398
        %v3423 = vmul.f32 1.0, %v3422
        %v3424 = vrcp.pop %v3399
        %v3425 = vmul.f32 1.0, %v3424
        %v3426 = vrcp.pop %v3400
        %v3427 = vmul.f32 1.0, %v3426
        %v3428 = vrcp.pop %v3401
        %v3429 = vmul.f32 1.0, %v3428
        %v3430 = vrcp.pop %v3402
        %v3431 = vmul.f32 1.0, %v3430
        %v3432 = vrcp.pop %v3403
        %v3433 = vmul.f32 1.0, %v3432
        %v3434 = vrcp.pop %v3404
        %v3435 = vmul.f32 1.0, %v3434
        %v3436 = vrcp.pop %v3405
        %v3437 = vmul.f32 1.0, %v3436
        %v3438 = vmul.f32 %v3189, %v3407
        %v3439 = vmul.f32 %v3191, %v3409
        %v3440 = vmul.f32 %v3232, %v3411
        %v3441 = vmul.f32 %v3234, %v3413
        %v3442 = vmul.f32 %v3275, %v3415
        %v3443 = vmul.f32 %v3277, %v3417
        %v3444 = vmul.f32 %v3318, %v3419
        %v3445 = vmul.f32 %v3320, %v3421
        %v3446 = vmul.f32 %v3193, %v3423
        %v3447 = vmul.f32 %v3195, %v3425
        %v3448 = vmul.f32 %v3236, %v3427
        %v3449 = vmul.f32 %v3238, %v3429
        %v3450 = vmul.f32 %v3279, %v3431
        %v3451 = vmul.f32 %v3281, %v3433
        %v3452 = vmul.f32 %v3322, %v3435
        %v3453 = vmul.f32 %v3324, %v3437
        %v3454 = vpack.c.bf16 %v3446, %v3438
        %v3455 = vpack.c.bf16 %v3447, %v3439
        %v3456 = vpack.c.bf16 %v3448, %v3440
        %v3457 = vpack.c.bf16 %v3449, %v3441
        %v3458 = vpack.c.bf16 %v3450, %v3442
        %v3459 = vpack.c.bf16 %v3451, %v3443
        %v3460 = vpack.c.bf16 %v3452, %v3444
        %v3461 = vpack.c.bf16 %v3453, %v3445
        %v3462 = vld [vmem:[%s712] sm:$0xff]
        %v3463 = vld [vmem:[%s712 + $0x8] sm:$0xff]
        %v3464 = vld [vmem:[%s712 + $0x10] sm:$0xff]
        %v3465 = vld [vmem:[%s712 + $0x18] sm:$0xff]
        %v3466 = vld [vmem:[%s712 + $0x20] sm:$0xff]
        %v3467 = vld [vmem:[%s712 + $0x28] sm:$0xff]
        %v3468 = vld [vmem:[%s712 + $0x30] sm:$0xff]
        %v3469 = vld [vmem:[%s712 + $0x38] sm:$0xff]
        %v3470 = vld [vmem:[%s712 + $0x40] sm:$0xff]
        %v3471 = vld [vmem:[%s712 + $0x48] sm:$0xff]
        %v3472 = vld [vmem:[%s712 + $0x50] sm:$0xff]
        %v3473 = vld [vmem:[%s712 + $0x58] sm:$0xff]
        %v3474 = vld [vmem:[%s712 + $0x60] sm:$0xff]
        %v3475 = vld [vmem:[%s712 + $0x68] sm:$0xff]
        %v3476 = vld [vmem:[%s712 + $0x70] sm:$0xff]
        %v3477 = vld [vmem:[%s712 + $0x78] sm:$0xff]
        %v3478 = vld [vmem:[%s712 + $0x80] sm:$0xff]
        %v3479 = vld [vmem:[%s712 + $0x88] sm:$0xff]
        %v3480 = vld [vmem:[%s712 + $0x90] sm:$0xff]
        %v3481 = vld [vmem:[%s712 + $0x98] sm:$0xff]
        %v3482 = vld [vmem:[%s712 + $0xa0] sm:$0xff]
        %v3483 = vld [vmem:[%s712 + $0xa8] sm:$0xff]
        %v3484 = vld [vmem:[%s712 + $0xb0] sm:$0xff]
        %v3485 = vld [vmem:[%s712 + $0xb8] sm:$0xff]
        %v3486 = vld [vmem:[%s712 + $0xc0] sm:$0xff]
        %v3487 = vld [vmem:[%s712 + $0xc8] sm:$0xff]
        %v3488 = vld [vmem:[%s712 + $0xd0] sm:$0xff]
        %v3489 = vld [vmem:[%s712 + $0xd8] sm:$0xff]
        %v3490 = vld [vmem:[%s712 + $0xe0] sm:$0xff]
        %v3491 = vld [vmem:[%s712 + $0xe8] sm:$0xff]
        %v3492 = vld [vmem:[%s712 + $0xf0] sm:$0xff]
        %v3493 = vld [vmem:[%s712 + $0xf8] sm:$0xff]
        %v3494 = vld [vmem:[%s712 + $0x100] sm:$0xff]
        %v3495 = vld [vmem:[%s712 + $0x108] sm:$0xff]
        %v3496 = vld [vmem:[%s712 + $0x110] sm:$0xff]
        %v3497 = vld [vmem:[%s712 + $0x118] sm:$0xff]
        %v3498 = vld [vmem:[%s712 + $0x120] sm:$0xff]
        %v3499 = vld [vmem:[%s712 + $0x128] sm:$0xff]
        %v3500 = vld [vmem:[%s712 + $0x130] sm:$0xff]
        %v3501 = vld [vmem:[%s712 + $0x138] sm:$0xff]
        %v3502 = vld [vmem:[%s712 + $0x140] sm:$0xff]
        %v3503 = vld [vmem:[%s712 + $0x148] sm:$0xff]
        %v3504 = vld [vmem:[%s712 + $0x150] sm:$0xff]
        %v3505 = vld [vmem:[%s712 + $0x158] sm:$0xff]
        %v3506 = vld [vmem:[%s712 + $0x160] sm:$0xff]
        %v3507 = vld [vmem:[%s712 + $0x168] sm:$0xff]
        %v3508 = vld [vmem:[%s712 + $0x170] sm:$0xff]
        %v3509 = vld [vmem:[%s712 + $0x178] sm:$0xff]
        %v3510 = vld [vmem:[%s712 + $0x180] sm:$0xff]
        %v3511 = vld [vmem:[%s712 + $0x188] sm:$0xff]
        %v3512 = vld [vmem:[%s712 + $0x190] sm:$0xff]
        %v3513 = vld [vmem:[%s712 + $0x198] sm:$0xff]
        %v3514 = vld [vmem:[%s712 + $0x1a0] sm:$0xff]
        %v3515 = vld [vmem:[%s712 + $0x1a8] sm:$0xff]
        %v3516 = vld [vmem:[%s712 + $0x1b0] sm:$0xff]
        %v3517 = vld [vmem:[%s712 + $0x1b8] sm:$0xff]
        %v3518 = vld [vmem:[%s712 + $0x1c0] sm:$0xff]
        %v3519 = vld [vmem:[%s712 + $0x1c8] sm:$0xff]
        %v3520 = vld [vmem:[%s712 + $0x1d0] sm:$0xff]
        %v3521 = vld [vmem:[%s712 + $0x1d8] sm:$0xff]
        %v3522 = vld [vmem:[%s712 + $0x1e0] sm:$0xff]
        %v3523 = vld [vmem:[%s712 + $0x1e8] sm:$0xff]
        %v3524 = vld [vmem:[%s712 + $0x1f0] sm:$0xff]
        %v3525 = vld [vmem:[%s712 + $0x1f8] sm:$0xff]
        %v3526 = vld [vmem:[%s712 + $0x200] sm:$0xff]
        %v3527 = vld [vmem:[%s712 + $0x208] sm:$0xff]
        %v3528 = vld [vmem:[%s712 + $0x210] sm:$0xff]
        %v3529 = vld [vmem:[%s712 + $0x218] sm:$0xff]
        %v3530 = vld [vmem:[%s712 + $0x220] sm:$0xff]
        %v3531 = vld [vmem:[%s712 + $0x228] sm:$0xff]
        %v3532 = vld [vmem:[%s712 + $0x230] sm:$0xff]
        %v3533 = vld [vmem:[%s712 + $0x238] sm:$0xff]
        %v3534 = vld [vmem:[%s712 + $0x240] sm:$0xff]
        %v3535 = vld [vmem:[%s712 + $0x248] sm:$0xff]
        %v3536 = vld [vmem:[%s712 + $0x250] sm:$0xff]
        %v3537 = vld [vmem:[%s712 + $0x258] sm:$0xff]
        %v3538 = vld [vmem:[%s712 + $0x260] sm:$0xff]
        %v3539 = vld [vmem:[%s712 + $0x268] sm:$0xff]
        %v3540 = vld [vmem:[%s712 + $0x270] sm:$0xff]
        %v3541 = vld [vmem:[%s712 + $0x278] sm:$0xff]
        %v3542 = vld [vmem:[%s712 + $0x280] sm:$0xff]
        %v3543 = vld [vmem:[%s712 + $0x288] sm:$0xff]
        %v3544 = vld [vmem:[%s712 + $0x290] sm:$0xff]
        %v3545 = vld [vmem:[%s712 + $0x298] sm:$0xff]
        %v3546 = vld [vmem:[%s712 + $0x2a0] sm:$0xff]
        %v3547 = vld [vmem:[%s712 + $0x2a8] sm:$0xff]
        %v3548 = vld [vmem:[%s712 + $0x2b0] sm:$0xff]
        %v3549 = vld [vmem:[%s712 + $0x2b8] sm:$0xff]
        %v3550 = vld [vmem:[%s712 + $0x2c0] sm:$0xff]
        %v3551 = vld [vmem:[%s712 + $0x2c8] sm:$0xff]
        %v3552 = vld [vmem:[%s712 + $0x2d0] sm:$0xff]
        %v3553 = vld [vmem:[%s712 + $0x2d8] sm:$0xff]
        %v3554 = vld [vmem:[%s712 + $0x2e0] sm:$0xff]
        %v3555 = vld [vmem:[%s712 + $0x2e8] sm:$0xff]
        %v3556 = vld [vmem:[%s712 + $0x2f0] sm:$0xff]
        %v3557 = vld [vmem:[%s712 + $0x2f8] sm:$0xff]
        %v3558 = vld [vmem:[%s712 + $0x300] sm:$0xff]
        %v3559 = vld [vmem:[%s712 + $0x308] sm:$0xff]
        %v3560 = vld [vmem:[%s712 + $0x310] sm:$0xff]
        %v3561 = vld [vmem:[%s712 + $0x318] sm:$0xff]
        %v3562 = vld [vmem:[%s712 + $0x320] sm:$0xff]
        %v3563 = vld [vmem:[%s712 + $0x328] sm:$0xff]
        %v3564 = vld [vmem:[%s712 + $0x330] sm:$0xff]
        %v3565 = vld [vmem:[%s712 + $0x338] sm:$0xff]
        %v3566 = vld [vmem:[%s712 + $0x340] sm:$0xff]
        %v3567 = vld [vmem:[%s712 + $0x348] sm:$0xff]
        %v3568 = vld [vmem:[%s712 + $0x350] sm:$0xff]
        %v3569 = vld [vmem:[%s712 + $0x358] sm:$0xff]
        %v3570 = vld [vmem:[%s712 + $0x360] sm:$0xff]
        %v3571 = vld [vmem:[%s712 + $0x368] sm:$0xff]
        %v3572 = vld [vmem:[%s712 + $0x370] sm:$0xff]
        %v3573 = vld [vmem:[%s712 + $0x378] sm:$0xff]
        %v3574 = vld [vmem:[%s712 + $0x380] sm:$0xff]
        %v3575 = vld [vmem:[%s712 + $0x388] sm:$0xff]
        %v3576 = vld [vmem:[%s712 + $0x390] sm:$0xff]
        %v3577 = vld [vmem:[%s712 + $0x398] sm:$0xff]
        %v3578 = vld [vmem:[%s712 + $0x3a0] sm:$0xff]
        %v3579 = vld [vmem:[%s712 + $0x3a8] sm:$0xff]
        %v3580 = vld [vmem:[%s712 + $0x3b0] sm:$0xff]
        %v3581 = vld [vmem:[%s712 + $0x3b8] sm:$0xff]
        %v3582 = vld [vmem:[%s712 + $0x3c0] sm:$0xff]
        %v3583 = vld [vmem:[%s712 + $0x3c8] sm:$0xff]
        %v3584 = vld [vmem:[%s712 + $0x3d0] sm:$0xff]
        %v3585 = vld [vmem:[%s712 + $0x3d8] sm:$0xff]
        %v3586 = vld [vmem:[%s712 + $0x3e0] sm:$0xff]
        %v3587 = vld [vmem:[%s712 + $0x3e8] sm:$0xff]
        %v3588 = vld [vmem:[%s712 + $0x3f0] sm:$0xff]
        %v3589 = vld [vmem:[%s712 + $0x3f8] sm:$0xff]
        %v3590 = vld [vmem:[%s857] sm:$0x3]
        %v3592 = vlaneseq
        %v3593 = vshrl.u32 %v3592, 7
        %v3594 = vsub.s32 0, %v3593
        %v3595 = vrot.slane %v3590, %v3594
        %v3596 = vlaneseq
        %v3597 = vshrl.u32 %v3596, 7
        %v3598 = vsub.s32 1, %v3597
        %v3599 = vrot.slane %v3590, %v3598
        %v3730 = vunpack.c.l.b16 %v3462
        %v3731 = vunpack.c.h.b16 %v3462
        %v3732 = vunpack.c.l.b16 %v3463
        %v3733 = vunpack.c.h.b16 %v3463
        %v3734 = vunpack.c.l.b16 %v3464
        %v3735 = vunpack.c.h.b16 %v3464
        %v3736 = vunpack.c.l.b16 %v3465
        %v3737 = vunpack.c.h.b16 %v3465
        %v3738 = vunpack.c.l.b16 %v3466
        %v3739 = vunpack.c.h.b16 %v3466
        %v3740 = vunpack.c.l.b16 %v3467
        %v3741 = vunpack.c.h.b16 %v3467
        %v3742 = vunpack.c.l.b16 %v3468
        %v3743 = vunpack.c.h.b16 %v3468
        %v3744 = vunpack.c.l.b16 %v3469
        %v3745 = vunpack.c.h.b16 %v3469
        %v3746 = vunpack.c.l.b16 %v3470
        %v3747 = vunpack.c.h.b16 %v3470
        %v3748 = vunpack.c.l.b16 %v3471
        %v3749 = vunpack.c.h.b16 %v3471
        %v3750 = vunpack.c.l.b16 %v3472
        %v3751 = vunpack.c.h.b16 %v3472
        %v3752 = vunpack.c.l.b16 %v3473
        %v3753 = vunpack.c.h.b16 %v3473
        %v3754 = vunpack.c.l.b16 %v3474
        %v3755 = vunpack.c.h.b16 %v3474
        %v3756 = vunpack.c.l.b16 %v3475
        %v3757 = vunpack.c.h.b16 %v3475
        %v3758 = vunpack.c.l.b16 %v3476
        %v3759 = vunpack.c.h.b16 %v3476
        %v3760 = vunpack.c.l.b16 %v3477
        %v3761 = vunpack.c.h.b16 %v3477
        %v3762 = vunpack.c.l.b16 %v3478
        %v3763 = vunpack.c.h.b16 %v3478
        %v3764 = vunpack.c.l.b16 %v3479
        %v3765 = vunpack.c.h.b16 %v3479
        %v3766 = vunpack.c.l.b16 %v3480
        %v3767 = vunpack.c.h.b16 %v3480
        %v3768 = vunpack.c.l.b16 %v3481
        %v3769 = vunpack.c.h.b16 %v3481
        %v3770 = vunpack.c.l.b16 %v3482
        %v3771 = vunpack.c.h.b16 %v3482
        %v3772 = vunpack.c.l.b16 %v3483
        %v3773 = vunpack.c.h.b16 %v3483
        %v3774 = vunpack.c.l.b16 %v3484
        %v3775 = vunpack.c.h.b16 %v3484
        %v3776 = vunpack.c.l.b16 %v3485
        %v3777 = vunpack.c.h.b16 %v3485
        %v3778 = vunpack.c.l.b16 %v3486
        %v3779 = vunpack.c.h.b16 %v3486
        %v3780 = vunpack.c.l.b16 %v3487
        %v3781 = vunpack.c.h.b16 %v3487
        %v3782 = vunpack.c.l.b16 %v3488
        %v3783 = vunpack.c.h.b16 %v3488
        %v3784 = vunpack.c.l.b16 %v3489
        %v3785 = vunpack.c.h.b16 %v3489
        %v3786 = vunpack.c.l.b16 %v3490
        %v3787 = vunpack.c.h.b16 %v3490
        %v3788 = vunpack.c.l.b16 %v3491
        %v3789 = vunpack.c.h.b16 %v3491
        %v3790 = vunpack.c.l.b16 %v3492
        %v3791 = vunpack.c.h.b16 %v3492
        %v3792 = vunpack.c.l.b16 %v3493
        %v3793 = vunpack.c.h.b16 %v3493
        %v3794 = vunpack.c.l.b16 %v3494
        %v3795 = vunpack.c.h.b16 %v3494
        %v3796 = vunpack.c.l.b16 %v3495
        %v3797 = vunpack.c.h.b16 %v3495
        %v3798 = vunpack.c.l.b16 %v3496
        %v3799 = vunpack.c.h.b16 %v3496
        %v3800 = vunpack.c.l.b16 %v3497
        %v3801 = vunpack.c.h.b16 %v3497
        %v3802 = vunpack.c.l.b16 %v3498
        %v3803 = vunpack.c.h.b16 %v3498
        %v3804 = vunpack.c.l.b16 %v3499
        %v3805 = vunpack.c.h.b16 %v3499
        %v3806 = vunpack.c.l.b16 %v3500
        %v3807 = vunpack.c.h.b16 %v3500
        %v3808 = vunpack.c.l.b16 %v3501
        %v3809 = vunpack.c.h.b16 %v3501
        %v3810 = vunpack.c.l.b16 %v3502
        %v3811 = vunpack.c.h.b16 %v3502
        %v3812 = vunpack.c.l.b16 %v3503
        %v3813 = vunpack.c.h.b16 %v3503
        %v3814 = vunpack.c.l.b16 %v3504
        %v3815 = vunpack.c.h.b16 %v3504
        %v3816 = vunpack.c.l.b16 %v3505
        %v3817 = vunpack.c.h.b16 %v3505
        %v3818 = vunpack.c.l.b16 %v3506
        %v3819 = vunpack.c.h.b16 %v3506
        %v3820 = vunpack.c.l.b16 %v3507
        %v3821 = vunpack.c.h.b16 %v3507
        %v3822 = vunpack.c.l.b16 %v3508
        %v3823 = vunpack.c.h.b16 %v3508
        %v3824 = vunpack.c.l.b16 %v3509
        %v3825 = vunpack.c.h.b16 %v3509
        %v3826 = vunpack.c.l.b16 %v3510
        %v3827 = vunpack.c.h.b16 %v3510
        %v3828 = vunpack.c.l.b16 %v3511
        %v3829 = vunpack.c.h.b16 %v3511
        %v3830 = vunpack.c.l.b16 %v3512
        %v3831 = vunpack.c.h.b16 %v3512
        %v3832 = vunpack.c.l.b16 %v3513
        %v3833 = vunpack.c.h.b16 %v3513
        %v3834 = vunpack.c.l.b16 %v3514
        %v3835 = vunpack.c.h.b16 %v3514
        %v3836 = vunpack.c.l.b16 %v3515
        %v3837 = vunpack.c.h.b16 %v3515
        %v3838 = vunpack.c.l.b16 %v3516
        %v3839 = vunpack.c.h.b16 %v3516
        %v3840 = vunpack.c.l.b16 %v3517
        %v3841 = vunpack.c.h.b16 %v3517
        %v3842 = vunpack.c.l.b16 %v3518
        %v3843 = vunpack.c.h.b16 %v3518
        %v3844 = vunpack.c.l.b16 %v3519
        %v3845 = vunpack.c.h.b16 %v3519
        %v3846 = vunpack.c.l.b16 %v3520
        %v3847 = vunpack.c.h.b16 %v3520
        %v3848 = vunpack.c.l.b16 %v3521
        %v3849 = vunpack.c.h.b16 %v3521
        %v3850 = vunpack.c.l.b16 %v3522
        %v3851 = vunpack.c.h.b16 %v3522
        %v3852 = vunpack.c.l.b16 %v3523
        %v3853 = vunpack.c.h.b16 %v3523
        %v3854 = vunpack.c.l.b16 %v3524
        %v3855 = vunpack.c.h.b16 %v3524
        %v3856 = vunpack.c.l.b16 %v3525
        %v3857 = vunpack.c.h.b16 %v3525
        %v3858 = vunpack.c.l.b16 %v3526
        %v3859 = vunpack.c.h.b16 %v3526
        %v3860 = vunpack.c.l.b16 %v3527
        %v3861 = vunpack.c.h.b16 %v3527
        %v3862 = vunpack.c.l.b16 %v3528
        %v3863 = vunpack.c.h.b16 %v3528
        %v3864 = vunpack.c.l.b16 %v3529
        %v3865 = vunpack.c.h.b16 %v3529
        %v3866 = vunpack.c.l.b16 %v3530
        %v3867 = vunpack.c.h.b16 %v3530
        %v3868 = vunpack.c.l.b16 %v3531
        %v3869 = vunpack.c.h.b16 %v3531
        %v3870 = vunpack.c.l.b16 %v3532
        %v3871 = vunpack.c.h.b16 %v3532
        %v3872 = vunpack.c.l.b16 %v3533
        %v3873 = vunpack.c.h.b16 %v3533
        %v3874 = vunpack.c.l.b16 %v3534
        %v3875 = vunpack.c.h.b16 %v3534
        %v3876 = vunpack.c.l.b16 %v3535
        %v3877 = vunpack.c.h.b16 %v3535
        %v3878 = vunpack.c.l.b16 %v3536
        %v3879 = vunpack.c.h.b16 %v3536
        %v3880 = vunpack.c.l.b16 %v3537
        %v3881 = vunpack.c.h.b16 %v3537
        %v3882 = vunpack.c.l.b16 %v3538
        %v3883 = vunpack.c.h.b16 %v3538
        %v3884 = vunpack.c.l.b16 %v3539
        %v3885 = vunpack.c.h.b16 %v3539
        %v3886 = vunpack.c.l.b16 %v3540
        %v3887 = vunpack.c.h.b16 %v3540
        %v3888 = vunpack.c.l.b16 %v3541
        %v3889 = vunpack.c.h.b16 %v3541
        %v3890 = vunpack.c.l.b16 %v3542
        %v3891 = vunpack.c.h.b16 %v3542
        %v3892 = vunpack.c.l.b16 %v3543
        %v3893 = vunpack.c.h.b16 %v3543
        %v3894 = vunpack.c.l.b16 %v3544
        %v3895 = vunpack.c.h.b16 %v3544
        %v3896 = vunpack.c.l.b16 %v3545
        %v3897 = vunpack.c.h.b16 %v3545
        %v3898 = vunpack.c.l.b16 %v3546
        %v3899 = vunpack.c.h.b16 %v3546
        %v3900 = vunpack.c.l.b16 %v3547
        %v3901 = vunpack.c.h.b16 %v3547
        %v3902 = vunpack.c.l.b16 %v3548
        %v3903 = vunpack.c.h.b16 %v3548
        %v3904 = vunpack.c.l.b16 %v3549
        %v3905 = vunpack.c.h.b16 %v3549
        %v3906 = vunpack.c.l.b16 %v3550
        %v3907 = vunpack.c.h.b16 %v3550
        %v3908 = vunpack.c.l.b16 %v3551
        %v3909 = vunpack.c.h.b16 %v3551
        %v3910 = vunpack.c.l.b16 %v3552
        %v3911 = vunpack.c.h.b16 %v3552
        %v3912 = vunpack.c.l.b16 %v3553
        %v3913 = vunpack.c.h.b16 %v3553
        %v3914 = vunpack.c.l.b16 %v3554
        %v3915 = vunpack.c.h.b16 %v3554
        %v3916 = vunpack.c.l.b16 %v3555
        %v3917 = vunpack.c.h.b16 %v3555
        %v3918 = vunpack.c.l.b16 %v3556
        %v3919 = vunpack.c.h.b16 %v3556
        %v3920 = vunpack.c.l.b16 %v3557
        %v3921 = vunpack.c.h.b16 %v3557
        %v3922 = vunpack.c.l.b16 %v3558
        %v3923 = vunpack.c.h.b16 %v3558
        %v3924 = vunpack.c.l.b16 %v3559
        %v3925 = vunpack.c.h.b16 %v3559
        %v3926 = vunpack.c.l.b16 %v3560
        %v3927 = vunpack.c.h.b16 %v3560
        %v3928 = vunpack.c.l.b16 %v3561
        %v3929 = vunpack.c.h.b16 %v3561
        %v3930 = vunpack.c.l.b16 %v3562
        %v3931 = vunpack.c.h.b16 %v3562
        %v3932 = vunpack.c.l.b16 %v3563
        %v3933 = vunpack.c.h.b16 %v3563
        %v3934 = vunpack.c.l.b16 %v3564
        %v3935 = vunpack.c.h.b16 %v3564
        %v3936 = vunpack.c.l.b16 %v3565
        %v3937 = vunpack.c.h.b16 %v3565
        %v3938 = vunpack.c.l.b16 %v3566
        %v3939 = vunpack.c.h.b16 %v3566
        %v3940 = vunpack.c.l.b16 %v3567
        %v3941 = vunpack.c.h.b16 %v3567
        %v3942 = vunpack.c.l.b16 %v3568
        %v3943 = vunpack.c.h.b16 %v3568
        %v3944 = vunpack.c.l.b16 %v3569
        %v3945 = vunpack.c.h.b16 %v3569
        %v3946 = vunpack.c.l.b16 %v3570
        %v3947 = vunpack.c.h.b16 %v3570
        %v3948 = vunpack.c.l.b16 %v3571
        %v3949 = vunpack.c.h.b16 %v3571
        %v3950 = vunpack.c.l.b16 %v3572
        %v3951 = vunpack.c.h.b16 %v3572
        %v3952 = vunpack.c.l.b16 %v3573
        %v3953 = vunpack.c.h.b16 %v3573
        %v3954 = vunpack.c.l.b16 %v3574
        %v3955 = vunpack.c.h.b16 %v3574
        %v3956 = vunpack.c.l.b16 %v3575
        %v3957 = vunpack.c.h.b16 %v3575
        %v3958 = vunpack.c.l.b16 %v3576
        %v3959 = vunpack.c.h.b16 %v3576
        %v3960 = vunpack.c.l.b16 %v3577
        %v3961 = vunpack.c.h.b16 %v3577
        %v3962 = vunpack.c.l.b16 %v3578
        %v3963 = vunpack.c.h.b16 %v3578
        %v3964 = vunpack.c.l.b16 %v3579
        %v3965 = vunpack.c.h.b16 %v3579
        %v3966 = vunpack.c.l.b16 %v3580
        %v3967 = vunpack.c.h.b16 %v3580
        %v3968 = vunpack.c.l.b16 %v3581
        %v3969 = vunpack.c.h.b16 %v3581
        %v3970 = vunpack.c.l.b16 %v3582
        %v3971 = vunpack.c.h.b16 %v3582
        %v3972 = vunpack.c.l.b16 %v3583
        %v3973 = vunpack.c.h.b16 %v3583
        %v3974 = vunpack.c.l.b16 %v3584
        %v3975 = vunpack.c.h.b16 %v3584
        %v3976 = vunpack.c.l.b16 %v3585
        %v3977 = vunpack.c.h.b16 %v3585
        %v3978 = vunpack.c.l.b16 %v3586
        %v3979 = vunpack.c.h.b16 %v3586
        %v3980 = vunpack.c.l.b16 %v3587
        %v3981 = vunpack.c.h.b16 %v3587
        %v3982 = vunpack.c.l.b16 %v3588
        %v3983 = vunpack.c.h.b16 %v3588
        %v3984 = vunpack.c.l.b16 %v3589
        %v3985 = vunpack.c.h.b16 %v3589
        %v3986 = vpack.c.b16 %v3732, %v3730
        %v3987 = vpack.c.b16 %v3733, %v3731
        %v3988 = vpack.c.b16 %v3736, %v3734
        %v3989 = vpack.c.b16 %v3737, %v3735
        %v3990 = vpack.c.b16 %v3740, %v3738
        %v3991 = vpack.c.b16 %v3741, %v3739
        %v3992 = vpack.c.b16 %v3744, %v3742
        %v3993 = vpack.c.b16 %v3745, %v3743
        %v3994 = vpack.c.b16 %v3748, %v3746
        %v3995 = vpack.c.b16 %v3749, %v3747
        %v3996 = vpack.c.b16 %v3752, %v3750
        %v3997 = vpack.c.b16 %v3753, %v3751
        %v3998 = vpack.c.b16 %v3756, %v3754
        %v3999 = vpack.c.b16 %v3757, %v3755
        %v4000 = vpack.c.b16 %v3760, %v3758
        %v4001 = vpack.c.b16 %v3761, %v3759
        %v4002 = vpack.c.b16 %v3764, %v3762
        %v4003 = vpack.c.b16 %v3765, %v3763
        %v4004 = vpack.c.b16 %v3768, %v3766
        %v4005 = vpack.c.b16 %v3769, %v3767
        %v4006 = vpack.c.b16 %v3772, %v3770
        %v4007 = vpack.c.b16 %v3773, %v3771
        %v4008 = vpack.c.b16 %v3776, %v3774
        %v4009 = vpack.c.b16 %v3777, %v3775
        %v4010 = vpack.c.b16 %v3780, %v3778
        %v4011 = vpack.c.b16 %v3781, %v3779
        %v4012 = vpack.c.b16 %v3784, %v3782
        %v4013 = vpack.c.b16 %v3785, %v3783
        %v4014 = vpack.c.b16 %v3788, %v3786
        %v4015 = vpack.c.b16 %v3789, %v3787
        %v4016 = vpack.c.b16 %v3792, %v3790
        %v4017 = vpack.c.b16 %v3793, %v3791
        %v4018 = vpack.c.b16 %v3796, %v3794
        %v4019 = vpack.c.b16 %v3797, %v3795
        %v4020 = vpack.c.b16 %v3800, %v3798
        %v4021 = vpack.c.b16 %v3801, %v3799
        %v4022 = vpack.c.b16 %v3804, %v3802
        %v4023 = vpack.c.b16 %v3805, %v3803
        %v4024 = vpack.c.b16 %v3808, %v3806
        %v4025 = vpack.c.b16 %v3809, %v3807
        %v4026 = vpack.c.b16 %v3812, %v3810
        %v4027 = vpack.c.b16 %v3813, %v3811
        %v4028 = vpack.c.b16 %v3816, %v3814
        %v4029 = vpack.c.b16 %v3817, %v3815
        %v4030 = vpack.c.b16 %v3820, %v3818
        %v4031 = vpack.c.b16 %v3821, %v3819
        %v4032 = vpack.c.b16 %v3824, %v3822
        %v4033 = vpack.c.b16 %v3825, %v3823
        %v4034 = vpack.c.b16 %v3828, %v3826
        %v4035 = vpack.c.b16 %v3829, %v3827
        %v4036 = vpack.c.b16 %v3832, %v3830
        %v4037 = vpack.c.b16 %v3833, %v3831
        %v4038 = vpack.c.b16 %v3836, %v3834
        %v4039 = vpack.c.b16 %v3837, %v3835
        %v4040 = vpack.c.b16 %v3840, %v3838
        %v4041 = vpack.c.b16 %v3841, %v3839
        %v4042 = vpack.c.b16 %v3844, %v3842
        %v4043 = vpack.c.b16 %v3845, %v3843
        %v4044 = vpack.c.b16 %v3848, %v3846
        %v4045 = vpack.c.b16 %v3849, %v3847
        %v4046 = vpack.c.b16 %v3852, %v3850
        %v4047 = vpack.c.b16 %v3853, %v3851
        %v4048 = vpack.c.b16 %v3856, %v3854
        %v4049 = vpack.c.b16 %v3857, %v3855
        %v4050 = vpack.c.b16 %v3860, %v3858
        %v4051 = vpack.c.b16 %v3861, %v3859
        %v4052 = vpack.c.b16 %v3864, %v3862
        %v4053 = vpack.c.b16 %v3865, %v3863
        %v4054 = vpack.c.b16 %v3868, %v3866
        %v4055 = vpack.c.b16 %v3869, %v3867
        %v4056 = vpack.c.b16 %v3872, %v3870
        %v4057 = vpack.c.b16 %v3873, %v3871
        %v4058 = vpack.c.b16 %v3876, %v3874
        %v4059 = vpack.c.b16 %v3877, %v3875
        %v4060 = vpack.c.b16 %v3880, %v3878
        %v4061 = vpack.c.b16 %v3881, %v3879
        %v4062 = vpack.c.b16 %v3884, %v3882
        %v4063 = vpack.c.b16 %v3885, %v3883
        %v4064 = vpack.c.b16 %v3888, %v3886
        %v4065 = vpack.c.b16 %v3889, %v3887
        %v4066 = vpack.c.b16 %v3892, %v3890
        %v4067 = vpack.c.b16 %v3893, %v3891
        %v4068 = vpack.c.b16 %v3896, %v3894
        %v4069 = vpack.c.b16 %v3897, %v3895
        %v4070 = vpack.c.b16 %v3900, %v3898
        %v4071 = vpack.c.b16 %v3901, %v3899
        %v4072 = vpack.c.b16 %v3904, %v3902
        %v4073 = vpack.c.b16 %v3905, %v3903
        %v4074 = vpack.c.b16 %v3908, %v3906
        %v4075 = vpack.c.b16 %v3909, %v3907
        %v4076 = vpack.c.b16 %v3912, %v3910
        %v4077 = vpack.c.b16 %v3913, %v3911
        %v4078 = vpack.c.b16 %v3916, %v3914
        %v4079 = vpack.c.b16 %v3917, %v3915
        %v4080 = vpack.c.b16 %v3920, %v3918
        %v4081 = vpack.c.b16 %v3921, %v3919
        %v4082 = vpack.c.b16 %v3924, %v3922
        %v4083 = vpack.c.b16 %v3925, %v3923
        %v4084 = vpack.c.b16 %v3928, %v3926
        %v4085 = vpack.c.b16 %v3929, %v3927
        %v4086 = vpack.c.b16 %v3932, %v3930
        %v4087 = vpack.c.b16 %v3933, %v3931
        %v4088 = vpack.c.b16 %v3936, %v3934
        %v4089 = vpack.c.b16 %v3937, %v3935
        %v4090 = vpack.c.b16 %v3940, %v3938
        %v4091 = vpack.c.b16 %v3941, %v3939
        %v4092 = vpack.c.b16 %v3944, %v3942
        %v4093 = vpack.c.b16 %v3945, %v3943
        %v4094 = vpack.c.b16 %v3948, %v3946
        %v4095 = vpack.c.b16 %v3949, %v3947
        %v4096 = vpack.c.b16 %v3952, %v3950
        %v4097 = vpack.c.b16 %v3953, %v3951
        %v4098 = vpack.c.b16 %v3956, %v3954
        %v4099 = vpack.c.b16 %v3957, %v3955
        %v4100 = vpack.c.b16 %v3960, %v3958
        %v4101 = vpack.c.b16 %v3961, %v3959
        %v4102 = vpack.c.b16 %v3964, %v3962
        %v4103 = vpack.c.b16 %v3965, %v3963
        %v4104 = vpack.c.b16 %v3968, %v3966
        %v4105 = vpack.c.b16 %v3969, %v3967
        %v4106 = vpack.c.b16 %v3972, %v3970
        %v4107 = vpack.c.b16 %v3973, %v3971
        %v4108 = vpack.c.b16 %v3976, %v3974
        %v4109 = vpack.c.b16 %v3977, %v3975
        %v4110 = vpack.c.b16 %v3980, %v3978
        %v4111 = vpack.c.b16 %v3981, %v3979
        %v4112 = vpack.c.b16 %v3984, %v3982
        %v4113 = vpack.c.b16 %v3985, %v3983
        %4242 = vmatprep.subr.bf16.mxu0 %v3987
        %4243 = vmatpush1.bf16.msra.mxu0 %v3986
        %4244 = vmatprep.subr.bf16.mxu0 %v3989
        %4245 = vmatpush1.bf16.msra.mxu0 %v3988
        %4246 = vmatprep.subr.bf16.mxu0 %v3991
        %4247 = vmatpush1.bf16.msra.mxu0 %v3990
        %4248 = vmatprep.subr.bf16.mxu0 %v3993
        %4249 = vmatpush1.bf16.msra.mxu0 %v3992
        %4250 = vmatprep.subr.bf16.mxu0 %v3995
        %4251 = vmatpush1.bf16.msra.mxu0 %v3994
        %4252 = vmatprep.subr.bf16.mxu0 %v3997
        %4253 = vmatpush1.bf16.msra.mxu0 %v3996
        %4254 = vmatprep.subr.bf16.mxu0 %v3999
        %4255 = vmatpush1.bf16.msra.mxu0 %v3998
        %4256 = vmatprep.subr.bf16.mxu0 %v4001
        %4257 = vmatpush1.bf16.msra.mxu0 %v4000
        %4258 = vmatprep.subr.bf16.mxu0 %v4003
        %4259 = vmatpush1.bf16.msra.mxu0 %v4002
        %4260 = vmatprep.subr.bf16.mxu0 %v4005
        %4261 = vmatpush1.bf16.msra.mxu0 %v4004
        %4262 = vmatprep.subr.bf16.mxu0 %v4007
        %4263 = vmatpush1.bf16.msra.mxu0 %v4006
        %4264 = vmatprep.subr.bf16.mxu0 %v4009
        %4265 = vmatpush1.bf16.msra.mxu0 %v4008
        %4266 = vmatprep.subr.bf16.mxu0 %v4011
        %4267 = vmatpush1.bf16.msra.mxu0 %v4010
        %4268 = vmatprep.subr.bf16.mxu0 %v4013
        %4269 = vmatpush1.bf16.msra.mxu0 %v4012
        %4270 = vmatprep.subr.bf16.mxu0 %v4015
        %4271 = vmatpush1.bf16.msra.mxu0 %v4014
        %4272 = vmatprep.subr.bf16.mxu0 %v4017
        %4273 = vmatpush1.bf16.msra.mxu0 %v4016
        %4274 = vmatprep.mubr.bf16.mxu0 %v3455
        %4275 = vmatmul.mubr.bf16.gmra.mrb[0].mxu0 %v3454
        %v4276 = vpop.f32.mrb[0].mxu0
        %v4277 = vadd.f32 %v3595, %v4276
        %v4278 = vpop.f32.mrb[0].mxu0
        %v4279 = vadd.f32 %v3599, %v4278
        %v4280 = vpop.f32.mrb[0].mxu0
        %v4281 = vadd.f32 %v3595, %v4280
        %v4282 = vpop.f32.mrb[0].mxu0
        %v4283 = vadd.f32 %v3599, %v4282
        %4284 = vdwg.mxu0
        %4285 = vmatprep.subr.bf16.mxu0 %v4019
        %4286 = vmatpush1.bf16.msra.mxu0 %v4018
        %4287 = vmatprep.subr.bf16.mxu0 %v4021
        %4288 = vmatpush1.bf16.msra.mxu0 %v4020
        %4289 = vmatprep.subr.bf16.mxu0 %v4023
        %4290 = vmatpush1.bf16.msra.mxu0 %v4022
        %4291 = vmatprep.subr.bf16.mxu0 %v4025
        %4292 = vmatpush1.bf16.msra.mxu0 %v4024
        %4293 = vmatprep.subr.bf16.mxu0 %v4027
        %4294 = vmatpush1.bf16.msra.mxu0 %v4026
        %4295 = vmatprep.subr.bf16.mxu0 %v4029
        %4296 = vmatpush1.bf16.msra.mxu0 %v4028
        %4297 = vmatprep.subr.bf16.mxu0 %v4031
        %4298 = vmatpush1.bf16.msra.mxu0 %v4030
        %4299 = vmatprep.subr.bf16.mxu0 %v4033
        %4300 = vmatpush1.bf16.msra.mxu0 %v4032
        %4301 = vmatprep.subr.bf16.mxu0 %v4035
        %4302 = vmatpush1.bf16.msra.mxu0 %v4034
        %4303 = vmatprep.subr.bf16.mxu0 %v4037
        %4304 = vmatpush1.bf16.msra.mxu0 %v4036
        %4305 = vmatprep.subr.bf16.mxu0 %v4039
        %4306 = vmatpush1.bf16.msra.mxu0 %v4038
        %4307 = vmatprep.subr.bf16.mxu0 %v4041
        %4308 = vmatpush1.bf16.msra.mxu0 %v4040
        %4309 = vmatprep.subr.bf16.mxu0 %v4043
        %4310 = vmatpush1.bf16.msra.mxu0 %v4042
        %4311 = vmatprep.subr.bf16.mxu0 %v4045
        %4312 = vmatpush1.bf16.msra.mxu0 %v4044
        %4313 = vmatprep.subr.bf16.mxu0 %v4047
        %4314 = vmatpush1.bf16.msra.mxu0 %v4046
        %4315 = vmatprep.subr.bf16.mxu0 %v4049
        %4316 = vmatpush1.bf16.msra.mxu0 %v4048
        %4317 = vmatprep.mubr.bf16.mxu0 %v3457
        %4318 = vmatmul.mubr.bf16.gmra.mrb[0].mxu0 %v3456
        %v4319 = vpop.f32.mrb[0].mxu0
        %v4320 = vadd.f32 %v4277, %v4319
        %v4321 = vpop.f32.mrb[0].mxu0
        %v4322 = vadd.f32 %v4279, %v4321
        %v4323 = vpop.f32.mrb[0].mxu0
        %v4324 = vadd.f32 %v4281, %v4323
        %v4325 = vpop.f32.mrb[0].mxu0
        %v4326 = vadd.f32 %v4283, %v4325
        %4327 = vdwg.mxu0
        %4328 = vmatprep.subr.bf16.mxu0 %v4051
        %4329 = vmatpush1.bf16.msra.mxu0 %v4050
        %4330 = vmatprep.subr.bf16.mxu0 %v4053
        %4331 = vmatpush1.bf16.msra.mxu0 %v4052
        %4332 = vmatprep.subr.bf16.mxu0 %v4055
        %4333 = vmatpush1.bf16.msra.mxu0 %v4054
        %4334 = vmatprep.subr.bf16.mxu0 %v4057
        %4335 = vmatpush1.bf16.msra.mxu0 %v4056
        %4336 = vmatprep.subr.bf16.mxu0 %v4059
        %4337 = vmatpush1.bf16.msra.mxu0 %v4058
        %4338 = vmatprep.subr.bf16.mxu0 %v4061
        %4339 = vmatpush1.bf16.msra.mxu0 %v4060
        %4340 = vmatprep.subr.bf16.mxu0 %v4063
        %4341 = vmatpush1.bf16.msra.mxu0 %v4062
        %4342 = vmatprep.subr.bf16.mxu0 %v4065
        %4343 = vmatpush1.bf16.msra.mxu0 %v4064
        %4344 = vmatprep.subr.bf16.mxu0 %v4067
        %4345 = vmatpush1.bf16.msra.mxu0 %v4066
        %4346 = vmatprep.subr.bf16.mxu0 %v4069
        %4347 = vmatpush1.bf16.msra.mxu0 %v4068
        %4348 = vmatprep.subr.bf16.mxu0 %v4071
        %4349 = vmatpush1.bf16.msra.mxu0 %v4070
        %4350 = vmatprep.subr.bf16.mxu0 %v4073
        %4351 = vmatpush1.bf16.msra.mxu0 %v4072
        %4352 = vmatprep.subr.bf16.mxu0 %v4075
        %4353 = vmatpush1.bf16.msra.mxu0 %v4074
        %4354 = vmatprep.subr.bf16.mxu0 %v4077
        %4355 = vmatpush1.bf16.msra.mxu0 %v4076
        %4356 = vmatprep.subr.bf16.mxu0 %v4079
        %4357 = vmatpush1.bf16.msra.mxu0 %v4078
        %4358 = vmatprep.subr.bf16.mxu0 %v4081
        %4359 = vmatpush1.bf16.msra.mxu0 %v4080
        %4360 = vmatprep.mubr.bf16.mxu0 %v3459
        %4361 = vmatmul.mubr.bf16.gmra.mrb[0].mxu0 %v3458
        %v4362 = vpop.f32.mrb[0].mxu0
        %v4363 = vadd.f32 %v4320, %v4362
        %v4364 = vpop.f32.mrb[0].mxu0
        %v4365 = vadd.f32 %v4322, %v4364
        %v4366 = vpop.f32.mrb[0].mxu0
        %v4367 = vadd.f32 %v4324, %v4366
        %v4368 = vpop.f32.mrb[0].mxu0
        %v4369 = vadd.f32 %v4326, %v4368
        %4370 = vdwg.mxu0
        %4371 = vmatprep.subr.bf16.mxu0 %v4083
        %4372 = vmatpush1.bf16.msra.mxu0 %v4082
        %4373 = vmatprep.subr.bf16.mxu0 %v4085
        %4374 = vmatpush1.bf16.msra.mxu0 %v4084
        %4375 = vmatprep.subr.bf16.mxu0 %v4087
        %4376 = vmatpush1.bf16.msra.mxu0 %v4086
        %4377 = vmatprep.subr.bf16.mxu0 %v4089
        %4378 = vmatpush1.bf16.msra.mxu0 %v4088
        %4379 = vmatprep.subr.bf16.mxu0 %v4091
        %4380 = vmatpush1.bf16.msra.mxu0 %v4090
        %4381 = vmatprep.subr.bf16.mxu0 %v4093
        %4382 = vmatpush1.bf16.msra.mxu0 %v4092
        %4383 = vmatprep.subr.bf16.mxu0 %v4095
        %4384 = vmatpush1.bf16.msra.mxu0 %v4094
        %4385 = vmatprep.subr.bf16.mxu0 %v4097
        %4386 = vmatpush1.bf16.msra.mxu0 %v4096
        %4387 = vmatprep.subr.bf16.mxu0 %v4099
        %4388 = vmatpush1.bf16.msra.mxu0 %v4098
        %4389 = vmatprep.subr.bf16.mxu0 %v4101
        %4390 = vmatpush1.bf16.msra.mxu0 %v4100
        %4391 = vmatprep.subr.bf16.mxu0 %v4103
        %4392 = vmatpush1.bf16.msra.mxu0 %v4102
        %4393 = vmatprep.subr.bf16.mxu0 %v4105
        %4394 = vmatpush1.bf16.msra.mxu0 %v4104
        %4395 = vmatprep.subr.bf16.mxu0 %v4107
        %4396 = vmatpush1.bf16.msra.mxu0 %v4106
        %4397 = vmatprep.subr.bf16.mxu0 %v4109
        %4398 = vmatpush1.bf16.msra.mxu0 %v4108
        %4399 = vmatprep.subr.bf16.mxu0 %v4111
        %4400 = vmatpush1.bf16.msra.mxu0 %v4110
        %4401 = vmatprep.subr.bf16.mxu0 %v4113
        %4402 = vmatpush1.bf16.msra.mxu0 %v4112
        %4403 = vmatprep.mubr.bf16.mxu0 %v3461
        %4404 = vmatmul.mubr.bf16.gmra.mrb[0].mxu0 %v3460
        %v4405 = vpop.f32.mrb[0].mxu0
        %v4406 = vadd.f32 %v4363, %v4405
        %v4407 = vpop.f32.mrb[0].mxu0
        %v4408 = vadd.f32 %v4365, %v4407
        %v4409 = vpop.f32.mrb[0].mxu0
        %v4410 = vadd.f32 %v4367, %v4409
        %v4411 = vpop.f32.mrb[0].mxu0
        %v4412 = vadd.f32 %v4369, %v4411
        %4413 = vdwg.mxu0
        %v4414 = vadd.f32 %v2274, %v4406
        %v4415 = vadd.f32 %v2275, %v4408
        %v4416 = vadd.f32 %v2276, %v4410
        %v4417 = vadd.f32 %v2277, %v4412
        %4418 = vst [vmem:[#allocation2] sm:$0xff] %v4414
        %4419 = vst [vmem:[#allocation2 + $0x8] sm:$0xff] %v4415
        %4420 = vst [vmem:[#allocation2 + $0x10] sm:$0xff] %v4416
        %4421 = vst [vmem:[#allocation2 + $0x18] sm:$0xff] %v4417
        %p4422 = scmp.eq.s32.totalorder %s43, 1
        // Predicated region
        $region109: #{vision_transformer_forward.3} parent=91 // pred_check
          %p4423 = pneg %p4422
        $region110: #{vision_transformer_forward.3} parent=91 // pred_check_branch
          %4425 = sbr.rel (%p4423) target = $region112
        $region111: #{vision_transformer_forward.3} parent=91 // pred_region
          %v4426 = vld [vmem:[%s15] sm:$0x3]
          %v4427 = vld [vmem:[%s16] sm:$0x3]
          %vm4428 = vcmask 1040384
          %v4429 = vsel %vm4428, %v4414, 0.0
          %v4430 = vsel %vm4428, %v4415, 0.0
          %v4431 = vadd.f32 %v4429, %v4430
          %4432 = vadd.xlane.f32.xlu0 %v4431
          %v4433 = vpop.xlane.xlu0 %4432
          %v4434 = vmul.f32 %v4433, %v948
          %v4435 = vsub.f32 %v4414, %v4434
          %v4436 = vsub.f32 %v4415, %v4434
          %v4437 = vmul.f32 %v4435, %v4435
          %v4438 = vmul.f32 %v4436, %v4436
          %v4439 = vsel %vm4428, %v4437, 0.0
          %v4440 = vsel %vm4428, %v4438, 0.0
          %v4441 = vadd.f32 %v4439, %v4440
          %4442 = vadd.xlane.f32.xlu0 %v4441
          %v4443 = vpop.xlane.xlu0 %4442
          %v4444 = vmul.f32 %v4443, %v948
          %v4445 = vadd.f32 %v4444, 1e-05
          %v4446 = vrsqrt.pop %v4445
          %v4447 = vmul.f32 %v4435, %v4446
          %v4448 = vmul.f32 %v4436, %v4446
          %v4450 = vlaneseq
          %v4451 = vshrl.u32 %v4450, 7
          %v4452 = vsub.s32 0, %v4451
          %v4453 = vrot.slane %v4426, %v4452
          %v4454 = vlaneseq
          %v4455 = vshrl.u32 %v4454, 7
          %v4456 = vsub.s32 1, %v4455
          %v4457 = vrot.slane %v4426, %v4456
          %v4460 = vmul.f32 %v4447, %v4453
          %v4461 = vmul.f32 %v4448, %v4457
          %v4463 = vlaneseq
          %v4464 = vshrl.u32 %v4463, 7
          %v4465 = vsub.s32 0, %v4464
          %v4466 = vrot.slane %v4427, %v4465
          %v4467 = vlaneseq
          %v4468 = vshrl.u32 %v4467, 7
          %v4469 = vsub.s32 1, %v4468
          %v4470 = vrot.slane %v4427, %v4469
          %v4473 = vadd.f32 %v4460, %v4466
          %v4474 = vadd.f32 %v4461, %v4470
          %v4475 = vpack.c.bf16 %v4473, %v4473
          %v4476 = vpack.c.bf16 %v4474, %v4474
          %v4477 = vld [vmem:[%s17] sm:$0xf]
          %v4478 = vld [vmem:[%s17 + $0x4] sm:$0xf]
          %v4479 = vld [vmem:[%s17 + $0x8] sm:$0xf]
          %v4480 = vld [vmem:[%s17 + $0xc] sm:$0xf]
          %v4481 = vld [vmem:[%s17 + $0x10] sm:$0xf]
          %v4482 = vld [vmem:[%s17 + $0x14] sm:$0xf]
          %v4483 = vld [vmem:[%s17 + $0x18] sm:$0xf]
          %v4484 = vld [vmem:[%s17 + $0x1c] sm:$0xf]
          %v4485 = vld [vmem:[%s17 + $0x20] sm:$0xf]
          %v4486 = vld [vmem:[%s17 + $0x24] sm:$0xf]
          %v4487 = vld [vmem:[%s17 + $0x28] sm:$0xf]
          %v4488 = vld [vmem:[%s17 + $0x2c] sm:$0xf]
          %v4489 = vld [vmem:[%s17 + $0x30] sm:$0xf]
          %v4490 = vld [vmem:[%s17 + $0x34] sm:$0xf]
          %v4491 = vld [vmem:[%s17 + $0x38] sm:$0xf]
          %v4492 = vld [vmem:[%s17 + $0x3c] sm:$0xf]
          %v4493 = vld [vmem:[%s17 + $0x40] sm:$0xf]
          %v4494 = vld [vmem:[%s17 + $0x44] sm:$0xf]
          %v4495 = vld [vmem:[%s17 + $0x48] sm:$0xf]
          %v4496 = vld [vmem:[%s17 + $0x4c] sm:$0xf]
          %v4497 = vld [vmem:[%s17 + $0x50] sm:$0xf]
          %v4498 = vld [vmem:[%s17 + $0x54] sm:$0xf]
          %v4499 = vld [vmem:[%s17 + $0x58] sm:$0xf]
          %v4500 = vld [vmem:[%s17 + $0x5c] sm:$0xf]
          %v4501 = vld [vmem:[%s17 + $0x60] sm:$0xf]
          %v4502 = vld [vmem:[%s17 + $0x64] sm:$0xf]
          %v4503 = vld [vmem:[%s17 + $0x68] sm:$0xf]
          %v4504 = vld [vmem:[%s17 + $0x6c] sm:$0xf]
          %v4505 = vld [vmem:[%s17 + $0x70] sm:$0xf]
          %v4506 = vld [vmem:[%s17 + $0x74] sm:$0xf]
          %v4507 = vld [vmem:[%s17 + $0x78] sm:$0xf]
          %v4508 = vld [vmem:[%s17 + $0x7c] sm:$0xf]
          %v4541 = vunpack.c.l.b16 %v4477
          %v4542 = vunpack.c.l.b16 %v4478
          %v4543 = vunpack.c.l.b16 %v4479
          %v4544 = vunpack.c.l.b16 %v4480
          %v4545 = vunpack.c.l.b16 %v4481
          %v4546 = vunpack.c.l.b16 %v4482
          %v4547 = vunpack.c.l.b16 %v4483
          %v4548 = vunpack.c.l.b16 %v4484
          %v4549 = vunpack.c.l.b16 %v4485
          %v4550 = vunpack.c.l.b16 %v4486
          %v4551 = vunpack.c.l.b16 %v4487
          %v4552 = vunpack.c.l.b16 %v4488
          %v4553 = vunpack.c.l.b16 %v4489
          %v4554 = vunpack.c.l.b16 %v4490
          %v4555 = vunpack.c.l.b16 %v4491
          %v4556 = vunpack.c.l.b16 %v4492
          %v4557 = vunpack.c.l.b16 %v4493
          %v4558 = vunpack.c.l.b16 %v4494
          %v4559 = vunpack.c.l.b16 %v4495
          %v4560 = vunpack.c.l.b16 %v4496
          %v4561 = vunpack.c.l.b16 %v4497
          %v4562 = vunpack.c.l.b16 %v4498
          %v4563 = vunpack.c.l.b16 %v4499
          %v4564 = vunpack.c.l.b16 %v4500
          %v4565 = vunpack.c.l.b16 %v4501
          %v4566 = vunpack.c.l.b16 %v4502
          %v4567 = vunpack.c.l.b16 %v4503
          %v4568 = vunpack.c.l.b16 %v4504
          %v4569 = vunpack.c.l.b16 %v4505
          %v4570 = vunpack.c.l.b16 %v4506
          %v4571 = vunpack.c.l.b16 %v4507
          %v4572 = vunpack.c.l.b16 %v4508
          %v4573 = vpack.c.b16 %v4542, %v4541
          %v4574 = vpack.c.b16 %v4544, %v4543
          %v4575 = vpack.c.b16 %v4546, %v4545
          %v4576 = vpack.c.b16 %v4548, %v4547
          %v4577 = vpack.c.b16 %v4550, %v4549
          %v4578 = vpack.c.b16 %v4552, %v4551
          %v4579 = vpack.c.b16 %v4554, %v4553
          %v4580 = vpack.c.b16 %v4556, %v4555
          %v4581 = vpack.c.b16 %v4558, %v4557
          %v4582 = vpack.c.b16 %v4560, %v4559
          %v4583 = vpack.c.b16 %v4562, %v4561
          %v4584 = vpack.c.b16 %v4564, %v4563
          %v4585 = vpack.c.b16 %v4566, %v4565
          %v4586 = vpack.c.b16 %v4568, %v4567
          %v4587 = vpack.c.b16 %v4570, %v4569
          %v4588 = vpack.c.b16 %v4572, %v4571
          %4605 = vmatprep.subr.bf16.mxu0 0
          %4606 = vmatpush1.bf16.msra.mxu0 %v4573
          %4607 = vmatprep.subr.bf16.mxu0 0
          %4608 = vmatpush1.bf16.msra.mxu0 %v4574
          %4609 = vmatprep.subr.bf16.mxu0 0
          %4610 = vmatpush1.bf16.msra.mxu0 %v4575
          %4611 = vmatprep.subr.bf16.mxu0 0
          %4612 = vmatpush1.bf16.msra.mxu0 %v4576
          %4613 = vmatprep.subr.bf16.mxu0 0
          %4614 = vmatpush1.bf16.msra.mxu0 %v4577
          %4615 = vmatprep.subr.bf16.mxu0 0
          %4616 = vmatpush1.bf16.msra.mxu0 %v4578
          %4617 = vmatprep.subr.bf16.mxu0 0
          %4618 = vmatpush1.bf16.msra.mxu0 %v4579
          %4619 = vmatprep.subr.bf16.mxu0 0
          %4620 = vmatpush1.bf16.msra.mxu0 %v4580
          %4621 = vmatprep.subr.bf16.mxu0 0
          %4622 = vmatpush1.bf16.msra.mxu0 %v4581
          %4623 = vmatprep.subr.bf16.mxu0 0
          %4624 = vmatpush1.bf16.msra.mxu0 %v4582
          %4625 = vmatprep.subr.bf16.mxu0 0
          %4626 = vmatpush1.bf16.msra.mxu0 %v4583
          %4627 = vmatprep.subr.bf16.mxu0 0
          %4628 = vmatpush1.bf16.msra.mxu0 %v4584
          %4629 = vmatprep.subr.bf16.mxu0 0
          %4630 = vmatpush1.bf16.msra.mxu0 %v4585
          %4631 = vmatprep.subr.bf16.mxu0 0
          %4632 = vmatpush1.bf16.msra.mxu0 %v4586
          %4633 = vmatprep.subr.bf16.mxu0 0
          %4634 = vmatpush1.bf16.msra.mxu0 %v4587
          %4635 = vmatprep.subr.bf16.mxu0 0
          %4636 = vmatpush1.bf16.msra.mxu0 %v4588
          %4637 = vmatprep.mubr.bf16.mxu0 %v4476
          %4638 = vmatmul.mubr.bf16.gmra.mrb[0].mxu0 %v4475
          %v4639 = vpop.f32.mrb[0].mxu0
          %v4640 = vadd.f32 0.0, %v4639
          %v4641 = vpop.f32.mrb[0].mxu0
          %v4642 = vpop.f32.mrb[0].mxu0
          %v4643 = vpop.f32.mrb[0].mxu0
          %4644 = vdwg.mxu0
          %4645 = vst [vmem:[%s815] sm:$0x1] %v4640
        $region112: #{vision_transformer_forward.3} parent=91 // pred_fallthru
          _
        %s4646 = sand.u32 %s501, 1
        %s4647 = scalar_lea.sflag [#allocation6], %s4646
        %s4648 = sand.u32 %s501, 1
        %s4649 = scalar_lea.vmem [#allocation10], %s4648
        // Predicated region
        $region113: #{vision_transformer_forward.3} parent=91 // pred_check
          %p4650 = pneg %p511
        $region114: #{vision_transformer_forward.3} parent=91 // pred_check_branch
          %4652 = sbr.rel (%p4650) target = $region116
        $region115: #{vision_transformer_forward.3} parent=91 // pred_region
          %s4654 = ssub.s32 16, 16
          %4655 = vsyncadd %s4647, %s4654
          %s4656 = smul.addr %s42, 16
          %s4657 = scalar_lea.hbm %s18, %s4656
          %s4659 = sshll.u32 %s4649, 4
          %s4660 = int_to_ptr.vmem [resolvable:$true] %s4659
          %4662 = dma.vmem_to_hbm [thread:$0]  %s4660, 16, %s4657, %s4647
        $region116: #{vision_transformer_forward.3} parent=91 // pred_fallthru
          _
      $region92: #{vision_transformer_forward.3} parent=5 // pred_fallthru
        _
      %p4663 = scmp.le.s32.totalorder 2, %s33
      // Predicated region
      $region117: #{vision_transformer_forward.3} parent=5 // pred_check
        %p4664 = pneg %p4663
      $region118: #{vision_transformer_forward.3} parent=5 // pred_check_branch
        %4666 = sbr.rel (%p4664) target = $region120
      $region119: #{vision_transformer_forward.3} parent=5 // pred_region
        %s4667 = ssub.s32 %s33, 2
        // Predicated region
        $region121: #{vision_transformer_forward.3} parent=119 // pred_check
          %p4668 = pneg %p517
        $region122: #{vision_transformer_forward.3} parent=119 // pred_check_branch
          %4670 = sbr.rel (%p4668) target = $region124
        $region123: #{vision_transformer_forward.3} parent=119 // pred_region
          %s4671 = sand.u32 %s502, 1
          %s4672 = scalar_lea.sflag [#allocation6], %s4671
          %s4673 = sand.u32 %s502, 1
          %s4674 = scalar_lea.vmem [#allocation10], %s4673
          %4675 = dma.done %s4672, 16
        $region124: #{vision_transformer_forward.3} parent=119 // pred_fallthru
          _
      $region120: #{vision_transformer_forward.3} parent=5 // pred_fallthru
        _
    $region6: #{vision_transformer_forward.3} parent=1 // loop_footer
      %s37 = sadd.s32 1, %s33
    $region7: #{vision_transformer_forward.3} parent=1 // loop_footer_branch
      %32 = sbr.rel target = $region3
    $region8: #{vision_transformer_forward.3} parent=1 // loop_exit
      _
    %4676 = vsyncpa [#allocation5], 1
    %s4677 = scalar_lea.sflag [#allocation5], 1
    %4678 = vsyncpa %s4677, 1
    %4679 = vsyncpa [#allocation8], 1
    %s4680 = scalar_lea.sflag [#allocation8], 1
    %4681 = vsyncpa %s4680, 1
    %4682 = vsyncpa [#allocation6], 1
    %s4683 = scalar_lea.sflag [#allocation6], 1
    %4684 = vsyncpa %s4683, 1

</llo_original>
